<compile_context>
chip_gen: v7x
topology: tpu7x:2x2x1
jax: 0.10.0
libtpu: 0.0.40
codegen_flags: <defaults>
</compile_context>

<pallas_src>
import jax
import jax.numpy as jnp
from jax.experimental import pallas as pl
from jax.experimental.pallas import tpu as pltpu

IN_FEATURES = 2
HIDDEN = 128
OUT_FEATURES = 3
OUT_PAD = 8              # pad final layer to 8 columns (one sublane group)
N_HIDDEN_REPEAT = 17     # Linear(128,128)+BN+ReLU blocks after the first block
BN_EPS = 1e-5
TILE_N_CAP = 4096        # max rows per grid step (well inside 32 MiB scoped VMEM)


def _round_up(x, m):
    return ((x + m - 1) // m) * m


def _cdiv(a, b):
    return (a + b - 1) // b


def _choose_tile(n, cap):
    """Pick a batch tile (multiple of 16) that minimizes padding, caps VMEM, and
    yields >=2 grid steps whenever there is enough work (v7x megacore)."""
    n16 = _round_up(max(n, 16), 16)
    min_steps = 2 if n16 >= 32 else 1
    steps = max(min_steps, _cdiv(n16, cap))
    tile = _round_up(_cdiv(n16, steps), 16)
    steps = _cdiv(n16, tile)
    return tile, steps * tile


def mlp_kernel(x_ref, w0_ref, wh_ref, shift_ref, wf_ref, bf_ref, o_ref):
    tile = x_ref.shape[0]
    half = tile // 2

    # ---- Block 0: Linear(2 -> 128, BN scale folded) + shift + ReLU (VPU) ----
    w0 = w0_ref[...]                       # (2, 128) f32
    s0 = shift_ref[0:1, :]                 # (1, 128) f32

    def first_block(xs):                   # xs: (half, 2) f32
        h = xs[:, 0:1] * w0[0:1, :] + xs[:, 1:2] * w0[1:2, :]
        return jnp.maximum(h + s0, 0.0).astype(jnp.bfloat16)

    ha = first_block(x_ref[:half, :])      # two independent row sub-blocks
    hb = first_block(x_ref[half:, :])

    # ---- Blocks 1..17: Linear(128 -> 128) + shift + ReLU (statically unrolled,
    #      two interleaved chains so VPU epilogue of one hides under MXU of the
    #      other; h carried in bf16) ----
    for i in range(N_HIDDEN_REPEAT):
        w = wh_ref[i]                      # (128, 128) bf16
        s = shift_ref[i + 1:i + 2, :]      # (1, 128) f32
        ma = jnp.dot(ha, w, preferred_element_type=jnp.float32)
        mb = jnp.dot(hb, w, preferred_element_type=jnp.float32)
        ha = jnp.maximum(ma + s, 0.0).astype(jnp.bfloat16)
        hb = jnp.maximum(mb + s, 0.0).astype(jnp.bfloat16)

    # ---- Final Linear(128 -> 3) with bias, padded to 8 output columns ----
    wf = wf_ref[...]                       # (128, 8) bf16
    bf = bf_ref[...]                       # (1, 8)   f32
    o_ref[:half, :] = jnp.dot(ha, wf, preferred_element_type=jnp.float32) + bf
    o_ref[half:, :] = jnp.dot(hb, wf, preferred_element_type=jnp.float32) + bf


def neural_network_forward(x, params, *, tile_cap=TILE_N_CAP):
    w0, wh, shift, wf, bf = params
    n = x.shape[0]

    tile, n_pad = _choose_tile(n, tile_cap)
    if n_pad != n:
        x = jnp.pad(x, ((0, n_pad - n), (0, 0)))
    grid = (n_pad // tile,)

    flops = 2 * n_pad * (
        IN_FEATURES * HIDDEN
        + N_HIDDEN_REPEAT * HIDDEN * HIDDEN
        + HIDDEN * OUT_PAD
    )
    bytes_accessed = (
        n_pad * IN_FEATURES * 4 + n_pad * OUT_PAD * 4
        + w0.size * 4 + wh.size * 2 + shift.size * 4 + wf.size * 2 + bf.size * 4
    )

    out = pl.pallas_call(
        mlp_kernel,
        out_shape=jax.ShapeDtypeStruct((n_pad, OUT_PAD), jnp.float32),
        grid=grid,
        in_specs=[
            # Activations: tiled over the batch grid axis.
            pl.BlockSpec((tile, IN_FEATURES), lambda i: (i, 0)),
            # Weights / shifts / bias: constant block index -> stay VMEM-resident.
            pl.BlockSpec(w0.shape, lambda i: (0, 0)),
            pl.BlockSpec(wh.shape, lambda i: (0, 0, 0)),
            pl.BlockSpec(shift.shape, lambda i: (0, 0)),
            pl.BlockSpec(wf.shape, lambda i: (0, 0)),
            pl.BlockSpec(bf.shape, lambda i: (0, 0)),
        ],
        out_specs=pl.BlockSpec((tile, OUT_PAD), lambda i: (i, 0)),
        compiler_params=pltpu.CompilerParams(
            dimension_semantics=("parallel",),
        ),
        cost_estimate=pl.CostEstimate(
            flops=flops, transcendentals=0, bytes_accessed=bytes_accessed),
    )(x, w0, wh, shift, wf, bf)

    return out[:n, :OUT_FEATURES]


def init_params(key):
    """Deterministic init mimicking PyTorch defaults (uniform +/- 1/sqrt(fan_in)),
    with eval-mode BatchNorm folded into the weights (scale) and a shift vector."""
    keys = jax.random.split(key, N_HIDDEN_REPEAT + 3)

    def uniform(k, shape, fan_in):
        bound = 1.0 / jnp.sqrt(jnp.float32(fan_in))
        return jax.random.uniform(k, shape, jnp.float32, -bound, bound)

    # Weights stored as (in, out) so the kernel computes x @ W (== x @ W_pt.T).
    w0 = uniform(keys[0], (IN_FEATURES, HIDDEN), IN_FEATURES)
    wh = jnp.stack(
        [uniform(keys[1 + i], (HIDDEN, HIDDEN), HIDDEN) for i in range(N_HIDDEN_REPEAT)]
    )
    wf = uniform(keys[N_HIDDEN_REPEAT + 1], (HIDDEN, OUT_FEATURES), HIDDEN)
    bf = uniform(keys[N_HIDDEN_REPEAT + 2], (1, OUT_FEATURES), HIDDEN)

    # Eval-mode BatchNorm folded to per-feature scale/shift:
    #   scale = gamma / sqrt(running_var + eps) ; shift = beta - running_mean * scale
    n_bn = N_HIDDEN_REPEAT + 1
    gamma = jnp.ones((n_bn, HIDDEN), jnp.float32)
    beta = jnp.zeros((n_bn, HIDDEN), jnp.float32)
    running_mean = jnp.zeros((n_bn, HIDDEN), jnp.float32)
    running_var = jnp.ones((n_bn, HIDDEN), jnp.float32)
    scale = gamma / jnp.sqrt(running_var + BN_EPS)
    shift = beta - running_mean * scale

    # Fold the BN scale into the preceding linear weights (free at build time).
    w0 = w0 * scale[0][None, :]
    wh = wh * scale[1:][:, None, :]

    # Pad final layer to 8 output columns (zero columns 3..7).
    wf_pad = jnp.zeros((HIDDEN, OUT_PAD), jnp.float32).at[:, :OUT_FEATURES].set(wf)
    bf_pad = jnp.zeros((1, OUT_PAD), jnp.float32).at[:, :OUT_FEATURES].set(bf)

    return (
        w0.astype(jnp.float32),        # first layer runs on the VPU -> keep f32
        wh.astype(jnp.bfloat16),       # MXU operands: bf16 with f32 accumulation
        shift.astype(jnp.float32),     # elementwise stays f32 (v5e-safe)
        wf_pad.astype(jnp.bfloat16),
        bf_pad.astype(jnp.float32),
    )


def reference_forward(x, params):
    """Pure-JAX reference in matching precision (bf16 matmul operands, f32 accum)."""
    w0, wh, shift, wf, bf = params
    h = jnp.maximum(x[:, 0:1] * w0[0:1, :] + x[:, 1:2] * w0[1:2, :] + shift[0], 0.0)
    for i in range(N_HIDDEN_REPEAT):
        hm = jnp.dot(h.astype(jnp.bfloat16), wh[i], preferred_element_type=jnp.float32)
        h = jnp.maximum(hm + shift[i + 1], 0.0)
    out = jnp.dot(h.astype(jnp.bfloat16), wf, preferred_element_type=jnp.float32) + bf
    return out[:, :OUT_FEATURES]


if __name__ == "__main__":
    key = jax.random.PRNGKey(0)
    k_params, k_x = jax.random.split(key)

    params = init_params(k_params)
    batch = 10   # not a multiple of the tile -> exercises the pad/slice path
    x = jax.random.normal(k_x, (batch, IN_FEATURES), jnp.float32)

    out = neural_network_forward(x, params)
    out = jax.block_until_ready(out)

    ref = reference_forward(x, params)
    assert out.shape == (batch, OUT_FEATURES)
    assert jnp.allclose(out, ref, atol=1e-2, rtol=1e-2), "mismatch vs JAX reference"

    print("KERNEL_OK")
</pallas_src>

<mosaic_0001>
module attributes {stable_mosaic.version = 11 : i64} {
  func.func @mlp_kernel(%arg0: i32, %arg1: memref<16x2xf32, #tpu.memory_space<vmem>>, %arg2: memref<2x128xf32, #tpu.memory_space<vmem>>, %arg3: memref<17x128x128xbf16, #tpu.memory_space<vmem>>, %arg4: memref<18x128xf32, #tpu.memory_space<vmem>>, %arg5: memref<128x8xbf16, #tpu.memory_space<vmem>>, %arg6: memref<1x8xf32, #tpu.memory_space<vmem>>, %arg7: memref<16x8xf32, #tpu.memory_space<vmem>>) attributes {dimension_semantics = [#tpu.dimension_semantics<parallel>], iteration_bounds = array<i64: 1>, scalar_prefetch = 0 : i64, scratch_operands = 0 : i64, tpu.core_type = #tpu.core_type<tc>, window_params = [{transform_indices = @transform_0, window_bounds = array<i64: 16, 2>}, {pipeline_mode = #tpu.pipeline_mode<synchronous>, transform_indices = @transform_1, window_bounds = array<i64: 2, 128>}, {pipeline_mode = #tpu.pipeline_mode<synchronous>, transform_indices = @transform_2, window_bounds = array<i64: 17, 128, 128>}, {pipeline_mode = #tpu.pipeline_mode<synchronous>, transform_indices = @transform_3, window_bounds = array<i64: 18, 128>}, {pipeline_mode = #tpu.pipeline_mode<synchronous>, transform_indices = @transform_4, window_bounds = array<i64: 128, 8>}, {pipeline_mode = #tpu.pipeline_mode<synchronous>, transform_indices = @transform_5, window_bounds = array<i64: 1, 8>}, {transform_indices = @transform_6, window_bounds = array<i64: 16, 8>}]} {
    %c0 = arith.constant 0 : index
    %c0_0 = arith.constant 0 : index
    %0 = vector.load %arg2[%c0, %c0_0] : memref<2x128xf32, #tpu.memory_space<vmem>>, vector<2x128xf32>
    %c0_1 = arith.constant 0 : index
    %c0_2 = arith.constant 0 : index
    %1 = vector.load %arg4[%c0_1, %c0_2] : memref<18x128xf32, #tpu.memory_space<vmem>>, vector<1x128xf32>
    %c0_3 = arith.constant 0 : index
    %c0_4 = arith.constant 0 : index
    %2 = vector.load %arg1[%c0_3, %c0_4] : memref<16x2xf32, #tpu.memory_space<vmem>>, vector<8x2xf32>
    %3 = vector.extract_strided_slice %2 {offsets = [0, 0], sizes = [8, 1], strides = [1, 1]} : vector<8x2xf32> to vector<8x1xf32>
    %4 = vector.extract_strided_slice %0 {offsets = [0, 0], sizes = [1, 128], strides = [1, 1]} : vector<2x128xf32> to vector<1x128xf32>
    %5 = vector.broadcast %3 : vector<8x1xf32> to vector<8x128xf32>
    %6 = vector.broadcast %4 : vector<1x128xf32> to vector<8x128xf32>
    %7 = arith.mulf %5, %6 : vector<8x128xf32>
    %8 = vector.extract_strided_slice %2 {offsets = [0, 1], sizes = [8, 1], strides = [1, 1]} : vector<8x2xf32> to vector<8x1xf32>
    %9 = vector.extract_strided_slice %0 {offsets = [1, 0], sizes = [1, 128], strides = [1, 1]} : vector<2x128xf32> to vector<1x128xf32>
    %10 = vector.broadcast %8 : vector<8x1xf32> to vector<8x128xf32>
    %11 = vector.broadcast %9 : vector<1x128xf32> to vector<8x128xf32>
    %12 = arith.mulf %10, %11 : vector<8x128xf32>
    %13 = arith.addf %7, %12 : vector<8x128xf32>
    %14 = vector.broadcast %1 : vector<1x128xf32> to vector<8x128xf32>
    %15 = arith.addf %13, %14 : vector<8x128xf32>
    %cst = arith.constant 0.000000e+00 : f32
    %16 = vector.broadcast %cst : f32 to vector<8x128xf32>
    %17 = arith.maximumf %15, %16 : vector<8x128xf32>
    %18 = arith.truncf %17 : vector<8x128xf32> to vector<8x128xbf16>
    %c8 = arith.constant 8 : index
    %c0_5 = arith.constant 0 : index
    %19 = vector.load %arg1[%c8, %c0_5] : memref<16x2xf32, #tpu.memory_space<vmem>>, vector<8x2xf32>
    %20 = vector.extract_strided_slice %19 {offsets = [0, 0], sizes = [8, 1], strides = [1, 1]} : vector<8x2xf32> to vector<8x1xf32>
    %21 = vector.extract_strided_slice %0 {offsets = [0, 0], sizes = [1, 128], strides = [1, 1]} : vector<2x128xf32> to vector<1x128xf32>
    %22 = vector.broadcast %20 : vector<8x1xf32> to vector<8x128xf32>
    %23 = vector.broadcast %21 : vector<1x128xf32> to vector<8x128xf32>
    %24 = arith.mulf %22, %23 : vector<8x128xf32>
    %25 = vector.extract_strided_slice %19 {offsets = [0, 1], sizes = [8, 1], strides = [1, 1]} : vector<8x2xf32> to vector<8x1xf32>
    %26 = vector.extract_strided_slice %0 {offsets = [1, 0], sizes = [1, 128], strides = [1, 1]} : vector<2x128xf32> to vector<1x128xf32>
    %27 = vector.broadcast %25 : vector<8x1xf32> to vector<8x128xf32>
    %28 = vector.broadcast %26 : vector<1x128xf32> to vector<8x128xf32>
    %29 = arith.mulf %27, %28 : vector<8x128xf32>
    %30 = arith.addf %24, %29 : vector<8x128xf32>
    %31 = vector.broadcast %1 : vector<1x128xf32> to vector<8x128xf32>
    %32 = arith.addf %30, %31 : vector<8x128xf32>
    %cst_6 = arith.constant 0.000000e+00 : f32
    %33 = vector.broadcast %cst_6 : f32 to vector<8x128xf32>
    %34 = arith.maximumf %32, %33 : vector<8x128xf32>
    %35 = arith.truncf %34 : vector<8x128xf32> to vector<8x128xbf16>
    %c0_7 = arith.constant 0 : index
    %c0_8 = arith.constant 0 : index
    %c0_9 = arith.constant 0 : index
    %36 = vector.load %arg3[%c0_7, %c0_8, %c0_9] : memref<17x128x128xbf16, #tpu.memory_space<vmem>>, vector<1x128x128xbf16>
    %37 = vector.shape_cast %36 : vector<1x128x128xbf16> to vector<128x128xbf16>
    %c1 = arith.constant 1 : index
    %c0_10 = arith.constant 0 : index
    %38 = vector.load %arg4[%c1, %c0_10] : memref<18x128xf32, #tpu.memory_space<vmem>>, vector<1x128xf32>
    %cst_11 = arith.constant dense<0.000000e+00> : vector<8x128xf32>
    %39 = tpu.matmul %18, %37, %cst_11 {dimension_numbers = #tpu.dot_dimension_numbers<[1], [0], [0], [1], [0, 0, 1, 1], [], []>} : vector<8x128xbf16>, vector<128x128xbf16>, vector<8x128xf32> -> vector<8x128xf32>
    %cst_12 = arith.constant dense<0.000000e+00> : vector<8x128xf32>
    %40 = tpu.matmul %35, %37, %cst_12 {dimension_numbers = #tpu.dot_dimension_numbers<[1], [0], [0], [1], [0, 0, 1, 1], [], []>} : vector<8x128xbf16>, vector<128x128xbf16>, vector<8x128xf32> -> vector<8x128xf32>
    %41 = vector.broadcast %38 : vector<1x128xf32> to vector<8x128xf32>
    %42 = arith.addf %39, %41 : vector<8x128xf32>
    %cst_13 = arith.constant 0.000000e+00 : f32
    %43 = vector.broadcast %cst_13 : f32 to vector<8x128xf32>
    %44 = arith.maximumf %42, %43 : vector<8x128xf32>
    %45 = arith.truncf %44 : vector<8x128xf32> to vector<8x128xbf16>
    %46 = vector.broadcast %38 : vector<1x128xf32> to vector<8x128xf32>
    %47 = arith.addf %40, %46 : vector<8x128xf32>
    %cst_14 = arith.constant 0.000000e+00 : f32
    %48 = vector.broadcast %cst_14 : f32 to vector<8x128xf32>
    %49 = arith.maximumf %47, %48 : vector<8x128xf32>
    %50 = arith.truncf %49 : vector<8x128xf32> to vector<8x128xbf16>
    %c1_15 = arith.constant 1 : index
    %c0_16 = arith.constant 0 : index
    %c0_17 = arith.constant 0 : index
    %51 = vector.load %arg3[%c1_15, %c0_16, %c0_17] : memref<17x128x128xbf16, #tpu.memory_space<vmem>>, vector<1x128x128xbf16>
    %52 = vector.shape_cast %51 : vector<1x128x128xbf16> to vector<128x128xbf16>
    %c2 = arith.constant 2 : index
    %c0_18 = arith.constant 0 : index
    %53 = vector.load %arg4[%c2, %c0_18] : memref<18x128xf32, #tpu.memory_space<vmem>>, vector<1x128xf32>
    %cst_19 = arith.constant dense<0.000000e+00> : vector<8x128xf32>
    %54 = tpu.matmul %45, %52, %cst_19 {dimension_numbers = #tpu.dot_dimension_numbers<[1], [0], [0], [1], [0, 0, 1, 1], [], []>} : vector<8x128xbf16>, vector<128x128xbf16>, vector<8x128xf32> -> vector<8x128xf32>
    %cst_20 = arith.constant dense<0.000000e+00> : vector<8x128xf32>
    %55 = tpu.matmul %50, %52, %cst_20 {dimension_numbers = #tpu.dot_dimension_numbers<[1], [0], [0], [1], [0, 0, 1, 1], [], []>} : vector<8x128xbf16>, vector<128x128xbf16>, vector<8x128xf32> -> vector<8x128xf32>
    %56 = vector.broadcast %53 : vector<1x128xf32> to vector<8x128xf32>
    %57 = arith.addf %54, %56 : vector<8x128xf32>
    %cst_21 = arith.constant 0.000000e+00 : f32
    %58 = vector.broadcast %cst_21 : f32 to vector<8x128xf32>
    %59 = arith.maximumf %57, %58 : vector<8x128xf32>
    %60 = arith.truncf %59 : vector<8x128xf32> to vector<8x128xbf16>
    %61 = vector.broadcast %53 : vector<1x128xf32> to vector<8x128xf32>
    %62 = arith.addf %55, %61 : vector<8x128xf32>
    %cst_22 = arith.constant 0.000000e+00 : f32
    %63 = vector.broadcast %cst_22 : f32 to vector<8x128xf32>
    %64 = arith.maximumf %62, %63 : vector<8x128xf32>
    %65 = arith.truncf %64 : vector<8x128xf32> to vector<8x128xbf16>
    %c2_23 = arith.constant 2 : index
    %c0_24 = arith.constant 0 : index
    %c0_25 = arith.constant 0 : index
    %66 = vector.load %arg3[%c2_23, %c0_24, %c0_25] : memref<17x128x128xbf16, #tpu.memory_space<vmem>>, vector<1x128x128xbf16>
    %67 = vector.shape_cast %66 : vector<1x128x128xbf16> to vector<128x128xbf16>
    %c3 = arith.constant 3 : index
    %c0_26 = arith.constant 0 : index
    %68 = vector.load %arg4[%c3, %c0_26] : memref<18x128xf32, #tpu.memory_space<vmem>>, vector<1x128xf32>
    %cst_27 = arith.constant dense<0.000000e+00> : vector<8x128xf32>
    %69 = tpu.matmul %60, %67, %cst_27 {dimension_numbers = #tpu.dot_dimension_numbers<[1], [0], [0], [1], [0, 0, 1, 1], [], []>} : vector<8x128xbf16>, vector<128x128xbf16>, vector<8x128xf32> -> vector<8x128xf32>
    %cst_28 = arith.constant dense<0.000000e+00> : vector<8x128xf32>
    %70 = tpu.matmul %65, %67, %cst_28 {dimension_numbers = #tpu.dot_dimension_numbers<[1], [0], [0], [1], [0, 0, 1, 1], [], []>} : vector<8x128xbf16>, vector<128x128xbf16>, vector<8x128xf32> -> vector<8x128xf32>
    %71 = vector.broadcast %68 : vector<1x128xf32> to vector<8x128xf32>
    %72 = arith.addf %69, %71 : vector<8x128xf32>
    %cst_29 = arith.constant 0.000000e+00 : f32
    %73 = vector.broadcast %cst_29 : f32 to vector<8x128xf32>
    %74 = arith.maximumf %72, %73 : vector<8x128xf32>
    %75 = arith.truncf %74 : vector<8x128xf32> to vector<8x128xbf16>
    %76 = vector.broadcast %68 : vector<1x128xf32> to vector<8x128xf32>
    %77 = arith.addf %70, %76 : vector<8x128xf32>
    %cst_30 = arith.constant 0.000000e+00 : f32
    %78 = vector.broadcast %cst_30 : f32 to vector<8x128xf32>
    %79 = arith.maximumf %77, %78 : vector<8x128xf32>
    %80 = arith.truncf %79 : vector<8x128xf32> to vector<8x128xbf16>
    %c3_31 = arith.constant 3 : index
    %c0_32 = arith.constant 0 : index
    %c0_33 = arith.constant 0 : index
    %81 = vector.load %arg3[%c3_31, %c0_32, %c0_33] : memref<17x128x128xbf16, #tpu.memory_space<vmem>>, vector<1x128x128xbf16>
    %82 = vector.shape_cast %81 : vector<1x128x128xbf16> to vector<128x128xbf16>
    %c4 = arith.constant 4 : index
    %c0_34 = arith.constant 0 : index
    %83 = vector.load %arg4[%c4, %c0_34] : memref<18x128xf32, #tpu.memory_space<vmem>>, vector<1x128xf32>
    %cst_35 = arith.constant dense<0.000000e+00> : vector<8x128xf32>
    %84 = tpu.matmul %75, %82, %cst_35 {dimension_numbers = #tpu.dot_dimension_numbers<[1], [0], [0], [1], [0, 0, 1, 1], [], []>} : vector<8x128xbf16>, vector<128x128xbf16>, vector<8x128xf32> -> vector<8x128xf32>
    %cst_36 = arith.constant dense<0.000000e+00> : vector<8x128xf32>
    %85 = tpu.matmul %80, %82, %cst_36 {dimension_numbers = #tpu.dot_dimension_numbers<[1], [0], [0], [1], [0, 0, 1, 1], [], []>} : vector<8x128xbf16>, vector<128x128xbf16>, vector<8x128xf32> -> vector<8x128xf32>
    %86 = vector.broadcast %83 : vector<1x128xf32> to vector<8x128xf32>
    %87 = arith.addf %84, %86 : vector<8x128xf32>
    %cst_37 = arith.constant 0.000000e+00 : f32
    %88 = vector.broadcast %cst_37 : f32 to vector<8x128xf32>
    %89 = arith.maximumf %87, %88 : vector<8x128xf32>
    %90 = arith.truncf %89 : vector<8x128xf32> to vector<8x128xbf16>
    %91 = vector.broadcast %83 : vector<1x128xf32> to vector<8x128xf32>
    %92 = arith.addf %85, %91 : vector<8x128xf32>
    %cst_38 = arith.constant 0.000000e+00 : f32
    %93 = vector.broadcast %cst_38 : f32 to vector<8x128xf32>
    %94 = arith.maximumf %92, %93 : vector<8x128xf32>
    %95 = arith.truncf %94 : vector<8x128xf32> to vector<8x128xbf16>
    %c4_39 = arith.constant 4 : index
    %c0_40 = arith.constant 0 : index
    %c0_41 = arith.constant 0 : index
    %96 = vector.load %arg3[%c4_39, %c0_40, %c0_41] : memref<17x128x128xbf16, #tpu.memory_space<vmem>>, vector<1x128x128xbf16>
    %97 = vector.shape_cast %96 : vector<1x128x128xbf16> to vector<128x128xbf16>
    %c5 = arith.constant 5 : index
    %c0_42 = arith.constant 0 : index
    %98 = vector.load %arg4[%c5, %c0_42] : memref<18x128xf32, #tpu.memory_space<vmem>>, vector<1x128xf32>
    %cst_43 = arith.constant dense<0.000000e+00> : vector<8x128xf32>
    %99 = tpu.matmul %90, %97, %cst_43 {dimension_numbers = #tpu.dot_dimension_numbers<[1], [0], [0], [1], [0, 0, 1, 1], [], []>} : vector<8x128xbf16>, vector<128x128xbf16>, vector<8x128xf32> -> vector<8x128xf32>
    %cst_44 = arith.constant dense<0.000000e+00> : vector<8x128xf32>
    %100 = tpu.matmul %95, %97, %cst_44 {dimension_numbers = #tpu.dot_dimension_numbers<[1], [0], [0], [1], [0, 0, 1, 1], [], []>} : vector<8x128xbf16>, vector<128x128xbf16>, vector<8x128xf32> -> vector<8x128xf32>
    %101 = vector.broadcast %98 : vector<1x128xf32> to vector<8x128xf32>
    %102 = arith.addf %99, %101 : vector<8x128xf32>
    %cst_45 = arith.constant 0.000000e+00 : f32
    %103 = vector.broadcast %cst_45 : f32 to vector<8x128xf32>
    %104 = arith.maximumf %102, %103 : vector<8x128xf32>
    %105 = arith.truncf %104 : vector<8x128xf32> to vector<8x128xbf16>
    %106 = vector.broadcast %98 : vector<1x128xf32> to vector<8x128xf32>
    %107 = arith.addf %100, %106 : vector<8x128xf32>
    %cst_46 = arith.constant 0.000000e+00 : f32
    %108 = vector.broadcast %cst_46 : f32 to vector<8x128xf32>
    %109 = arith.maximumf %107, %108 : vector<8x128xf32>
    %110 = arith.truncf %109 : vector<8x128xf32> to vector<8x128xbf16>
    %c5_47 = arith.constant 5 : index
    %c0_48 = arith.constant 0 : index
    %c0_49 = arith.constant 0 : index
    %111 = vector.load %arg3[%c5_47, %c0_48, %c0_49] : memref<17x128x128xbf16, #tpu.memory_space<vmem>>, vector<1x128x128xbf16>
    %112 = vector.shape_cast %111 : vector<1x128x128xbf16> to vector<128x128xbf16>
    %c6 = arith.constant 6 : index
    %c0_50 = arith.constant 0 : index
    %113 = vector.load %arg4[%c6, %c0_50] : memref<18x128xf32, #tpu.memory_space<vmem>>, vector<1x128xf32>
    %cst_51 = arith.constant dense<0.000000e+00> : vector<8x128xf32>
    %114 = tpu.matmul %105, %112, %cst_51 {dimension_numbers = #tpu.dot_dimension_numbers<[1], [0], [0], [1], [0, 0, 1, 1], [], []>} : vector<8x128xbf16>, vector<128x128xbf16>, vector<8x128xf32> -> vector<8x128xf32>
    %cst_52 = arith.constant dense<0.000000e+00> : vector<8x128xf32>
    %115 = tpu.matmul %110, %112, %cst_52 {dimension_numbers = #tpu.dot_dimension_numbers<[1], [0], [0], [1], [0, 0, 1, 1], [], []>} : vector<8x128xbf16>, vector<128x128xbf16>, vector<8x128xf32> -> vector<8x128xf32>
    %116 = vector.broadcast %113 : vector<1x128xf32> to vector<8x128xf32>
    %117 = arith.addf %114, %116 : vector<8x128xf32>
    %cst_53 = arith.constant 0.000000e+00 : f32
    %118 = vector.broadcast %cst_53 : f32 to vector<8x128xf32>
    %119 = arith.maximumf %117, %118 : vector<8x128xf32>
    %120 = arith.truncf %119 : vector<8x128xf32> to vector<8x128xbf16>
    %121 = vector.broadcast %113 : vector<1x128xf32> to vector<8x128xf32>
    %122 = arith.addf %115, %121 : vector<8x128xf32>
    %cst_54 = arith.constant 0.000000e+00 : f32
    %123 = vector.broadcast %cst_54 : f32 to vector<8x128xf32>
    %124 = arith.maximumf %122, %123 : vector<8x128xf32>
    %125 = arith.truncf %124 : vector<8x128xf32> to vector<8x128xbf16>
    %c6_55 = arith.constant 6 : index
    %c0_56 = arith.constant 0 : index
    %c0_57 = arith.constant 0 : index
    %126 = vector.load %arg3[%c6_55, %c0_56, %c0_57] : memref<17x128x128xbf16, #tpu.memory_space<vmem>>, vector<1x128x128xbf16>
    %127 = vector.shape_cast %126 : vector<1x128x128xbf16> to vector<128x128xbf16>
    %c7 = arith.constant 7 : index
    %c0_58 = arith.constant 0 : index
    %128 = vector.load %arg4[%c7, %c0_58] : memref<18x128xf32, #tpu.memory_space<vmem>>, vector<1x128xf32>
    %cst_59 = arith.constant dense<0.000000e+00> : vector<8x128xf32>
    %129 = tpu.matmul %120, %127, %cst_59 {dimension_numbers = #tpu.dot_dimension_numbers<[1], [0], [0], [1], [0, 0, 1, 1], [], []>} : vector<8x128xbf16>, vector<128x128xbf16>, vector<8x128xf32> -> vector<8x128xf32>
    %cst_60 = arith.constant dense<0.000000e+00> : vector<8x128xf32>
    %130 = tpu.matmul %125, %127, %cst_60 {dimension_numbers = #tpu.dot_dimension_numbers<[1], [0], [0], [1], [0, 0, 1, 1], [], []>} : vector<8x128xbf16>, vector<128x128xbf16>, vector<8x128xf32> -> vector<8x128xf32>
    %131 = vector.broadcast %128 : vector<1x128xf32> to vector<8x128xf32>
    %132 = arith.addf %129, %131 : vector<8x128xf32>
    %cst_61 = arith.constant 0.000000e+00 : f32
    %133 = vector.broadcast %cst_61 : f32 to vector<8x128xf32>
    %134 = arith.maximumf %132, %133 : vector<8x128xf32>
    %135 = arith.truncf %134 : vector<8x128xf32> to vector<8x128xbf16>
    %136 = vector.broadcast %128 : vector<1x128xf32> to vector<8x128xf32>
    %137 = arith.addf %130, %136 : vector<8x128xf32>
    %cst_62 = arith.constant 0.000000e+00 : f32
    %138 = vector.broadcast %cst_62 : f32 to vector<8x128xf32>
    %139 = arith.maximumf %137, %138 : vector<8x128xf32>
    %140 = arith.truncf %139 : vector<8x128xf32> to vector<8x128xbf16>
    %c7_63 = arith.constant 7 : index
    %c0_64 = arith.constant 0 : index
    %c0_65 = arith.constant 0 : index
    %141 = vector.load %arg3[%c7_63, %c0_64, %c0_65] : memref<17x128x128xbf16, #tpu.memory_space<vmem>>, vector<1x128x128xbf16>
    %142 = vector.shape_cast %141 : vector<1x128x128xbf16> to vector<128x128xbf16>
    %c8_66 = arith.constant 8 : index
    %c0_67 = arith.constant 0 : index
    %143 = vector.load %arg4[%c8_66, %c0_67] : memref<18x128xf32, #tpu.memory_space<vmem>>, vector<1x128xf32>
    %cst_68 = arith.constant dense<0.000000e+00> : vector<8x128xf32>
    %144 = tpu.matmul %135, %142, %cst_68 {dimension_numbers = #tpu.dot_dimension_numbers<[1], [0], [0], [1], [0, 0, 1, 1], [], []>} : vector<8x128xbf16>, vector<128x128xbf16>, vector<8x128xf32> -> vector<8x128xf32>
    %cst_69 = arith.constant dense<0.000000e+00> : vector<8x128xf32>
    %145 = tpu.matmul %140, %142, %cst_69 {dimension_numbers = #tpu.dot_dimension_numbers<[1], [0], [0], [1], [0, 0, 1, 1], [], []>} : vector<8x128xbf16>, vector<128x128xbf16>, vector<8x128xf32> -> vector<8x128xf32>
    %146 = vector.broadcast %143 : vector<1x128xf32> to vector<8x128xf32>
    %147 = arith.addf %144, %146 : vector<8x128xf32>
    %cst_70 = arith.constant 0.000000e+00 : f32
    %148 = vector.broadcast %cst_70 : f32 to vector<8x128xf32>
    %149 = arith.maximumf %147, %148 : vector<8x128xf32>
    %150 = arith.truncf %149 : vector<8x128xf32> to vector<8x128xbf16>
    %151 = vector.broadcast %143 : vector<1x128xf32> to vector<8x128xf32>
    %152 = arith.addf %145, %151 : vector<8x128xf32>
    %cst_71 = arith.constant 0.000000e+00 : f32
    %153 = vector.broadcast %cst_71 : f32 to vector<8x128xf32>
    %154 = arith.maximumf %152, %153 : vector<8x128xf32>
    %155 = arith.truncf %154 : vector<8x128xf32> to vector<8x128xbf16>
    %c8_72 = arith.constant 8 : index
    %c0_73 = arith.constant 0 : index
    %c0_74 = arith.constant 0 : index
    %156 = vector.load %arg3[%c8_72, %c0_73, %c0_74] : memref<17x128x128xbf16, #tpu.memory_space<vmem>>, vector<1x128x128xbf16>
    %157 = vector.shape_cast %156 : vector<1x128x128xbf16> to vector<128x128xbf16>
    %c9 = arith.constant 9 : index
    %c0_75 = arith.constant 0 : index
    %158 = vector.load %arg4[%c9, %c0_75] : memref<18x128xf32, #tpu.memory_space<vmem>>, vector<1x128xf32>
    %cst_76 = arith.constant dense<0.000000e+00> : vector<8x128xf32>
    %159 = tpu.matmul %150, %157, %cst_76 {dimension_numbers = #tpu.dot_dimension_numbers<[1], [0], [0], [1], [0, 0, 1, 1], [], []>} : vector<8x128xbf16>, vector<128x128xbf16>, vector<8x128xf32> -> vector<8x128xf32>
    %cst_77 = arith.constant dense<0.000000e+00> : vector<8x128xf32>
    %160 = tpu.matmul %155, %157, %cst_77 {dimension_numbers = #tpu.dot_dimension_numbers<[1], [0], [0], [1], [0, 0, 1, 1], [], []>} : vector<8x128xbf16>, vector<128x128xbf16>, vector<8x128xf32> -> vector<8x128xf32>
    %161 = vector.broadcast %158 : vector<1x128xf32> to vector<8x128xf32>
    %162 = arith.addf %159, %161 : vector<8x128xf32>
    %cst_78 = arith.constant 0.000000e+00 : f32
    %163 = vector.broadcast %cst_78 : f32 to vector<8x128xf32>
    %164 = arith.maximumf %162, %163 : vector<8x128xf32>
    %165 = arith.truncf %164 : vector<8x128xf32> to vector<8x128xbf16>
    %166 = vector.broadcast %158 : vector<1x128xf32> to vector<8x128xf32>
    %167 = arith.addf %160, %166 : vector<8x128xf32>
    %cst_79 = arith.constant 0.000000e+00 : f32
    %168 = vector.broadcast %cst_79 : f32 to vector<8x128xf32>
    %169 = arith.maximumf %167, %168 : vector<8x128xf32>
    %170 = arith.truncf %169 : vector<8x128xf32> to vector<8x128xbf16>
    %c9_80 = arith.constant 9 : index
    %c0_81 = arith.constant 0 : index
    %c0_82 = arith.constant 0 : index
    %171 = vector.load %arg3[%c9_80, %c0_81, %c0_82] : memref<17x128x128xbf16, #tpu.memory_space<vmem>>, vector<1x128x128xbf16>
    %172 = vector.shape_cast %171 : vector<1x128x128xbf16> to vector<128x128xbf16>
    %c10 = arith.constant 10 : index
    %c0_83 = arith.constant 0 : index
    %173 = vector.load %arg4[%c10, %c0_83] : memref<18x128xf32, #tpu.memory_space<vmem>>, vector<1x128xf32>
    %cst_84 = arith.constant dense<0.000000e+00> : vector<8x128xf32>
    %174 = tpu.matmul %165, %172, %cst_84 {dimension_numbers = #tpu.dot_dimension_numbers<[1], [0], [0], [1], [0, 0, 1, 1], [], []>} : vector<8x128xbf16>, vector<128x128xbf16>, vector<8x128xf32> -> vector<8x128xf32>
    %cst_85 = arith.constant dense<0.000000e+00> : vector<8x128xf32>
    %175 = tpu.matmul %170, %172, %cst_85 {dimension_numbers = #tpu.dot_dimension_numbers<[1], [0], [0], [1], [0, 0, 1, 1], [], []>} : vector<8x128xbf16>, vector<128x128xbf16>, vector<8x128xf32> -> vector<8x128xf32>
    %176 = vector.broadcast %173 : vector<1x128xf32> to vector<8x128xf32>
    %177 = arith.addf %174, %176 : vector<8x128xf32>
    %cst_86 = arith.constant 0.000000e+00 : f32
    %178 = vector.broadcast %cst_86 : f32 to vector<8x128xf32>
    %179 = arith.maximumf %177, %178 : vector<8x128xf32>
    %180 = arith.truncf %179 : vector<8x128xf32> to vector<8x128xbf16>
    %181 = vector.broadcast %173 : vector<1x128xf32> to vector<8x128xf32>
    %182 = arith.addf %175, %181 : vector<8x128xf32>
    %cst_87 = arith.constant 0.000000e+00 : f32
    %183 = vector.broadcast %cst_87 : f32 to vector<8x128xf32>
    %184 = arith.maximumf %182, %183 : vector<8x128xf32>
    %185 = arith.truncf %184 : vector<8x128xf32> to vector<8x128xbf16>
    %c10_88 = arith.constant 10 : index
    %c0_89 = arith.constant 0 : index
    %c0_90 = arith.constant 0 : index
    %186 = vector.load %arg3[%c10_88, %c0_89, %c0_90] : memref<17x128x128xbf16, #tpu.memory_space<vmem>>, vector<1x128x128xbf16>
    %187 = vector.shape_cast %186 : vector<1x128x128xbf16> to vector<128x128xbf16>
    %c11 = arith.constant 11 : index
    %c0_91 = arith.constant 0 : index
    %188 = vector.load %arg4[%c11, %c0_91] : memref<18x128xf32, #tpu.memory_space<vmem>>, vector<1x128xf32>
    %cst_92 = arith.constant dense<0.000000e+00> : vector<8x128xf32>
    %189 = tpu.matmul %180, %187, %cst_92 {dimension_numbers = #tpu.dot_dimension_numbers<[1], [0], [0], [1], [0, 0, 1, 1], [], []>} : vector<8x128xbf16>, vector<128x128xbf16>, vector<8x128xf32> -> vector<8x128xf32>
    %cst_93 = arith.constant dense<0.000000e+00> : vector<8x128xf32>
    %190 = tpu.matmul %185, %187, %cst_93 {dimension_numbers = #tpu.dot_dimension_numbers<[1], [0], [0], [1], [0, 0, 1, 1], [], []>} : vector<8x128xbf16>, vector<128x128xbf16>, vector<8x128xf32> -> vector<8x128xf32>
    %191 = vector.broadcast %188 : vector<1x128xf32> to vector<8x128xf32>
    %192 = arith.addf %189, %191 : vector<8x128xf32>
    %cst_94 = arith.constant 0.000000e+00 : f32
    %193 = vector.broadcast %cst_94 : f32 to vector<8x128xf32>
    %194 = arith.maximumf %192, %193 : vector<8x128xf32>
    %195 = arith.truncf %194 : vector<8x128xf32> to vector<8x128xbf16>
    %196 = vector.broadcast %188 : vector<1x128xf32> to vector<8x128xf32>
    %197 = arith.addf %190, %196 : vector<8x128xf32>
    %cst_95 = arith.constant 0.000000e+00 : f32
    %198 = vector.broadcast %cst_95 : f32 to vector<8x128xf32>
    %199 = arith.maximumf %197, %198 : vector<8x128xf32>
    %200 = arith.truncf %199 : vector<8x128xf32> to vector<8x128xbf16>
    %c11_96 = arith.constant 11 : index
    %c0_97 = arith.constant 0 : index
    %c0_98 = arith.constant 0 : index
    %201 = vector.load %arg3[%c11_96, %c0_97, %c0_98] : memref<17x128x128xbf16, #tpu.memory_space<vmem>>, vector<1x128x128xbf16>
    %202 = vector.shape_cast %201 : vector<1x128x128xbf16> to vector<128x128xbf16>
    %c12 = arith.constant 12 : index
    %c0_99 = arith.constant 0 : index
    %203 = vector.load %arg4[%c12, %c0_99] : memref<18x128xf32, #tpu.memory_space<vmem>>, vector<1x128xf32>
    %cst_100 = arith.constant dense<0.000000e+00> : vector<8x128xf32>
    %204 = tpu.matmul %195, %202, %cst_100 {dimension_numbers = #tpu.dot_dimension_numbers<[1], [0], [0], [1], [0, 0, 1, 1], [], []>} : vector<8x128xbf16>, vector<128x128xbf16>, vector<8x128xf32> -> vector<8x128xf32>
    %cst_101 = arith.constant dense<0.000000e+00> : vector<8x128xf32>
    %205 = tpu.matmul %200, %202, %cst_101 {dimension_numbers = #tpu.dot_dimension_numbers<[1], [0], [0], [1], [0, 0, 1, 1], [], []>} : vector<8x128xbf16>, vector<128x128xbf16>, vector<8x128xf32> -> vector<8x128xf32>
    %206 = vector.broadcast %203 : vector<1x128xf32> to vector<8x128xf32>
    %207 = arith.addf %204, %206 : vector<8x128xf32>
    %cst_102 = arith.constant 0.000000e+00 : f32
    %208 = vector.broadcast %cst_102 : f32 to vector<8x128xf32>
    %209 = arith.maximumf %207, %208 : vector<8x128xf32>
    %210 = arith.truncf %209 : vector<8x128xf32> to vector<8x128xbf16>
    %211 = vector.broadcast %203 : vector<1x128xf32> to vector<8x128xf32>
    %212 = arith.addf %205, %211 : vector<8x128xf32>
    %cst_103 = arith.constant 0.000000e+00 : f32
    %213 = vector.broadcast %cst_103 : f32 to vector<8x128xf32>
    %214 = arith.maximumf %212, %213 : vector<8x128xf32>
    %215 = arith.truncf %214 : vector<8x128xf32> to vector<8x128xbf16>
    %c12_104 = arith.constant 12 : index
    %c0_105 = arith.constant 0 : index
    %c0_106 = arith.constant 0 : index
    %216 = vector.load %arg3[%c12_104, %c0_105, %c0_106] : memref<17x128x128xbf16, #tpu.memory_space<vmem>>, vector<1x128x128xbf16>
    %217 = vector.shape_cast %216 : vector<1x128x128xbf16> to vector<128x128xbf16>
    %c13 = arith.constant 13 : index
    %c0_107 = arith.constant 0 : index
    %218 = vector.load %arg4[%c13, %c0_107] : memref<18x128xf32, #tpu.memory_space<vmem>>, vector<1x128xf32>
    %cst_108 = arith.constant dense<0.000000e+00> : vector<8x128xf32>
    %219 = tpu.matmul %210, %217, %cst_108 {dimension_numbers = #tpu.dot_dimension_numbers<[1], [0], [0], [1], [0, 0, 1, 1], [], []>} : vector<8x128xbf16>, vector<128x128xbf16>, vector<8x128xf32> -> vector<8x128xf32>
    %cst_109 = arith.constant dense<0.000000e+00> : vector<8x128xf32>
    %220 = tpu.matmul %215, %217, %cst_109 {dimension_numbers = #tpu.dot_dimension_numbers<[1], [0], [0], [1], [0, 0, 1, 1], [], []>} : vector<8x128xbf16>, vector<128x128xbf16>, vector<8x128xf32> -> vector<8x128xf32>
    %221 = vector.broadcast %218 : vector<1x128xf32> to vector<8x128xf32>
    %222 = arith.addf %219, %221 : vector<8x128xf32>
    %cst_110 = arith.constant 0.000000e+00 : f32
    %223 = vector.broadcast %cst_110 : f32 to vector<8x128xf32>
    %224 = arith.maximumf %222, %223 : vector<8x128xf32>
    %225 = arith.truncf %224 : vector<8x128xf32> to vector<8x128xbf16>
    %226 = vector.broadcast %218 : vector<1x128xf32> to vector<8x128xf32>
    %227 = arith.addf %220, %226 : vector<8x128xf32>
    %cst_111 = arith.constant 0.000000e+00 : f32
    %228 = vector.broadcast %cst_111 : f32 to vector<8x128xf32>
    %229 = arith.maximumf %227, %228 : vector<8x128xf32>
    %230 = arith.truncf %229 : vector<8x128xf32> to vector<8x128xbf16>
    %c13_112 = arith.constant 13 : index
    %c0_113 = arith.constant 0 : index
    %c0_114 = arith.constant 0 : index
    %231 = vector.load %arg3[%c13_112, %c0_113, %c0_114] : memref<17x128x128xbf16, #tpu.memory_space<vmem>>, vector<1x128x128xbf16>
    %232 = vector.shape_cast %231 : vector<1x128x128xbf16> to vector<128x128xbf16>
    %c14 = arith.constant 14 : index
    %c0_115 = arith.constant 0 : index
    %233 = vector.load %arg4[%c14, %c0_115] : memref<18x128xf32, #tpu.memory_space<vmem>>, vector<1x128xf32>
    %cst_116 = arith.constant dense<0.000000e+00> : vector<8x128xf32>
    %234 = tpu.matmul %225, %232, %cst_116 {dimension_numbers = #tpu.dot_dimension_numbers<[1], [0], [0], [1], [0, 0, 1, 1], [], []>} : vector<8x128xbf16>, vector<128x128xbf16>, vector<8x128xf32> -> vector<8x128xf32>
    %cst_117 = arith.constant dense<0.000000e+00> : vector<8x128xf32>
    %235 = tpu.matmul %230, %232, %cst_117 {dimension_numbers = #tpu.dot_dimension_numbers<[1], [0], [0], [1], [0, 0, 1, 1], [], []>} : vector<8x128xbf16>, vector<128x128xbf16>, vector<8x128xf32> -> vector<8x128xf32>
    %236 = vector.broadcast %233 : vector<1x128xf32> to vector<8x128xf32>
    %237 = arith.addf %234, %236 : vector<8x128xf32>
    %cst_118 = arith.constant 0.000000e+00 : f32
    %238 = vector.broadcast %cst_118 : f32 to vector<8x128xf32>
    %239 = arith.maximumf %237, %238 : vector<8x128xf32>
    %240 = arith.truncf %239 : vector<8x128xf32> to vector<8x128xbf16>
    %241 = vector.broadcast %233 : vector<1x128xf32> to vector<8x128xf32>
    %242 = arith.addf %235, %241 : vector<8x128xf32>
    %cst_119 = arith.constant 0.000000e+00 : f32
    %243 = vector.broadcast %cst_119 : f32 to vector<8x128xf32>
    %244 = arith.maximumf %242, %243 : vector<8x128xf32>
    %245 = arith.truncf %244 : vector<8x128xf32> to vector<8x128xbf16>
    %c14_120 = arith.constant 14 : index
    %c0_121 = arith.constant 0 : index
    %c0_122 = arith.constant 0 : index
    %246 = vector.load %arg3[%c14_120, %c0_121, %c0_122] : memref<17x128x128xbf16, #tpu.memory_space<vmem>>, vector<1x128x128xbf16>
    %247 = vector.shape_cast %246 : vector<1x128x128xbf16> to vector<128x128xbf16>
    %c15 = arith.constant 15 : index
    %c0_123 = arith.constant 0 : index
    %248 = vector.load %arg4[%c15, %c0_123] : memref<18x128xf32, #tpu.memory_space<vmem>>, vector<1x128xf32>
    %cst_124 = arith.constant dense<0.000000e+00> : vector<8x128xf32>
    %249 = tpu.matmul %240, %247, %cst_124 {dimension_numbers = #tpu.dot_dimension_numbers<[1], [0], [0], [1], [0, 0, 1, 1], [], []>} : vector<8x128xbf16>, vector<128x128xbf16>, vector<8x128xf32> -> vector<8x128xf32>
    %cst_125 = arith.constant dense<0.000000e+00> : vector<8x128xf32>
    %250 = tpu.matmul %245, %247, %cst_125 {dimension_numbers = #tpu.dot_dimension_numbers<[1], [0], [0], [1], [0, 0, 1, 1], [], []>} : vector<8x128xbf16>, vector<128x128xbf16>, vector<8x128xf32> -> vector<8x128xf32>
    %251 = vector.broadcast %248 : vector<1x128xf32> to vector<8x128xf32>
    %252 = arith.addf %249, %251 : vector<8x128xf32>
    %cst_126 = arith.constant 0.000000e+00 : f32
    %253 = vector.broadcast %cst_126 : f32 to vector<8x128xf32>
    %254 = arith.maximumf %252, %253 : vector<8x128xf32>
    %255 = arith.truncf %254 : vector<8x128xf32> to vector<8x128xbf16>
    %256 = vector.broadcast %248 : vector<1x128xf32> to vector<8x128xf32>
    %257 = arith.addf %250, %256 : vector<8x128xf32>
    %cst_127 = arith.constant 0.000000e+00 : f32
    %258 = vector.broadcast %cst_127 : f32 to vector<8x128xf32>
    %259 = arith.maximumf %257, %258 : vector<8x128xf32>
    %260 = arith.truncf %259 : vector<8x128xf32> to vector<8x128xbf16>
    %c15_128 = arith.constant 15 : index
    %c0_129 = arith.constant 0 : index
    %c0_130 = arith.constant 0 : index
    %261 = vector.load %arg3[%c15_128, %c0_129, %c0_130] : memref<17x128x128xbf16, #tpu.memory_space<vmem>>, vector<1x128x128xbf16>
    %262 = vector.shape_cast %261 : vector<1x128x128xbf16> to vector<128x128xbf16>
    %c16 = arith.constant 16 : index
    %c0_131 = arith.constant 0 : index
    %263 = vector.load %arg4[%c16, %c0_131] : memref<18x128xf32, #tpu.memory_space<vmem>>, vector<1x128xf32>
    %cst_132 = arith.constant dense<0.000000e+00> : vector<8x128xf32>
    %264 = tpu.matmul %255, %262, %cst_132 {dimension_numbers = #tpu.dot_dimension_numbers<[1], [0], [0], [1], [0, 0, 1, 1], [], []>} : vector<8x128xbf16>, vector<128x128xbf16>, vector<8x128xf32> -> vector<8x128xf32>
    %cst_133 = arith.constant dense<0.000000e+00> : vector<8x128xf32>
    %265 = tpu.matmul %260, %262, %cst_133 {dimension_numbers = #tpu.dot_dimension_numbers<[1], [0], [0], [1], [0, 0, 1, 1], [], []>} : vector<8x128xbf16>, vector<128x128xbf16>, vector<8x128xf32> -> vector<8x128xf32>
    %266 = vector.broadcast %263 : vector<1x128xf32> to vector<8x128xf32>
    %267 = arith.addf %264, %266 : vector<8x128xf32>
    %cst_134 = arith.constant 0.000000e+00 : f32
    %268 = vector.broadcast %cst_134 : f32 to vector<8x128xf32>
    %269 = arith.maximumf %267, %268 : vector<8x128xf32>
    %270 = arith.truncf %269 : vector<8x128xf32> to vector<8x128xbf16>
    %271 = vector.broadcast %263 : vector<1x128xf32> to vector<8x128xf32>
    %272 = arith.addf %265, %271 : vector<8x128xf32>
    %cst_135 = arith.constant 0.000000e+00 : f32
    %273 = vector.broadcast %cst_135 : f32 to vector<8x128xf32>
    %274 = arith.maximumf %272, %273 : vector<8x128xf32>
    %275 = arith.truncf %274 : vector<8x128xf32> to vector<8x128xbf16>
    %c16_136 = arith.constant 16 : index
    %c0_137 = arith.constant 0 : index
    %c0_138 = arith.constant 0 : index
    %276 = vector.load %arg3[%c16_136, %c0_137, %c0_138] : memref<17x128x128xbf16, #tpu.memory_space<vmem>>, vector<1x128x128xbf16>
    %277 = vector.shape_cast %276 : vector<1x128x128xbf16> to vector<128x128xbf16>
    %c17 = arith.constant 17 : index
    %c0_139 = arith.constant 0 : index
    %278 = vector.load %arg4[%c17, %c0_139] : memref<18x128xf32, #tpu.memory_space<vmem>>, vector<1x128xf32>
    %cst_140 = arith.constant dense<0.000000e+00> : vector<8x128xf32>
    %279 = tpu.matmul %270, %277, %cst_140 {dimension_numbers = #tpu.dot_dimension_numbers<[1], [0], [0], [1], [0, 0, 1, 1], [], []>} : vector<8x128xbf16>, vector<128x128xbf16>, vector<8x128xf32> -> vector<8x128xf32>
    %cst_141 = arith.constant dense<0.000000e+00> : vector<8x128xf32>
    %280 = tpu.matmul %275, %277, %cst_141 {dimension_numbers = #tpu.dot_dimension_numbers<[1], [0], [0], [1], [0, 0, 1, 1], [], []>} : vector<8x128xbf16>, vector<128x128xbf16>, vector<8x128xf32> -> vector<8x128xf32>
    %281 = vector.broadcast %278 : vector<1x128xf32> to vector<8x128xf32>
    %282 = arith.addf %279, %281 : vector<8x128xf32>
    %cst_142 = arith.constant 0.000000e+00 : f32
    %283 = vector.broadcast %cst_142 : f32 to vector<8x128xf32>
    %284 = arith.maximumf %282, %283 : vector<8x128xf32>
    %285 = arith.truncf %284 : vector<8x128xf32> to vector<8x128xbf16>
    %286 = vector.broadcast %278 : vector<1x128xf32> to vector<8x128xf32>
    %287 = arith.addf %280, %286 : vector<8x128xf32>
    %cst_143 = arith.constant 0.000000e+00 : f32
    %288 = vector.broadcast %cst_143 : f32 to vector<8x128xf32>
    %289 = arith.maximumf %287, %288 : vector<8x128xf32>
    %290 = arith.truncf %289 : vector<8x128xf32> to vector<8x128xbf16>
    %c0_144 = arith.constant 0 : index
    %c0_145 = arith.constant 0 : index
    %291 = vector.load %arg5[%c0_144, %c0_145] : memref<128x8xbf16, #tpu.memory_space<vmem>>, vector<128x8xbf16>
    %c0_146 = arith.constant 0 : index
    %c0_147 = arith.constant 0 : index
    %292 = vector.load %arg6[%c0_146, %c0_147] : memref<1x8xf32, #tpu.memory_space<vmem>>, vector<1x8xf32>
    %cst_148 = arith.constant dense<0.000000e+00> : vector<8x8xf32>
    %293 = tpu.matmul %285, %291, %cst_148 {dimension_numbers = #tpu.dot_dimension_numbers<[1], [0], [0], [1], [0, 0, 1, 1], [], []>} : vector<8x128xbf16>, vector<128x8xbf16>, vector<8x8xf32> -> vector<8x8xf32>
    %294 = vector.broadcast %292 : vector<1x8xf32> to vector<8x8xf32>
    %295 = arith.addf %293, %294 : vector<8x8xf32>
    %c0_149 = arith.constant 0 : index
    %c0_150 = arith.constant 0 : index
    %296 = vector.load %arg7[%c0_149, %c0_150] : memref<16x8xf32, #tpu.memory_space<vmem>>, vector<8x8xf32>
    tpu.vector_store %arg7[%c0_149, %c0_150], %295 {strides = array<i32>} : memref<16x8xf32, #tpu.memory_space<vmem>>, vector<8x8xf32>,
    %cst_151 = arith.constant dense<0.000000e+00> : vector<8x8xf32>
    %297 = tpu.matmul %290, %291, %cst_151 {dimension_numbers = #tpu.dot_dimension_numbers<[1], [0], [0], [1], [0, 0, 1, 1], [], []>} : vector<8x128xbf16>, vector<128x8xbf16>, vector<8x8xf32> -> vector<8x8xf32>
    %298 = vector.broadcast %292 : vector<1x8xf32> to vector<8x8xf32>
    %299 = arith.addf %297, %298 : vector<8x8xf32>
    %c8_152 = arith.constant 8 : index
    %c0_153 = arith.constant 0 : index
    %300 = vector.load %arg7[%c8_152, %c0_153] : memref<16x8xf32, #tpu.memory_space<vmem>>, vector<8x8xf32>
    tpu.vector_store %arg7[%c8_152, %c0_153], %299 {strides = array<i32>} : memref<16x8xf32, #tpu.memory_space<vmem>>, vector<8x8xf32>,
    return
  }
  func.func @transform_0(%arg0: i32) -> (i32, i32) {
    %c0_i32 = arith.constant 0 : i32
    %c0_i32_0 = arith.constant 0 : i32
    return %arg0, %c0_i32 : i32, i32
  }
  func.func @transform_1(%arg0: i32) -> (i32, i32) {
    %c0_i32 = arith.constant 0 : i32
    %c0_i32_0 = arith.constant 0 : i32
    %c0_i32_1 = arith.constant 0 : i32
    return %c0_i32, %c0_i32_0 : i32, i32
  }
  func.func @transform_2(%arg0: i32) -> (i32, i32, i32) {
    %c0_i32 = arith.constant 0 : i32
    %c0_i32_0 = arith.constant 0 : i32
    %c0_i32_1 = arith.constant 0 : i32
    %c0_i32_2 = arith.constant 0 : i32
    return %c0_i32, %c0_i32_0, %c0_i32_1 : i32, i32, i32
  }
  func.func @transform_3(%arg0: i32) -> (i32, i32) {
    %c0_i32 = arith.constant 0 : i32
    %c0_i32_0 = arith.constant 0 : i32
    %c0_i32_1 = arith.constant 0 : i32
    return %c0_i32, %c0_i32_0 : i32, i32
  }
  func.func @transform_4(%arg0: i32) -> (i32, i32) {
    %c0_i32 = arith.constant 0 : i32
    %c0_i32_0 = arith.constant 0 : i32
    %c0_i32_1 = arith.constant 0 : i32
    return %c0_i32, %c0_i32_0 : i32, i32
  }
  func.func @transform_5(%arg0: i32) -> (i32, i32) {
    %c0_i32 = arith.constant 0 : i32
    %c0_i32_0 = arith.constant 0 : i32
    %c0_i32_1 = arith.constant 0 : i32
    return %c0_i32, %c0_i32_0 : i32, i32
  }
  func.func @transform_6(%arg0: i32) -> (i32, i32) {
    %c0_i32 = arith.constant 0 : i32
    %c0_i32_0 = arith.constant 0 : i32
    return %arg0, %c0_i32 : i32, i32
  }
}

</mosaic_0001>

<llo_original>
// kernel: tpu_custom_call.1
$region0: #{tpu_custom_call.1}
  #allocation0 [shape = 'u32[]', space=smem, size = 0x4, offset = 0x4, fixed_abs, tag = 'smem constant byte address 0x4 - core index']
  #allocation1 [shape = 'u32[144,128]{1,0:T(1,128)}', space=vmem, size = 0x12000, scoped, tag = 'internal scratch']
  %s0 = inlined_call_operand.vmem [shape: f32[16,2], index: 0, kind: input, shape index: {}]
  %s1 = inlined_call_operand.vmem [shape: f32[2,128], index: 1, kind: input, shape index: {}]
  %s2 = inlined_call_operand.hbm [shape: bf16[17,128,128], index: 2, kind: input, shape index: {}]
  %s3 = inlined_call_operand.vmem [shape: f32[18,128], index: 3, kind: input, shape index: {}]
  %s4 = inlined_call_operand.vmem [shape: bf16[128,8], index: 4, kind: input, shape index: {}]
  %s5 = inlined_call_operand.vmem [shape: f32[1,8], index: 5, kind: input, shape index: {}]
  %s6 = inlined_call_operand.vmem [shape: f32[16,8], index: 6, kind: output, shape index: {}]
  %s7 = sld [smem:[#allocation0]]
  $region38: #{tpu_custom_call.1} parent=0
    _
  %s9 = ssub.s32 1, %s7
  %s10 = scalar_select 0, %s9, %s7
  $region1: #{tpu_custom_call.1} parent=0
    #allocation2 [shape = 'u8[557056]{0}', space=vmem, size = 0x88000, scoped, tag = 'input window, operand 2, single buffered']
    #allocation3 [shape = 's32[1]{0}', space=sflag, size = 0x4, scoped, tag = 'scoped memory for tpu_custom_call.1']
    %11 = vsyncpa [#allocation3], 0
    // Predicated region
    $region2: #{tpu_custom_call.1} parent=1 // pred_check
      _
    $region3: #{tpu_custom_call.1} parent=1 // pred_check_branch
      %13 = sbr.rel (0) target = $region5
    $region4: #{tpu_custom_call.1} parent=1 // pred_region
      _
    $region5: #{tpu_custom_call.1} parent=1 // pred_fallthru
      _
    // Predicated region
    $region6: #{tpu_custom_call.1} parent=1 // pred_check
      _
    $region7: #{tpu_custom_call.1} parent=1 // pred_check_branch
      %15 = sbr.rel (0) target = $region9
    $region8: #{tpu_custom_call.1} parent=1 // pred_region
      _
    $region9: #{tpu_custom_call.1} parent=1 // pred_fallthru
      _
    // Predicated region
    $region10: #{tpu_custom_call.1} parent=1 // pred_check
      _
    $region11: #{tpu_custom_call.1} parent=1 // pred_check_branch
      %17 = sbr.rel (0) target = $region13
    $region12: #{tpu_custom_call.1} parent=1 // pred_region
      %s19 = ssub.s32 17408, 17408
      %20 = vsyncadd [#allocation3], %s19
      %s21 = sshll.u32 [#allocation2], 4
      %s22 = int_to_ptr.vmem [resolvable:$true] %s21
      %27 = dma.hbm_to_vmem [thread:$0]  %s2, 17408, %s22, [#allocation3], 64, 64, 4
    $region13: #{tpu_custom_call.1} parent=1 // pred_fallthru
      _
    // Predicated region
    $region14: #{tpu_custom_call.1} parent=1 // pred_check
      _
    $region15: #{tpu_custom_call.1} parent=1 // pred_check_branch
      %29 = sbr.rel (0) target = $region17
    $region16: #{tpu_custom_call.1} parent=1 // pred_region
      _
    $region17: #{tpu_custom_call.1} parent=1 // pred_fallthru
      _
    // Predicated region
    $region18: #{tpu_custom_call.1} parent=1 // pred_check
      _
    $region19: #{tpu_custom_call.1} parent=1 // pred_check_branch
      %31 = sbr.rel (0) target = $region21
    $region20: #{tpu_custom_call.1} parent=1 // pred_region
      _
    $region21: #{tpu_custom_call.1} parent=1 // pred_fallthru
      _
    // Predicated region
    $region22: #{tpu_custom_call.1} parent=1 // pred_check
      _
    $region23: #{tpu_custom_call.1} parent=1 // pred_check_branch
      %33 = sbr.rel (0) target = $region25
    $region24: #{tpu_custom_call.1} parent=1 // pred_region
      _
    $region25: #{tpu_custom_call.1} parent=1 // pred_fallthru
      _
    // Predicated region
    $region26: #{tpu_custom_call.1} parent=1 // pred_check
      _
    $region27: #{tpu_custom_call.1} parent=1 // pred_check_branch
      %35 = sbr.rel (0) target = $region29
    $region28: #{tpu_custom_call.1} parent=1 // pred_region
      %36 = dma.done [#allocation3], 17408
    $region29: #{tpu_custom_call.1} parent=1 // pred_fallthru
      _
    %v38 = vld [vmem:[%s1] sm:$0x3]
    %v39 = vld [vmem:[%s3] sm:$0x1]
    %v40 = vld [vmem:[%s0] sm:$0xff]
    %42 = vset.pattern.permute.xlu0 0
    %43 = vperm.xlu0 %42, %v40
    %v44 = vpop.permute.xlu0 %43
    %v46 = vlaneseq
    %v47 = vshrl.u32 %v46, 7
    %v48 = vsub.s32 0, %v47
    %v49 = vrot.slane %v38, %v48
    %v50 = vmul.f32 %v44, %v49
    %51 = vset.pattern.permute.xlu0 1
    %52 = vperm.xlu0 %51, %v40
    %v53 = vpop.permute.xlu0 %52
    %v55 = vlaneseq
    %v56 = vshrl.u32 %v55, 7
    %v57 = vsub.s32 1, %v56
    %v58 = vrot.slane %v38, %v57
    %v59 = vmul.f32 %v53, %v58
    %v60 = vadd.f32 %v50, %v59
    %v61 = vlaneseq
    %v62 = vshrl.u32 %v61, 7
    %v63 = vsub.s32 0, %v62
    %v64 = vrot.slane %v39, %v63
    %v65 = vadd.f32 %v60, %v64
    %v66 = vmax.f32 %v65, 0.0
    %v67 = vpack.c.bf16 %v66, %v66
    %v68 = vld [vmem:[%s0 + $0x8] sm:$0xff]
    %70 = vset.pattern.permute.xlu0 0
    %71 = vperm.xlu0 %70, %v68
    %v72 = vpop.permute.xlu0 %71
    %v74 = vmul.f32 %v72, %v49
    %75 = vset.pattern.permute.xlu0 1
    %76 = vperm.xlu0 %75, %v68
    %v77 = vpop.permute.xlu0 %76
    %v79 = vmul.f32 %v77, %v58
    %v80 = vadd.f32 %v74, %v79
    %v81 = vadd.f32 %v80, %v64
    %v82 = vmax.f32 %v81, 0.0
    %v83 = vpack.c.bf16 %v82, %v82
    %v84 = vld [vmem:[#allocation2] sm:$0xf]
    %v85 = vld [vmem:[#allocation2 + $0x4] sm:$0xf]
    %v86 = vld [vmem:[#allocation2 + $0x8] sm:$0xf]
    %v87 = vld [vmem:[#allocation2 + $0xc] sm:$0xf]
    %v88 = vld [vmem:[#allocation2 + $0x10] sm:$0xf]
    %v89 = vld [vmem:[#allocation2 + $0x14] sm:$0xf]
    %v90 = vld [vmem:[#allocation2 + $0x18] sm:$0xf]
    %v91 = vld [vmem:[#allocation2 + $0x1c] sm:$0xf]
    %v92 = vld [vmem:[#allocation2 + $0x20] sm:$0xf]
    %v93 = vld [vmem:[#allocation2 + $0x24] sm:$0xf]
    %v94 = vld [vmem:[#allocation2 + $0x28] sm:$0xf]
    %v95 = vld [vmem:[#allocation2 + $0x2c] sm:$0xf]
    %v96 = vld [vmem:[#allocation2 + $0x30] sm:$0xf]
    %v97 = vld [vmem:[#allocation2 + $0x34] sm:$0xf]
    %v98 = vld [vmem:[#allocation2 + $0x38] sm:$0xf]
    %v99 = vld [vmem:[#allocation2 + $0x3c] sm:$0xf]
    %v100 = vld [vmem:[%s3 + $0x1] sm:$0x1]
    %v101 = vlaneseq
    %v102 = vshrl.u32 %v101, 7
    %v103 = vsub.s32 0, %v102
    %v104 = vrot.slane %v100, %v103
    %v121 = vunpack.c.l.b16 %v84
    %v122 = vunpack.c.l.b16 %v85
    %v123 = vunpack.c.l.b16 %v86
    %v124 = vunpack.c.l.b16 %v87
    %v125 = vunpack.c.l.b16 %v88
    %v126 = vunpack.c.l.b16 %v89
    %v127 = vunpack.c.l.b16 %v90
    %v128 = vunpack.c.l.b16 %v91
    %v129 = vunpack.c.l.b16 %v92
    %v130 = vunpack.c.l.b16 %v93
    %v131 = vunpack.c.l.b16 %v94
    %v132 = vunpack.c.l.b16 %v95
    %v133 = vunpack.c.l.b16 %v96
    %v134 = vunpack.c.l.b16 %v97
    %v135 = vunpack.c.l.b16 %v98
    %v136 = vunpack.c.l.b16 %v99
    %v137 = vpack.c.b16 %v122, %v121
    %v138 = vpack.c.b16 %v124, %v123
    %v139 = vpack.c.b16 %v126, %v125
    %v140 = vpack.c.b16 %v128, %v127
    %v141 = vpack.c.b16 %v130, %v129
    %v142 = vpack.c.b16 %v132, %v131
    %v143 = vpack.c.b16 %v134, %v133
    %v144 = vpack.c.b16 %v136, %v135
    %153 = vmatprep.subr.bf16.mxu0 0
    %154 = vmatpush1.bf16.msra.mxu0 %v137
    %155 = vmatprep.subr.bf16.mxu0 0
    %156 = vmatpush1.bf16.msra.mxu0 %v138
    %157 = vmatprep.subr.bf16.mxu0 0
    %158 = vmatpush1.bf16.msra.mxu0 %v139
    %159 = vmatprep.subr.bf16.mxu0 0
    %160 = vmatpush1.bf16.msra.mxu0 %v140
    %161 = vmatprep.subr.bf16.mxu0 0
    %162 = vmatpush1.bf16.msra.mxu0 %v141
    %163 = vmatprep.subr.bf16.mxu0 0
    %164 = vmatpush1.bf16.msra.mxu0 %v142
    %165 = vmatprep.subr.bf16.mxu0 0
    %166 = vmatpush1.bf16.msra.mxu0 %v143
    %167 = vmatprep.subr.bf16.mxu0 0
    %168 = vmatpush1.bf16.msra.mxu0 %v144
    %169 = vmatprep.subr.bf16.mxu0 0
    %170 = vmatpush1.bf16.msra.mxu0 0
    %171 = vmatprep.subr.bf16.mxu0 0
    %172 = vmatpush1.bf16.msra.mxu0 0
    %173 = vmatprep.subr.bf16.mxu0 0
    %174 = vmatpush1.bf16.msra.mxu0 0
    %175 = vmatprep.subr.bf16.mxu0 0
    %176 = vmatpush1.bf16.msra.mxu0 0
    %177 = vmatprep.subr.bf16.mxu0 0
    %178 = vmatpush1.bf16.msra.mxu0 0
    %179 = vmatprep.subr.bf16.mxu0 0
    %180 = vmatpush1.bf16.msra.mxu0 0
    %181 = vmatprep.subr.bf16.mxu0 0
    %182 = vmatpush1.bf16.msra.mxu0 0
    %183 = vmatprep.subr.bf16.mxu0 0
    %184 = vmatpush1.bf16.msra.mxu0 0
    %185 = vmatprep.mubr.bf16.mxu0 0
    %186 = vmatmul.mubr.bf16.gmra.mrb[0].mxu0 %v67
    %v187 = vpop.f32.mrb[0].mxu0
    %v188 = vadd.f32 %v104, %v187
    %v189 = vpop.f32.mrb[0].mxu0
    %v190 = vpop.f32.mrb[0].mxu0
    %v191 = vpop.f32.mrb[0].mxu0
    %192 = vdwg.mxu0
    %v193 = vmax.f32 %v188, 0.0
    %v194 = vpack.c.bf16 %v193, %v193
    %195 = vmatprep.subr.bf16.mxu0 0
    %196 = vmatpush1.bf16.msra.mxu0 %v137
    %197 = vmatprep.subr.bf16.mxu0 0
    %198 = vmatpush1.bf16.msra.mxu0 %v138
    %199 = vmatprep.subr.bf16.mxu0 0
    %200 = vmatpush1.bf16.msra.mxu0 %v139
    %201 = vmatprep.subr.bf16.mxu0 0
    %202 = vmatpush1.bf16.msra.mxu0 %v140
    %203 = vmatprep.subr.bf16.mxu0 0
    %204 = vmatpush1.bf16.msra.mxu0 %v141
    %205 = vmatprep.subr.bf16.mxu0 0
    %206 = vmatpush1.bf16.msra.mxu0 %v142
    %207 = vmatprep.subr.bf16.mxu0 0
    %208 = vmatpush1.bf16.msra.mxu0 %v143
    %209 = vmatprep.subr.bf16.mxu0 0
    %210 = vmatpush1.bf16.msra.mxu0 %v144
    %211 = vmatprep.subr.bf16.mxu0 0
    %212 = vmatpush1.bf16.msra.mxu0 0
    %213 = vmatprep.subr.bf16.mxu0 0
    %214 = vmatpush1.bf16.msra.mxu0 0
    %215 = vmatprep.subr.bf16.mxu0 0
    %216 = vmatpush1.bf16.msra.mxu0 0
    %217 = vmatprep.subr.bf16.mxu0 0
    %218 = vmatpush1.bf16.msra.mxu0 0
    %219 = vmatprep.subr.bf16.mxu0 0
    %220 = vmatpush1.bf16.msra.mxu0 0
    %221 = vmatprep.subr.bf16.mxu0 0
    %222 = vmatpush1.bf16.msra.mxu0 0
    %223 = vmatprep.subr.bf16.mxu0 0
    %224 = vmatpush1.bf16.msra.mxu0 0
    %225 = vmatprep.subr.bf16.mxu0 0
    %226 = vmatpush1.bf16.msra.mxu0 0
    %227 = vmatprep.mubr.bf16.mxu0 0
    %228 = vmatmul.mubr.bf16.gmra.mrb[0].mxu0 %v83
    %v229 = vpop.f32.mrb[0].mxu0
    %v230 = vadd.f32 %v104, %v229
    %v231 = vpop.f32.mrb[0].mxu0
    %v232 = vpop.f32.mrb[0].mxu0
    %v233 = vpop.f32.mrb[0].mxu0
    %234 = vdwg.mxu0
    %v235 = vmax.f32 %v230, 0.0
    %v236 = vpack.c.bf16 %v235, %v235
    %s237 = scalar_lea.vmem [#allocation2], 64
    %v238 = vld [vmem:[%s237] sm:$0xf]
    %v239 = vld [vmem:[%s237 + $0x4] sm:$0xf]
    %v240 = vld [vmem:[%s237 + $0x8] sm:$0xf]
    %v241 = vld [vmem:[%s237 + $0xc] sm:$0xf]
    %v242 = vld [vmem:[%s237 + $0x10] sm:$0xf]
    %v243 = vld [vmem:[%s237 + $0x14] sm:$0xf]
    %v244 = vld [vmem:[%s237 + $0x18] sm:$0xf]
    %v245 = vld [vmem:[%s237 + $0x1c] sm:$0xf]
    %v246 = vld [vmem:[%s237 + $0x20] sm:$0xf]
    %v247 = vld [vmem:[%s237 + $0x24] sm:$0xf]
    %v248 = vld [vmem:[%s237 + $0x28] sm:$0xf]
    %v249 = vld [vmem:[%s237 + $0x2c] sm:$0xf]
    %v250 = vld [vmem:[%s237 + $0x30] sm:$0xf]
    %v251 = vld [vmem:[%s237 + $0x34] sm:$0xf]
    %v252 = vld [vmem:[%s237 + $0x38] sm:$0xf]
    %v253 = vld [vmem:[%s237 + $0x3c] sm:$0xf]
    %v254 = vld [vmem:[%s3 + $0x2] sm:$0x1]
    %v255 = vlaneseq
    %v256 = vshrl.u32 %v255, 7
    %v257 = vsub.s32 0, %v256
    %v258 = vrot.slane %v254, %v257
    %v275 = vunpack.c.l.b16 %v238
    %v276 = vunpack.c.l.b16 %v239
    %v277 = vunpack.c.l.b16 %v240
    %v278 = vunpack.c.l.b16 %v241
    %v279 = vunpack.c.l.b16 %v242
    %v280 = vunpack.c.l.b16 %v243
    %v281 = vunpack.c.l.b16 %v244
    %v282 = vunpack.c.l.b16 %v245
    %v283 = vunpack.c.l.b16 %v246
    %v284 = vunpack.c.l.b16 %v247
    %v285 = vunpack.c.l.b16 %v248
    %v286 = vunpack.c.l.b16 %v249
    %v287 = vunpack.c.l.b16 %v250
    %v288 = vunpack.c.l.b16 %v251
    %v289 = vunpack.c.l.b16 %v252
    %v290 = vunpack.c.l.b16 %v253
    %v291 = vpack.c.b16 %v276, %v275
    %v292 = vpack.c.b16 %v278, %v277
    %v293 = vpack.c.b16 %v280, %v279
    %v294 = vpack.c.b16 %v282, %v281
    %v295 = vpack.c.b16 %v284, %v283
    %v296 = vpack.c.b16 %v286, %v285
    %v297 = vpack.c.b16 %v288, %v287
    %v298 = vpack.c.b16 %v290, %v289
    %307 = vmatprep.subr.bf16.mxu0 0
    %308 = vmatpush1.bf16.msra.mxu0 %v291
    %309 = vmatprep.subr.bf16.mxu0 0
    %310 = vmatpush1.bf16.msra.mxu0 %v292
    %311 = vmatprep.subr.bf16.mxu0 0
    %312 = vmatpush1.bf16.msra.mxu0 %v293
    %313 = vmatprep.subr.bf16.mxu0 0
    %314 = vmatpush1.bf16.msra.mxu0 %v294
    %315 = vmatprep.subr.bf16.mxu0 0
    %316 = vmatpush1.bf16.msra.mxu0 %v295
    %317 = vmatprep.subr.bf16.mxu0 0
    %318 = vmatpush1.bf16.msra.mxu0 %v296
    %319 = vmatprep.subr.bf16.mxu0 0
    %320 = vmatpush1.bf16.msra.mxu0 %v297
    %321 = vmatprep.subr.bf16.mxu0 0
    %322 = vmatpush1.bf16.msra.mxu0 %v298
    %323 = vmatprep.subr.bf16.mxu0 0
    %324 = vmatpush1.bf16.msra.mxu0 0
    %325 = vmatprep.subr.bf16.mxu0 0
    %326 = vmatpush1.bf16.msra.mxu0 0
    %327 = vmatprep.subr.bf16.mxu0 0
    %328 = vmatpush1.bf16.msra.mxu0 0
    %329 = vmatprep.subr.bf16.mxu0 0
    %330 = vmatpush1.bf16.msra.mxu0 0
    %331 = vmatprep.subr.bf16.mxu0 0
    %332 = vmatpush1.bf16.msra.mxu0 0
    %333 = vmatprep.subr.bf16.mxu0 0
    %334 = vmatpush1.bf16.msra.mxu0 0
    %335 = vmatprep.subr.bf16.mxu0 0
    %336 = vmatpush1.bf16.msra.mxu0 0
    %337 = vmatprep.subr.bf16.mxu0 0
    %338 = vmatpush1.bf16.msra.mxu0 0
    %339 = vmatprep.mubr.bf16.mxu0 0
    %340 = vmatmul.mubr.bf16.gmra.mrb[0].mxu0 %v194
    %v341 = vpop.f32.mrb[0].mxu0
    %v342 = vadd.f32 %v258, %v341
    %v343 = vpop.f32.mrb[0].mxu0
    %v344 = vpop.f32.mrb[0].mxu0
    %v345 = vpop.f32.mrb[0].mxu0
    %346 = vdwg.mxu0
    %v347 = vmax.f32 %v342, 0.0
    %v348 = vpack.c.bf16 %v347, %v347
    %349 = vmatprep.subr.bf16.mxu0 0
    %350 = vmatpush1.bf16.msra.mxu0 %v291
    %351 = vmatprep.subr.bf16.mxu0 0
    %352 = vmatpush1.bf16.msra.mxu0 %v292
    %353 = vmatprep.subr.bf16.mxu0 0
    %354 = vmatpush1.bf16.msra.mxu0 %v293
    %355 = vmatprep.subr.bf16.mxu0 0
    %356 = vmatpush1.bf16.msra.mxu0 %v294
    %357 = vmatprep.subr.bf16.mxu0 0
    %358 = vmatpush1.bf16.msra.mxu0 %v295
    %359 = vmatprep.subr.bf16.mxu0 0
    %360 = vmatpush1.bf16.msra.mxu0 %v296
    %361 = vmatprep.subr.bf16.mxu0 0
    %362 = vmatpush1.bf16.msra.mxu0 %v297
    %363 = vmatprep.subr.bf16.mxu0 0
    %364 = vmatpush1.bf16.msra.mxu0 %v298
    %365 = vmatprep.subr.bf16.mxu0 0
    %366 = vmatpush1.bf16.msra.mxu0 0
    %367 = vmatprep.subr.bf16.mxu0 0
    %368 = vmatpush1.bf16.msra.mxu0 0
    %369 = vmatprep.subr.bf16.mxu0 0
    %370 = vmatpush1.bf16.msra.mxu0 0
    %371 = vmatprep.subr.bf16.mxu0 0
    %372 = vmatpush1.bf16.msra.mxu0 0
    %373 = vmatprep.subr.bf16.mxu0 0
    %374 = vmatpush1.bf16.msra.mxu0 0
    %375 = vmatprep.subr.bf16.mxu0 0
    %376 = vmatpush1.bf16.msra.mxu0 0
    %377 = vmatprep.subr.bf16.mxu0 0
    %378 = vmatpush1.bf16.msra.mxu0 0
    %379 = vmatprep.subr.bf16.mxu0 0
    %380 = vmatpush1.bf16.msra.mxu0 0
    %381 = vmatprep.mubr.bf16.mxu0 0
    %382 = vmatmul.mubr.bf16.gmra.mrb[0].mxu0 %v236
    %v383 = vpop.f32.mrb[0].mxu0
    %v384 = vadd.f32 %v258, %v383
    %v385 = vpop.f32.mrb[0].mxu0
    %v386 = vpop.f32.mrb[0].mxu0
    %v387 = vpop.f32.mrb[0].mxu0
    %388 = vdwg.mxu0
    %v389 = vmax.f32 %v384, 0.0
    %v390 = vpack.c.bf16 %v389, %v389
    %s391 = scalar_lea.vmem [#allocation2], 128
    %v392 = vld [vmem:[%s391] sm:$0xf]
    %v393 = vld [vmem:[%s391 + $0x4] sm:$0xf]
    %v394 = vld [vmem:[%s391 + $0x8] sm:$0xf]
    %v395 = vld [vmem:[%s391 + $0xc] sm:$0xf]
    %v396 = vld [vmem:[%s391 + $0x10] sm:$0xf]
    %v397 = vld [vmem:[%s391 + $0x14] sm:$0xf]
    %v398 = vld [vmem:[%s391 + $0x18] sm:$0xf]
    %v399 = vld [vmem:[%s391 + $0x1c] sm:$0xf]
    %v400 = vld [vmem:[%s391 + $0x20] sm:$0xf]
    %v401 = vld [vmem:[%s391 + $0x24] sm:$0xf]
    %v402 = vld [vmem:[%s391 + $0x28] sm:$0xf]
    %v403 = vld [vmem:[%s391 + $0x2c] sm:$0xf]
    %v404 = vld [vmem:[%s391 + $0x30] sm:$0xf]
    %v405 = vld [vmem:[%s391 + $0x34] sm:$0xf]
    %v406 = vld [vmem:[%s391 + $0x38] sm:$0xf]
    %v407 = vld [vmem:[%s391 + $0x3c] sm:$0xf]
    %v408 = vld [vmem:[%s3 + $0x3] sm:$0x1]
    %v409 = vlaneseq
    %v410 = vshrl.u32 %v409, 7
    %v411 = vsub.s32 0, %v410
    %v412 = vrot.slane %v408, %v411
    %v429 = vunpack.c.l.b16 %v392
    %v430 = vunpack.c.l.b16 %v393
    %v431 = vunpack.c.l.b16 %v394
    %v432 = vunpack.c.l.b16 %v395
    %v433 = vunpack.c.l.b16 %v396
    %v434 = vunpack.c.l.b16 %v397
    %v435 = vunpack.c.l.b16 %v398
    %v436 = vunpack.c.l.b16 %v399
    %v437 = vunpack.c.l.b16 %v400
    %v438 = vunpack.c.l.b16 %v401
    %v439 = vunpack.c.l.b16 %v402
    %v440 = vunpack.c.l.b16 %v403
    %v441 = vunpack.c.l.b16 %v404
    %v442 = vunpack.c.l.b16 %v405
    %v443 = vunpack.c.l.b16 %v406
    %v444 = vunpack.c.l.b16 %v407
    %v445 = vpack.c.b16 %v430, %v429
    %v446 = vpack.c.b16 %v432, %v431
    %v447 = vpack.c.b16 %v434, %v433
    %v448 = vpack.c.b16 %v436, %v435
    %v449 = vpack.c.b16 %v438, %v437
    %v450 = vpack.c.b16 %v440, %v439
    %v451 = vpack.c.b16 %v442, %v441
    %v452 = vpack.c.b16 %v444, %v443
    %461 = vmatprep.subr.bf16.mxu0 0
    %462 = vmatpush1.bf16.msra.mxu0 %v445
    %463 = vmatprep.subr.bf16.mxu0 0
    %464 = vmatpush1.bf16.msra.mxu0 %v446
    %465 = vmatprep.subr.bf16.mxu0 0
    %466 = vmatpush1.bf16.msra.mxu0 %v447
    %467 = vmatprep.subr.bf16.mxu0 0
    %468 = vmatpush1.bf16.msra.mxu0 %v448
    %469 = vmatprep.subr.bf16.mxu0 0
    %470 = vmatpush1.bf16.msra.mxu0 %v449
    %471 = vmatprep.subr.bf16.mxu0 0
    %472 = vmatpush1.bf16.msra.mxu0 %v450
    %473 = vmatprep.subr.bf16.mxu0 0
    %474 = vmatpush1.bf16.msra.mxu0 %v451
    %475 = vmatprep.subr.bf16.mxu0 0
    %476 = vmatpush1.bf16.msra.mxu0 %v452
    %477 = vmatprep.subr.bf16.mxu0 0
    %478 = vmatpush1.bf16.msra.mxu0 0
    %479 = vmatprep.subr.bf16.mxu0 0
    %480 = vmatpush1.bf16.msra.mxu0 0
    %481 = vmatprep.subr.bf16.mxu0 0
    %482 = vmatpush1.bf16.msra.mxu0 0
    %483 = vmatprep.subr.bf16.mxu0 0
    %484 = vmatpush1.bf16.msra.mxu0 0
    %485 = vmatprep.subr.bf16.mxu0 0
    %486 = vmatpush1.bf16.msra.mxu0 0
    %487 = vmatprep.subr.bf16.mxu0 0
    %488 = vmatpush1.bf16.msra.mxu0 0
    %489 = vmatprep.subr.bf16.mxu0 0
    %490 = vmatpush1.bf16.msra.mxu0 0
    %491 = vmatprep.subr.bf16.mxu0 0
    %492 = vmatpush1.bf16.msra.mxu0 0
    %493 = vmatprep.mubr.bf16.mxu0 0
    %494 = vmatmul.mubr.bf16.gmra.mrb[0].mxu0 %v348
    %v495 = vpop.f32.mrb[0].mxu0
    %v496 = vadd.f32 %v412, %v495
    %v497 = vpop.f32.mrb[0].mxu0
    %v498 = vpop.f32.mrb[0].mxu0
    %v499 = vpop.f32.mrb[0].mxu0
    %500 = vdwg.mxu0
    %v501 = vmax.f32 %v496, 0.0
    %v502 = vpack.c.bf16 %v501, %v501
    %503 = vmatprep.subr.bf16.mxu0 0
    %504 = vmatpush1.bf16.msra.mxu0 %v445
    %505 = vmatprep.subr.bf16.mxu0 0
    %506 = vmatpush1.bf16.msra.mxu0 %v446
    %507 = vmatprep.subr.bf16.mxu0 0
    %508 = vmatpush1.bf16.msra.mxu0 %v447
    %509 = vmatprep.subr.bf16.mxu0 0
    %510 = vmatpush1.bf16.msra.mxu0 %v448
    %511 = vmatprep.subr.bf16.mxu0 0
    %512 = vmatpush1.bf16.msra.mxu0 %v449
    %513 = vmatprep.subr.bf16.mxu0 0
    %514 = vmatpush1.bf16.msra.mxu0 %v450
    %515 = vmatprep.subr.bf16.mxu0 0
    %516 = vmatpush1.bf16.msra.mxu0 %v451
    %517 = vmatprep.subr.bf16.mxu0 0
    %518 = vmatpush1.bf16.msra.mxu0 %v452
    %519 = vmatprep.subr.bf16.mxu0 0
    %520 = vmatpush1.bf16.msra.mxu0 0
    %521 = vmatprep.subr.bf16.mxu0 0
    %522 = vmatpush1.bf16.msra.mxu0 0
    %523 = vmatprep.subr.bf16.mxu0 0
    %524 = vmatpush1.bf16.msra.mxu0 0
    %525 = vmatprep.subr.bf16.mxu0 0
    %526 = vmatpush1.bf16.msra.mxu0 0
    %527 = vmatprep.subr.bf16.mxu0 0
    %528 = vmatpush1.bf16.msra.mxu0 0
    %529 = vmatprep.subr.bf16.mxu0 0
    %530 = vmatpush1.bf16.msra.mxu0 0
    %531 = vmatprep.subr.bf16.mxu0 0
    %532 = vmatpush1.bf16.msra.mxu0 0
    %533 = vmatprep.subr.bf16.mxu0 0
    %534 = vmatpush1.bf16.msra.mxu0 0
    %535 = vmatprep.mubr.bf16.mxu0 0
    %536 = vmatmul.mubr.bf16.gmra.mrb[0].mxu0 %v390
    %v537 = vpop.f32.mrb[0].mxu0
    %v538 = vadd.f32 %v412, %v537
    %v539 = vpop.f32.mrb[0].mxu0
    %v540 = vpop.f32.mrb[0].mxu0
    %v541 = vpop.f32.mrb[0].mxu0
    %542 = vdwg.mxu0
    %v543 = vmax.f32 %v538, 0.0
    %v544 = vpack.c.bf16 %v543, %v543
    %s545 = scalar_lea.vmem [#allocation2], 192
    %v546 = vld [vmem:[%s545] sm:$0xf]
    %v547 = vld [vmem:[%s545 + $0x4] sm:$0xf]
    %v548 = vld [vmem:[%s545 + $0x8] sm:$0xf]
    %v549 = vld [vmem:[%s545 + $0xc] sm:$0xf]
    %v550 = vld [vmem:[%s545 + $0x10] sm:$0xf]
    %v551 = vld [vmem:[%s545 + $0x14] sm:$0xf]
    %v552 = vld [vmem:[%s545 + $0x18] sm:$0xf]
    %v553 = vld [vmem:[%s545 + $0x1c] sm:$0xf]
    %v554 = vld [vmem:[%s545 + $0x20] sm:$0xf]
    %v555 = vld [vmem:[%s545 + $0x24] sm:$0xf]
    %v556 = vld [vmem:[%s545 + $0x28] sm:$0xf]
    %v557 = vld [vmem:[%s545 + $0x2c] sm:$0xf]
    %v558 = vld [vmem:[%s545 + $0x30] sm:$0xf]
    %v559 = vld [vmem:[%s545 + $0x34] sm:$0xf]
    %v560 = vld [vmem:[%s545 + $0x38] sm:$0xf]
    %v561 = vld [vmem:[%s545 + $0x3c] sm:$0xf]
    %v562 = vld [vmem:[%s3 + $0x4] sm:$0x1]
    %v563 = vlaneseq
    %v564 = vshrl.u32 %v563, 7
    %v565 = vsub.s32 0, %v564
    %v566 = vrot.slane %v562, %v565
    %v583 = vunpack.c.l.b16 %v546
    %v584 = vunpack.c.l.b16 %v547
    %v585 = vunpack.c.l.b16 %v548
    %v586 = vunpack.c.l.b16 %v549
    %v587 = vunpack.c.l.b16 %v550
    %v588 = vunpack.c.l.b16 %v551
    %v589 = vunpack.c.l.b16 %v552
    %v590 = vunpack.c.l.b16 %v553
    %v591 = vunpack.c.l.b16 %v554
    %v592 = vunpack.c.l.b16 %v555
    %v593 = vunpack.c.l.b16 %v556
    %v594 = vunpack.c.l.b16 %v557
    %v595 = vunpack.c.l.b16 %v558
    %v596 = vunpack.c.l.b16 %v559
    %v597 = vunpack.c.l.b16 %v560
    %v598 = vunpack.c.l.b16 %v561
    %v599 = vpack.c.b16 %v584, %v583
    %v600 = vpack.c.b16 %v586, %v585
    %v601 = vpack.c.b16 %v588, %v587
    %v602 = vpack.c.b16 %v590, %v589
    %v603 = vpack.c.b16 %v592, %v591
    %v604 = vpack.c.b16 %v594, %v593
    %v605 = vpack.c.b16 %v596, %v595
    %v606 = vpack.c.b16 %v598, %v597
    %615 = vmatprep.subr.bf16.mxu0 0
    %616 = vmatpush1.bf16.msra.mxu0 %v599
    %617 = vmatprep.subr.bf16.mxu0 0
    %618 = vmatpush1.bf16.msra.mxu0 %v600
    %619 = vmatprep.subr.bf16.mxu0 0
    %620 = vmatpush1.bf16.msra.mxu0 %v601
    %621 = vmatprep.subr.bf16.mxu0 0
    %622 = vmatpush1.bf16.msra.mxu0 %v602
    %623 = vmatprep.subr.bf16.mxu0 0
    %624 = vmatpush1.bf16.msra.mxu0 %v603
    %625 = vmatprep.subr.bf16.mxu0 0
    %626 = vmatpush1.bf16.msra.mxu0 %v604
    %627 = vmatprep.subr.bf16.mxu0 0
    %628 = vmatpush1.bf16.msra.mxu0 %v605
    %629 = vmatprep.subr.bf16.mxu0 0
    %630 = vmatpush1.bf16.msra.mxu0 %v606
    %631 = vmatprep.subr.bf16.mxu0 0
    %632 = vmatpush1.bf16.msra.mxu0 0
    %633 = vmatprep.subr.bf16.mxu0 0
    %634 = vmatpush1.bf16.msra.mxu0 0
    %635 = vmatprep.subr.bf16.mxu0 0
    %636 = vmatpush1.bf16.msra.mxu0 0
    %637 = vmatprep.subr.bf16.mxu0 0
    %638 = vmatpush1.bf16.msra.mxu0 0
    %639 = vmatprep.subr.bf16.mxu0 0
    %640 = vmatpush1.bf16.msra.mxu0 0
    %641 = vmatprep.subr.bf16.mxu0 0
    %642 = vmatpush1.bf16.msra.mxu0 0
    %643 = vmatprep.subr.bf16.mxu0 0
    %644 = vmatpush1.bf16.msra.mxu0 0
    %645 = vmatprep.subr.bf16.mxu0 0
    %646 = vmatpush1.bf16.msra.mxu0 0
    %647 = vmatprep.mubr.bf16.mxu0 0
    %648 = vmatmul.mubr.bf16.gmra.mrb[0].mxu0 %v502
    %v649 = vpop.f32.mrb[0].mxu0
    %v650 = vadd.f32 %v566, %v649
    %v651 = vpop.f32.mrb[0].mxu0
    %v652 = vpop.f32.mrb[0].mxu0
    %v653 = vpop.f32.mrb[0].mxu0
    %654 = vdwg.mxu0
    %v655 = vmax.f32 %v650, 0.0
    %v656 = vpack.c.bf16 %v655, %v655
    %657 = vmatprep.subr.bf16.mxu0 0
    %658 = vmatpush1.bf16.msra.mxu0 %v599
    %659 = vmatprep.subr.bf16.mxu0 0
    %660 = vmatpush1.bf16.msra.mxu0 %v600
    %661 = vmatprep.subr.bf16.mxu0 0
    %662 = vmatpush1.bf16.msra.mxu0 %v601
    %663 = vmatprep.subr.bf16.mxu0 0
    %664 = vmatpush1.bf16.msra.mxu0 %v602
    %665 = vmatprep.subr.bf16.mxu0 0
    %666 = vmatpush1.bf16.msra.mxu0 %v603
    %667 = vmatprep.subr.bf16.mxu0 0
    %668 = vmatpush1.bf16.msra.mxu0 %v604
    %669 = vmatprep.subr.bf16.mxu0 0
    %670 = vmatpush1.bf16.msra.mxu0 %v605
    %671 = vmatprep.subr.bf16.mxu0 0
    %672 = vmatpush1.bf16.msra.mxu0 %v606
    %673 = vmatprep.subr.bf16.mxu0 0
    %674 = vmatpush1.bf16.msra.mxu0 0
    %675 = vmatprep.subr.bf16.mxu0 0
    %676 = vmatpush1.bf16.msra.mxu0 0
    %677 = vmatprep.subr.bf16.mxu0 0
    %678 = vmatpush1.bf16.msra.mxu0 0
    %679 = vmatprep.subr.bf16.mxu0 0
    %680 = vmatpush1.bf16.msra.mxu0 0
    %681 = vmatprep.subr.bf16.mxu0 0
    %682 = vmatpush1.bf16.msra.mxu0 0
    %683 = vmatprep.subr.bf16.mxu0 0
    %684 = vmatpush1.bf16.msra.mxu0 0
    %685 = vmatprep.subr.bf16.mxu0 0
    %686 = vmatpush1.bf16.msra.mxu0 0
    %687 = vmatprep.subr.bf16.mxu0 0
    %688 = vmatpush1.bf16.msra.mxu0 0
    %689 = vmatprep.mubr.bf16.mxu0 0
    %690 = vmatmul.mubr.bf16.gmra.mrb[0].mxu0 %v544
    %v691 = vpop.f32.mrb[0].mxu0
    %v692 = vadd.f32 %v566, %v691
    %v693 = vpop.f32.mrb[0].mxu0
    %v694 = vpop.f32.mrb[0].mxu0
    %v695 = vpop.f32.mrb[0].mxu0
    %696 = vdwg.mxu0
    %v697 = vmax.f32 %v692, 0.0
    %v698 = vpack.c.bf16 %v697, %v697
    %s699 = scalar_lea.vmem [#allocation2], 256
    %v700 = vld [vmem:[%s699] sm:$0xf]
    %v701 = vld [vmem:[%s699 + $0x4] sm:$0xf]
    %v702 = vld [vmem:[%s699 + $0x8] sm:$0xf]
    %v703 = vld [vmem:[%s699 + $0xc] sm:$0xf]
    %v704 = vld [vmem:[%s699 + $0x10] sm:$0xf]
    %v705 = vld [vmem:[%s699 + $0x14] sm:$0xf]
    %v706 = vld [vmem:[%s699 + $0x18] sm:$0xf]
    %v707 = vld [vmem:[%s699 + $0x1c] sm:$0xf]
    %v708 = vld [vmem:[%s699 + $0x20] sm:$0xf]
    %v709 = vld [vmem:[%s699 + $0x24] sm:$0xf]
    %v710 = vld [vmem:[%s699 + $0x28] sm:$0xf]
    %v711 = vld [vmem:[%s699 + $0x2c] sm:$0xf]
    %v712 = vld [vmem:[%s699 + $0x30] sm:$0xf]
    %v713 = vld [vmem:[%s699 + $0x34] sm:$0xf]
    %v714 = vld [vmem:[%s699 + $0x38] sm:$0xf]
    %v715 = vld [vmem:[%s699 + $0x3c] sm:$0xf]
    %v716 = vld [vmem:[%s3 + $0x5] sm:$0x1]
    %v717 = vlaneseq
    %v718 = vshrl.u32 %v717, 7
    %v719 = vsub.s32 0, %v718
    %v720 = vrot.slane %v716, %v719
    %v737 = vunpack.c.l.b16 %v700
    %v738 = vunpack.c.l.b16 %v701
    %v739 = vunpack.c.l.b16 %v702
    %v740 = vunpack.c.l.b16 %v703
    %v741 = vunpack.c.l.b16 %v704
    %v742 = vunpack.c.l.b16 %v705
    %v743 = vunpack.c.l.b16 %v706
    %v744 = vunpack.c.l.b16 %v707
    %v745 = vunpack.c.l.b16 %v708
    %v746 = vunpack.c.l.b16 %v709
    %v747 = vunpack.c.l.b16 %v710
    %v748 = vunpack.c.l.b16 %v711
    %v749 = vunpack.c.l.b16 %v712
    %v750 = vunpack.c.l.b16 %v713
    %v751 = vunpack.c.l.b16 %v714
    %v752 = vunpack.c.l.b16 %v715
    %v753 = vpack.c.b16 %v738, %v737
    %v754 = vpack.c.b16 %v740, %v739
    %v755 = vpack.c.b16 %v742, %v741
    %v756 = vpack.c.b16 %v744, %v743
    %v757 = vpack.c.b16 %v746, %v745
    %v758 = vpack.c.b16 %v748, %v747
    %v759 = vpack.c.b16 %v750, %v749
    %v760 = vpack.c.b16 %v752, %v751
    %769 = vmatprep.subr.bf16.mxu0 0
    %770 = vmatpush1.bf16.msra.mxu0 %v753
    %771 = vmatprep.subr.bf16.mxu0 0
    %772 = vmatpush1.bf16.msra.mxu0 %v754
    %773 = vmatprep.subr.bf16.mxu0 0
    %774 = vmatpush1.bf16.msra.mxu0 %v755
    %775 = vmatprep.subr.bf16.mxu0 0
    %776 = vmatpush1.bf16.msra.mxu0 %v756
    %777 = vmatprep.subr.bf16.mxu0 0
    %778 = vmatpush1.bf16.msra.mxu0 %v757
    %779 = vmatprep.subr.bf16.mxu0 0
    %780 = vmatpush1.bf16.msra.mxu0 %v758
    %781 = vmatprep.subr.bf16.mxu0 0
    %782 = vmatpush1.bf16.msra.mxu0 %v759
    %783 = vmatprep.subr.bf16.mxu0 0
    %784 = vmatpush1.bf16.msra.mxu0 %v760
    %785 = vmatprep.subr.bf16.mxu0 0
    %786 = vmatpush1.bf16.msra.mxu0 0
    %787 = vmatprep.subr.bf16.mxu0 0
    %788 = vmatpush1.bf16.msra.mxu0 0
    %789 = vmatprep.subr.bf16.mxu0 0
    %790 = vmatpush1.bf16.msra.mxu0 0
    %791 = vmatprep.subr.bf16.mxu0 0
    %792 = vmatpush1.bf16.msra.mxu0 0
    %793 = vmatprep.subr.bf16.mxu0 0
    %794 = vmatpush1.bf16.msra.mxu0 0
    %795 = vmatprep.subr.bf16.mxu0 0
    %796 = vmatpush1.bf16.msra.mxu0 0
    %797 = vmatprep.subr.bf16.mxu0 0
    %798 = vmatpush1.bf16.msra.mxu0 0
    %799 = vmatprep.subr.bf16.mxu0 0
    %800 = vmatpush1.bf16.msra.mxu0 0
    %801 = vmatprep.mubr.bf16.mxu0 0
    %802 = vmatmul.mubr.bf16.gmra.mrb[0].mxu0 %v656
    %v803 = vpop.f32.mrb[0].mxu0
    %v804 = vadd.f32 %v720, %v803
    %v805 = vpop.f32.mrb[0].mxu0
    %v806 = vpop.f32.mrb[0].mxu0
    %v807 = vpop.f32.mrb[0].mxu0
    %808 = vdwg.mxu0
    %v809 = vmax.f32 %v804, 0.0
    %v810 = vpack.c.bf16 %v809, %v809
    %811 = vmatprep.subr.bf16.mxu0 0
    %812 = vmatpush1.bf16.msra.mxu0 %v753
    %813 = vmatprep.subr.bf16.mxu0 0
    %814 = vmatpush1.bf16.msra.mxu0 %v754
    %815 = vmatprep.subr.bf16.mxu0 0
    %816 = vmatpush1.bf16.msra.mxu0 %v755
    %817 = vmatprep.subr.bf16.mxu0 0
    %818 = vmatpush1.bf16.msra.mxu0 %v756
    %819 = vmatprep.subr.bf16.mxu0 0
    %820 = vmatpush1.bf16.msra.mxu0 %v757
    %821 = vmatprep.subr.bf16.mxu0 0
    %822 = vmatpush1.bf16.msra.mxu0 %v758
    %823 = vmatprep.subr.bf16.mxu0 0
    %824 = vmatpush1.bf16.msra.mxu0 %v759
    %825 = vmatprep.subr.bf16.mxu0 0
    %826 = vmatpush1.bf16.msra.mxu0 %v760
    %827 = vmatprep.subr.bf16.mxu0 0
    %828 = vmatpush1.bf16.msra.mxu0 0
    %829 = vmatprep.subr.bf16.mxu0 0
    %830 = vmatpush1.bf16.msra.mxu0 0
    %831 = vmatprep.subr.bf16.mxu0 0
    %832 = vmatpush1.bf16.msra.mxu0 0
    %833 = vmatprep.subr.bf16.mxu0 0
    %834 = vmatpush1.bf16.msra.mxu0 0
    %835 = vmatprep.subr.bf16.mxu0 0
    %836 = vmatpush1.bf16.msra.mxu0 0
    %837 = vmatprep.subr.bf16.mxu0 0
    %838 = vmatpush1.bf16.msra.mxu0 0
    %839 = vmatprep.subr.bf16.mxu0 0
    %840 = vmatpush1.bf16.msra.mxu0 0
    %841 = vmatprep.subr.bf16.mxu0 0
    %842 = vmatpush1.bf16.msra.mxu0 0
    %843 = vmatprep.mubr.bf16.mxu0 0
    %844 = vmatmul.mubr.bf16.gmra.mrb[0].mxu0 %v698
    %v845 = vpop.f32.mrb[0].mxu0
    %v846 = vadd.f32 %v720, %v845
    %v847 = vpop.f32.mrb[0].mxu0
    %v848 = vpop.f32.mrb[0].mxu0
    %v849 = vpop.f32.mrb[0].mxu0
    %850 = vdwg.mxu0
    %v851 = vmax.f32 %v846, 0.0
    %v852 = vpack.c.bf16 %v851, %v851
    %s853 = scalar_lea.vmem [#allocation2], 320
    %v854 = vld [vmem:[%s853] sm:$0xf]
    %v855 = vld [vmem:[%s853 + $0x4] sm:$0xf]
    %v856 = vld [vmem:[%s853 + $0x8] sm:$0xf]
    %v857 = vld [vmem:[%s853 + $0xc] sm:$0xf]
    %v858 = vld [vmem:[%s853 + $0x10] sm:$0xf]
    %v859 = vld [vmem:[%s853 + $0x14] sm:$0xf]
    %v860 = vld [vmem:[%s853 + $0x18] sm:$0xf]
    %v861 = vld [vmem:[%s853 + $0x1c] sm:$0xf]
    %v862 = vld [vmem:[%s853 + $0x20] sm:$0xf]
    %v863 = vld [vmem:[%s853 + $0x24] sm:$0xf]
    %v864 = vld [vmem:[%s853 + $0x28] sm:$0xf]
    %v865 = vld [vmem:[%s853 + $0x2c] sm:$0xf]
    %v866 = vld [vmem:[%s853 + $0x30] sm:$0xf]
    %v867 = vld [vmem:[%s853 + $0x34] sm:$0xf]
    %v868 = vld [vmem:[%s853 + $0x38] sm:$0xf]
    %v869 = vld [vmem:[%s853 + $0x3c] sm:$0xf]
    %v870 = vld [vmem:[%s3 + $0x6] sm:$0x1]
    %v871 = vlaneseq
    %v872 = vshrl.u32 %v871, 7
    %v873 = vsub.s32 0, %v872
    %v874 = vrot.slane %v870, %v873
    %v891 = vunpack.c.l.b16 %v854
    %v892 = vunpack.c.l.b16 %v855
    %v893 = vunpack.c.l.b16 %v856
    %v894 = vunpack.c.l.b16 %v857
    %v895 = vunpack.c.l.b16 %v858
    %v896 = vunpack.c.l.b16 %v859
    %v897 = vunpack.c.l.b16 %v860
    %v898 = vunpack.c.l.b16 %v861
    %v899 = vunpack.c.l.b16 %v862
    %v900 = vunpack.c.l.b16 %v863
    %v901 = vunpack.c.l.b16 %v864
    %v902 = vunpack.c.l.b16 %v865
    %v903 = vunpack.c.l.b16 %v866
    %v904 = vunpack.c.l.b16 %v867
    %v905 = vunpack.c.l.b16 %v868
    %v906 = vunpack.c.l.b16 %v869
    %v907 = vpack.c.b16 %v892, %v891
    %v908 = vpack.c.b16 %v894, %v893
    %v909 = vpack.c.b16 %v896, %v895
    %v910 = vpack.c.b16 %v898, %v897
    %v911 = vpack.c.b16 %v900, %v899
    %v912 = vpack.c.b16 %v902, %v901
    %v913 = vpack.c.b16 %v904, %v903
    %v914 = vpack.c.b16 %v906, %v905
    %923 = vmatprep.subr.bf16.mxu0 0
    %924 = vmatpush1.bf16.msra.mxu0 %v907
    %925 = vmatprep.subr.bf16.mxu0 0
    %926 = vmatpush1.bf16.msra.mxu0 %v908
    %927 = vmatprep.subr.bf16.mxu0 0
    %928 = vmatpush1.bf16.msra.mxu0 %v909
    %929 = vmatprep.subr.bf16.mxu0 0
    %930 = vmatpush1.bf16.msra.mxu0 %v910
    %931 = vmatprep.subr.bf16.mxu0 0
    %932 = vmatpush1.bf16.msra.mxu0 %v911
    %933 = vmatprep.subr.bf16.mxu0 0
    %934 = vmatpush1.bf16.msra.mxu0 %v912
    %935 = vmatprep.subr.bf16.mxu0 0
    %936 = vmatpush1.bf16.msra.mxu0 %v913
    %937 = vmatprep.subr.bf16.mxu0 0
    %938 = vmatpush1.bf16.msra.mxu0 %v914
    %939 = vmatprep.subr.bf16.mxu0 0
    %940 = vmatpush1.bf16.msra.mxu0 0
    %941 = vmatprep.subr.bf16.mxu0 0
    %942 = vmatpush1.bf16.msra.mxu0 0
    %943 = vmatprep.subr.bf16.mxu0 0
    %944 = vmatpush1.bf16.msra.mxu0 0
    %945 = vmatprep.subr.bf16.mxu0 0
    %946 = vmatpush1.bf16.msra.mxu0 0
    %947 = vmatprep.subr.bf16.mxu0 0
    %948 = vmatpush1.bf16.msra.mxu0 0
    %949 = vmatprep.subr.bf16.mxu0 0
    %950 = vmatpush1.bf16.msra.mxu0 0
    %951 = vmatprep.subr.bf16.mxu0 0
    %952 = vmatpush1.bf16.msra.mxu0 0
    %953 = vmatprep.subr.bf16.mxu0 0
    %954 = vmatpush1.bf16.msra.mxu0 0
    %955 = vmatprep.mubr.bf16.mxu0 0
    %956 = vmatmul.mubr.bf16.gmra.mrb[0].mxu0 %v810
    %v957 = vpop.f32.mrb[0].mxu0
    %v958 = vadd.f32 %v874, %v957
    %v959 = vpop.f32.mrb[0].mxu0
    %v960 = vpop.f32.mrb[0].mxu0
    %v961 = vpop.f32.mrb[0].mxu0
    %962 = vdwg.mxu0
    %v963 = vmax.f32 %v958, 0.0
    %v964 = vpack.c.bf16 %v963, %v963
    %965 = vmatprep.subr.bf16.mxu0 0
    %966 = vmatpush1.bf16.msra.mxu0 %v907
    %967 = vmatprep.subr.bf16.mxu0 0
    %968 = vmatpush1.bf16.msra.mxu0 %v908
    %969 = vmatprep.subr.bf16.mxu0 0
    %970 = vmatpush1.bf16.msra.mxu0 %v909
    %971 = vmatprep.subr.bf16.mxu0 0
    %972 = vmatpush1.bf16.msra.mxu0 %v910
    %973 = vmatprep.subr.bf16.mxu0 0
    %974 = vmatpush1.bf16.msra.mxu0 %v911
    %975 = vmatprep.subr.bf16.mxu0 0
    %976 = vmatpush1.bf16.msra.mxu0 %v912
    %977 = vmatprep.subr.bf16.mxu0 0
    %978 = vmatpush1.bf16.msra.mxu0 %v913
    %979 = vmatprep.subr.bf16.mxu0 0
    %980 = vmatpush1.bf16.msra.mxu0 %v914
    %981 = vmatprep.subr.bf16.mxu0 0
    %982 = vmatpush1.bf16.msra.mxu0 0
    %983 = vmatprep.subr.bf16.mxu0 0
    %984 = vmatpush1.bf16.msra.mxu0 0
    %985 = vmatprep.subr.bf16.mxu0 0
    %986 = vmatpush1.bf16.msra.mxu0 0
    %987 = vmatprep.subr.bf16.mxu0 0
    %988 = vmatpush1.bf16.msra.mxu0 0
    %989 = vmatprep.subr.bf16.mxu0 0
    %990 = vmatpush1.bf16.msra.mxu0 0
    %991 = vmatprep.subr.bf16.mxu0 0
    %992 = vmatpush1.bf16.msra.mxu0 0
    %993 = vmatprep.subr.bf16.mxu0 0
    %994 = vmatpush1.bf16.msra.mxu0 0
    %995 = vmatprep.subr.bf16.mxu0 0
    %996 = vmatpush1.bf16.msra.mxu0 0
    %997 = vmatprep.mubr.bf16.mxu0 0
    %998 = vmatmul.mubr.bf16.gmra.mrb[0].mxu0 %v852
    %v999 = vpop.f32.mrb[0].mxu0
    %v1000 = vadd.f32 %v874, %v999
    %v1001 = vpop.f32.mrb[0].mxu0
    %v1002 = vpop.f32.mrb[0].mxu0
    %v1003 = vpop.f32.mrb[0].mxu0
    %1004 = vdwg.mxu0
    %v1005 = vmax.f32 %v1000, 0.0
    %v1006 = vpack.c.bf16 %v1005, %v1005
    %s1007 = scalar_lea.vmem [#allocation2], 384
    %v1008 = vld [vmem:[%s1007] sm:$0xf]
    %v1009 = vld [vmem:[%s1007 + $0x4] sm:$0xf]
    %v1010 = vld [vmem:[%s1007 + $0x8] sm:$0xf]
    %v1011 = vld [vmem:[%s1007 + $0xc] sm:$0xf]
    %v1012 = vld [vmem:[%s1007 + $0x10] sm:$0xf]
    %v1013 = vld [vmem:[%s1007 + $0x14] sm:$0xf]
    %v1014 = vld [vmem:[%s1007 + $0x18] sm:$0xf]
    %v1015 = vld [vmem:[%s1007 + $0x1c] sm:$0xf]
    %v1016 = vld [vmem:[%s1007 + $0x20] sm:$0xf]
    %v1017 = vld [vmem:[%s1007 + $0x24] sm:$0xf]
    %v1018 = vld [vmem:[%s1007 + $0x28] sm:$0xf]
    %v1019 = vld [vmem:[%s1007 + $0x2c] sm:$0xf]
    %v1020 = vld [vmem:[%s1007 + $0x30] sm:$0xf]
    %v1021 = vld [vmem:[%s1007 + $0x34] sm:$0xf]
    %v1022 = vld [vmem:[%s1007 + $0x38] sm:$0xf]
    %v1023 = vld [vmem:[%s1007 + $0x3c] sm:$0xf]
    %v1024 = vld [vmem:[%s3 + $0x7] sm:$0x1]
    %v1025 = vlaneseq
    %v1026 = vshrl.u32 %v1025, 7
    %v1027 = vsub.s32 0, %v1026
    %v1028 = vrot.slane %v1024, %v1027
    %v1045 = vunpack.c.l.b16 %v1008
    %v1046 = vunpack.c.l.b16 %v1009
    %v1047 = vunpack.c.l.b16 %v1010
    %v1048 = vunpack.c.l.b16 %v1011
    %v1049 = vunpack.c.l.b16 %v1012
    %v1050 = vunpack.c.l.b16 %v1013
    %v1051 = vunpack.c.l.b16 %v1014
    %v1052 = vunpack.c.l.b16 %v1015
    %v1053 = vunpack.c.l.b16 %v1016
    %v1054 = vunpack.c.l.b16 %v1017
    %v1055 = vunpack.c.l.b16 %v1018
    %v1056 = vunpack.c.l.b16 %v1019
    %v1057 = vunpack.c.l.b16 %v1020
    %v1058 = vunpack.c.l.b16 %v1021
    %v1059 = vunpack.c.l.b16 %v1022
    %v1060 = vunpack.c.l.b16 %v1023
    %v1061 = vpack.c.b16 %v1046, %v1045
    %v1062 = vpack.c.b16 %v1048, %v1047
    %v1063 = vpack.c.b16 %v1050, %v1049
    %v1064 = vpack.c.b16 %v1052, %v1051
    %v1065 = vpack.c.b16 %v1054, %v1053
    %v1066 = vpack.c.b16 %v1056, %v1055
    %v1067 = vpack.c.b16 %v1058, %v1057
    %v1068 = vpack.c.b16 %v1060, %v1059
    %1077 = vmatprep.subr.bf16.mxu0 0
    %1078 = vmatpush1.bf16.msra.mxu0 %v1061
    %1079 = vmatprep.subr.bf16.mxu0 0
    %1080 = vmatpush1.bf16.msra.mxu0 %v1062
    %1081 = vmatprep.subr.bf16.mxu0 0
    %1082 = vmatpush1.bf16.msra.mxu0 %v1063
    %1083 = vmatprep.subr.bf16.mxu0 0
    %1084 = vmatpush1.bf16.msra.mxu0 %v1064
    %1085 = vmatprep.subr.bf16.mxu0 0
    %1086 = vmatpush1.bf16.msra.mxu0 %v1065
    %1087 = vmatprep.subr.bf16.mxu0 0
    %1088 = vmatpush1.bf16.msra.mxu0 %v1066
    %1089 = vmatprep.subr.bf16.mxu0 0
    %1090 = vmatpush1.bf16.msra.mxu0 %v1067
    %1091 = vmatprep.subr.bf16.mxu0 0
    %1092 = vmatpush1.bf16.msra.mxu0 %v1068
    %1093 = vmatprep.subr.bf16.mxu0 0
    %1094 = vmatpush1.bf16.msra.mxu0 0
    %1095 = vmatprep.subr.bf16.mxu0 0
    %1096 = vmatpush1.bf16.msra.mxu0 0
    %1097 = vmatprep.subr.bf16.mxu0 0
    %1098 = vmatpush1.bf16.msra.mxu0 0
    %1099 = vmatprep.subr.bf16.mxu0 0
    %1100 = vmatpush1.bf16.msra.mxu0 0
    %1101 = vmatprep.subr.bf16.mxu0 0
    %1102 = vmatpush1.bf16.msra.mxu0 0
    %1103 = vmatprep.subr.bf16.mxu0 0
    %1104 = vmatpush1.bf16.msra.mxu0 0
    %1105 = vmatprep.subr.bf16.mxu0 0
    %1106 = vmatpush1.bf16.msra.mxu0 0
    %1107 = vmatprep.subr.bf16.mxu0 0
    %1108 = vmatpush1.bf16.msra.mxu0 0
    %1109 = vmatprep.mubr.bf16.mxu0 0
    %1110 = vmatmul.mubr.bf16.gmra.mrb[0].mxu0 %v964
    %v1111 = vpop.f32.mrb[0].mxu0
    %v1112 = vadd.f32 %v1028, %v1111
    %v1113 = vpop.f32.mrb[0].mxu0
    %v1114 = vpop.f32.mrb[0].mxu0
    %v1115 = vpop.f32.mrb[0].mxu0
    %1116 = vdwg.mxu0
    %v1117 = vmax.f32 %v1112, 0.0
    %v1118 = vpack.c.bf16 %v1117, %v1117
    %1119 = vmatprep.subr.bf16.mxu0 0
    %1120 = vmatpush1.bf16.msra.mxu0 %v1061
    %1121 = vmatprep.subr.bf16.mxu0 0
    %1122 = vmatpush1.bf16.msra.mxu0 %v1062
    %1123 = vmatprep.subr.bf16.mxu0 0
    %1124 = vmatpush1.bf16.msra.mxu0 %v1063
    %1125 = vmatprep.subr.bf16.mxu0 0
    %1126 = vmatpush1.bf16.msra.mxu0 %v1064
    %1127 = vmatprep.subr.bf16.mxu0 0
    %1128 = vmatpush1.bf16.msra.mxu0 %v1065
    %1129 = vmatprep.subr.bf16.mxu0 0
    %1130 = vmatpush1.bf16.msra.mxu0 %v1066
    %1131 = vmatprep.subr.bf16.mxu0 0
    %1132 = vmatpush1.bf16.msra.mxu0 %v1067
    %1133 = vmatprep.subr.bf16.mxu0 0
    %1134 = vmatpush1.bf16.msra.mxu0 %v1068
    %1135 = vmatprep.subr.bf16.mxu0 0
    %1136 = vmatpush1.bf16.msra.mxu0 0
    %1137 = vmatprep.subr.bf16.mxu0 0
    %1138 = vmatpush1.bf16.msra.mxu0 0
    %1139 = vmatprep.subr.bf16.mxu0 0
    %1140 = vmatpush1.bf16.msra.mxu0 0
    %1141 = vmatprep.subr.bf16.mxu0 0
    %1142 = vmatpush1.bf16.msra.mxu0 0
    %1143 = vmatprep.subr.bf16.mxu0 0
    %1144 = vmatpush1.bf16.msra.mxu0 0
    %1145 = vmatprep.subr.bf16.mxu0 0
    %1146 = vmatpush1.bf16.msra.mxu0 0
    %1147 = vmatprep.subr.bf16.mxu0 0
    %1148 = vmatpush1.bf16.msra.mxu0 0
    %1149 = vmatprep.subr.bf16.mxu0 0
    %1150 = vmatpush1.bf16.msra.mxu0 0
    %1151 = vmatprep.mubr.bf16.mxu0 0
    %1152 = vmatmul.mubr.bf16.gmra.mrb[0].mxu0 %v1006
    %v1153 = vpop.f32.mrb[0].mxu0
    %v1154 = vadd.f32 %v1028, %v1153
    %v1155 = vpop.f32.mrb[0].mxu0
    %v1156 = vpop.f32.mrb[0].mxu0
    %v1157 = vpop.f32.mrb[0].mxu0
    %1158 = vdwg.mxu0
    %v1159 = vmax.f32 %v1154, 0.0
    %v1160 = vpack.c.bf16 %v1159, %v1159
    %s1161 = scalar_lea.vmem [#allocation2], 448
    %v1162 = vld [vmem:[%s1161] sm:$0xf]
    %v1163 = vld [vmem:[%s1161 + $0x4] sm:$0xf]
    %v1164 = vld [vmem:[%s1161 + $0x8] sm:$0xf]
    %v1165 = vld [vmem:[%s1161 + $0xc] sm:$0xf]
    %v1166 = vld [vmem:[%s1161 + $0x10] sm:$0xf]
    %v1167 = vld [vmem:[%s1161 + $0x14] sm:$0xf]
    %v1168 = vld [vmem:[%s1161 + $0x18] sm:$0xf]
    %v1169 = vld [vmem:[%s1161 + $0x1c] sm:$0xf]
    %v1170 = vld [vmem:[%s1161 + $0x20] sm:$0xf]
    %v1171 = vld [vmem:[%s1161 + $0x24] sm:$0xf]
    %v1172 = vld [vmem:[%s1161 + $0x28] sm:$0xf]
    %v1173 = vld [vmem:[%s1161 + $0x2c] sm:$0xf]
    %v1174 = vld [vmem:[%s1161 + $0x30] sm:$0xf]
    %v1175 = vld [vmem:[%s1161 + $0x34] sm:$0xf]
    %v1176 = vld [vmem:[%s1161 + $0x38] sm:$0xf]
    %v1177 = vld [vmem:[%s1161 + $0x3c] sm:$0xf]
    %v1178 = vld [vmem:[%s3 + $0x8] sm:$0x1]
    %v1179 = vlaneseq
    %v1180 = vshrl.u32 %v1179, 7
    %v1181 = vsub.s32 0, %v1180
    %v1182 = vrot.slane %v1178, %v1181
    %v1199 = vunpack.c.l.b16 %v1162
    %v1200 = vunpack.c.l.b16 %v1163
    %v1201 = vunpack.c.l.b16 %v1164
    %v1202 = vunpack.c.l.b16 %v1165
    %v1203 = vunpack.c.l.b16 %v1166
    %v1204 = vunpack.c.l.b16 %v1167
    %v1205 = vunpack.c.l.b16 %v1168
    %v1206 = vunpack.c.l.b16 %v1169
    %v1207 = vunpack.c.l.b16 %v1170
    %v1208 = vunpack.c.l.b16 %v1171
    %v1209 = vunpack.c.l.b16 %v1172
    %v1210 = vunpack.c.l.b16 %v1173
    %v1211 = vunpack.c.l.b16 %v1174
    %v1212 = vunpack.c.l.b16 %v1175
    %v1213 = vunpack.c.l.b16 %v1176
    %v1214 = vunpack.c.l.b16 %v1177
    %v1215 = vpack.c.b16 %v1200, %v1199
    %v1216 = vpack.c.b16 %v1202, %v1201
    %v1217 = vpack.c.b16 %v1204, %v1203
    %v1218 = vpack.c.b16 %v1206, %v1205
    %v1219 = vpack.c.b16 %v1208, %v1207
    %v1220 = vpack.c.b16 %v1210, %v1209
    %v1221 = vpack.c.b16 %v1212, %v1211
    %v1222 = vpack.c.b16 %v1214, %v1213
    %1231 = vmatprep.subr.bf16.mxu0 0
    %1232 = vmatpush1.bf16.msra.mxu0 %v1215
    %1233 = vmatprep.subr.bf16.mxu0 0
    %1234 = vmatpush1.bf16.msra.mxu0 %v1216
    %1235 = vmatprep.subr.bf16.mxu0 0
    %1236 = vmatpush1.bf16.msra.mxu0 %v1217
    %1237 = vmatprep.subr.bf16.mxu0 0
    %1238 = vmatpush1.bf16.msra.mxu0 %v1218
    %1239 = vmatprep.subr.bf16.mxu0 0
    %1240 = vmatpush1.bf16.msra.mxu0 %v1219
    %1241 = vmatprep.subr.bf16.mxu0 0
    %1242 = vmatpush1.bf16.msra.mxu0 %v1220
    %1243 = vmatprep.subr.bf16.mxu0 0
    %1244 = vmatpush1.bf16.msra.mxu0 %v1221
    %1245 = vmatprep.subr.bf16.mxu0 0
    %1246 = vmatpush1.bf16.msra.mxu0 %v1222
    %1247 = vmatprep.subr.bf16.mxu0 0
    %1248 = vmatpush1.bf16.msra.mxu0 0
    %1249 = vmatprep.subr.bf16.mxu0 0
    %1250 = vmatpush1.bf16.msra.mxu0 0
    %1251 = vmatprep.subr.bf16.mxu0 0
    %1252 = vmatpush1.bf16.msra.mxu0 0
    %1253 = vmatprep.subr.bf16.mxu0 0
    %1254 = vmatpush1.bf16.msra.mxu0 0
    %1255 = vmatprep.subr.bf16.mxu0 0
    %1256 = vmatpush1.bf16.msra.mxu0 0
    %1257 = vmatprep.subr.bf16.mxu0 0
    %1258 = vmatpush1.bf16.msra.mxu0 0
    %1259 = vmatprep.subr.bf16.mxu0 0
    %1260 = vmatpush1.bf16.msra.mxu0 0
    %1261 = vmatprep.subr.bf16.mxu0 0
    %1262 = vmatpush1.bf16.msra.mxu0 0
    %1263 = vmatprep.mubr.bf16.mxu0 0
    %1264 = vmatmul.mubr.bf16.gmra.mrb[0].mxu0 %v1118
    %v1265 = vpop.f32.mrb[0].mxu0
    %v1266 = vadd.f32 %v1182, %v1265
    %v1267 = vpop.f32.mrb[0].mxu0
    %v1268 = vpop.f32.mrb[0].mxu0
    %v1269 = vpop.f32.mrb[0].mxu0
    %1270 = vdwg.mxu0
    %v1271 = vmax.f32 %v1266, 0.0
    %v1272 = vpack.c.bf16 %v1271, %v1271
    %1273 = vmatprep.subr.bf16.mxu0 0
    %1274 = vmatpush1.bf16.msra.mxu0 %v1215
    %1275 = vmatprep.subr.bf16.mxu0 0
    %1276 = vmatpush1.bf16.msra.mxu0 %v1216
    %1277 = vmatprep.subr.bf16.mxu0 0
    %1278 = vmatpush1.bf16.msra.mxu0 %v1217
    %1279 = vmatprep.subr.bf16.mxu0 0
    %1280 = vmatpush1.bf16.msra.mxu0 %v1218
    %1281 = vmatprep.subr.bf16.mxu0 0
    %1282 = vmatpush1.bf16.msra.mxu0 %v1219
    %1283 = vmatprep.subr.bf16.mxu0 0
    %1284 = vmatpush1.bf16.msra.mxu0 %v1220
    %1285 = vmatprep.subr.bf16.mxu0 0
    %1286 = vmatpush1.bf16.msra.mxu0 %v1221
    %1287 = vmatprep.subr.bf16.mxu0 0
    %1288 = vmatpush1.bf16.msra.mxu0 %v1222
    %1289 = vmatprep.subr.bf16.mxu0 0
    %1290 = vmatpush1.bf16.msra.mxu0 0
    %1291 = vmatprep.subr.bf16.mxu0 0
    %1292 = vmatpush1.bf16.msra.mxu0 0
    %1293 = vmatprep.subr.bf16.mxu0 0
    %1294 = vmatpush1.bf16.msra.mxu0 0
    %1295 = vmatprep.subr.bf16.mxu0 0
    %1296 = vmatpush1.bf16.msra.mxu0 0
    %1297 = vmatprep.subr.bf16.mxu0 0
    %1298 = vmatpush1.bf16.msra.mxu0 0
    %1299 = vmatprep.subr.bf16.mxu0 0
    %1300 = vmatpush1.bf16.msra.mxu0 0
    %1301 = vmatprep.subr.bf16.mxu0 0
    %1302 = vmatpush1.bf16.msra.mxu0 0
    %1303 = vmatprep.subr.bf16.mxu0 0
    %1304 = vmatpush1.bf16.msra.mxu0 0
    %1305 = vmatprep.mubr.bf16.mxu0 0
    %1306 = vmatmul.mubr.bf16.gmra.mrb[0].mxu0 %v1160
    %v1307 = vpop.f32.mrb[0].mxu0
    %v1308 = vadd.f32 %v1182, %v1307
    %v1309 = vpop.f32.mrb[0].mxu0
    %v1310 = vpop.f32.mrb[0].mxu0
    %v1311 = vpop.f32.mrb[0].mxu0
    %1312 = vdwg.mxu0
    %v1313 = vmax.f32 %v1308, 0.0
    %v1314 = vpack.c.bf16 %v1313, %v1313
    %s1315 = scalar_lea.vmem [#allocation2], 512
    %v1316 = vld [vmem:[%s1315] sm:$0xf]
    %v1317 = vld [vmem:[%s1315 + $0x4] sm:$0xf]
    %v1318 = vld [vmem:[%s1315 + $0x8] sm:$0xf]
    %v1319 = vld [vmem:[%s1315 + $0xc] sm:$0xf]
    %v1320 = vld [vmem:[%s1315 + $0x10] sm:$0xf]
    %v1321 = vld [vmem:[%s1315 + $0x14] sm:$0xf]
    %v1322 = vld [vmem:[%s1315 + $0x18] sm:$0xf]
    %v1323 = vld [vmem:[%s1315 + $0x1c] sm:$0xf]
    %v1324 = vld [vmem:[%s1315 + $0x20] sm:$0xf]
    %v1325 = vld [vmem:[%s1315 + $0x24] sm:$0xf]
    %v1326 = vld [vmem:[%s1315 + $0x28] sm:$0xf]
    %v1327 = vld [vmem:[%s1315 + $0x2c] sm:$0xf]
    %v1328 = vld [vmem:[%s1315 + $0x30] sm:$0xf]
    %v1329 = vld [vmem:[%s1315 + $0x34] sm:$0xf]
    %v1330 = vld [vmem:[%s1315 + $0x38] sm:$0xf]
    %v1331 = vld [vmem:[%s1315 + $0x3c] sm:$0xf]
    %v1332 = vld [vmem:[%s3 + $0x9] sm:$0x1]
    %v1333 = vlaneseq
    %v1334 = vshrl.u32 %v1333, 7
    %v1335 = vsub.s32 0, %v1334
    %v1336 = vrot.slane %v1332, %v1335
    %v1353 = vunpack.c.l.b16 %v1316
    %v1354 = vunpack.c.l.b16 %v1317
    %v1355 = vunpack.c.l.b16 %v1318
    %v1356 = vunpack.c.l.b16 %v1319
    %v1357 = vunpack.c.l.b16 %v1320
    %v1358 = vunpack.c.l.b16 %v1321
    %v1359 = vunpack.c.l.b16 %v1322
    %v1360 = vunpack.c.l.b16 %v1323
    %v1361 = vunpack.c.l.b16 %v1324
    %v1362 = vunpack.c.l.b16 %v1325
    %v1363 = vunpack.c.l.b16 %v1326
    %v1364 = vunpack.c.l.b16 %v1327
    %v1365 = vunpack.c.l.b16 %v1328
    %v1366 = vunpack.c.l.b16 %v1329
    %v1367 = vunpack.c.l.b16 %v1330
    %v1368 = vunpack.c.l.b16 %v1331
    %v1369 = vpack.c.b16 %v1354, %v1353
    %v1370 = vpack.c.b16 %v1356, %v1355
    %v1371 = vpack.c.b16 %v1358, %v1357
    %v1372 = vpack.c.b16 %v1360, %v1359
    %v1373 = vpack.c.b16 %v1362, %v1361
    %v1374 = vpack.c.b16 %v1364, %v1363
    %v1375 = vpack.c.b16 %v1366, %v1365
    %v1376 = vpack.c.b16 %v1368, %v1367
    %1385 = vmatprep.subr.bf16.mxu0 0
    %1386 = vmatpush1.bf16.msra.mxu0 %v1369
    %1387 = vmatprep.subr.bf16.mxu0 0
    %1388 = vmatpush1.bf16.msra.mxu0 %v1370
    %1389 = vmatprep.subr.bf16.mxu0 0
    %1390 = vmatpush1.bf16.msra.mxu0 %v1371
    %1391 = vmatprep.subr.bf16.mxu0 0
    %1392 = vmatpush1.bf16.msra.mxu0 %v1372
    %1393 = vmatprep.subr.bf16.mxu0 0
    %1394 = vmatpush1.bf16.msra.mxu0 %v1373
    %1395 = vmatprep.subr.bf16.mxu0 0
    %1396 = vmatpush1.bf16.msra.mxu0 %v1374
    %1397 = vmatprep.subr.bf16.mxu0 0
    %1398 = vmatpush1.bf16.msra.mxu0 %v1375
    %1399 = vmatprep.subr.bf16.mxu0 0
    %1400 = vmatpush1.bf16.msra.mxu0 %v1376
    %1401 = vmatprep.subr.bf16.mxu0 0
    %1402 = vmatpush1.bf16.msra.mxu0 0
    %1403 = vmatprep.subr.bf16.mxu0 0
    %1404 = vmatpush1.bf16.msra.mxu0 0
    %1405 = vmatprep.subr.bf16.mxu0 0
    %1406 = vmatpush1.bf16.msra.mxu0 0
    %1407 = vmatprep.subr.bf16.mxu0 0
    %1408 = vmatpush1.bf16.msra.mxu0 0
    %1409 = vmatprep.subr.bf16.mxu0 0
    %1410 = vmatpush1.bf16.msra.mxu0 0
    %1411 = vmatprep.subr.bf16.mxu0 0
    %1412 = vmatpush1.bf16.msra.mxu0 0
    %1413 = vmatprep.subr.bf16.mxu0 0
    %1414 = vmatpush1.bf16.msra.mxu0 0
    %1415 = vmatprep.subr.bf16.mxu0 0
    %1416 = vmatpush1.bf16.msra.mxu0 0
    %1417 = vmatprep.mubr.bf16.mxu0 0
    %1418 = vmatmul.mubr.bf16.gmra.mrb[0].mxu0 %v1272
    %v1419 = vpop.f32.mrb[0].mxu0
    %v1420 = vadd.f32 %v1336, %v1419
    %v1421 = vpop.f32.mrb[0].mxu0
    %v1422 = vpop.f32.mrb[0].mxu0
    %v1423 = vpop.f32.mrb[0].mxu0
    %1424 = vdwg.mxu0
    %v1425 = vmax.f32 %v1420, 0.0
    %v1426 = vpack.c.bf16 %v1425, %v1425
    %1427 = vmatprep.subr.bf16.mxu0 0
    %1428 = vmatpush1.bf16.msra.mxu0 %v1369
    %1429 = vmatprep.subr.bf16.mxu0 0
    %1430 = vmatpush1.bf16.msra.mxu0 %v1370
    %1431 = vmatprep.subr.bf16.mxu0 0
    %1432 = vmatpush1.bf16.msra.mxu0 %v1371
    %1433 = vmatprep.subr.bf16.mxu0 0
    %1434 = vmatpush1.bf16.msra.mxu0 %v1372
    %1435 = vmatprep.subr.bf16.mxu0 0
    %1436 = vmatpush1.bf16.msra.mxu0 %v1373
    %1437 = vmatprep.subr.bf16.mxu0 0
    %1438 = vmatpush1.bf16.msra.mxu0 %v1374
    %1439 = vmatprep.subr.bf16.mxu0 0
    %1440 = vmatpush1.bf16.msra.mxu0 %v1375
    %1441 = vmatprep.subr.bf16.mxu0 0
    %1442 = vmatpush1.bf16.msra.mxu0 %v1376
    %1443 = vmatprep.subr.bf16.mxu0 0
    %1444 = vmatpush1.bf16.msra.mxu0 0
    %1445 = vmatprep.subr.bf16.mxu0 0
    %1446 = vmatpush1.bf16.msra.mxu0 0
    %1447 = vmatprep.subr.bf16.mxu0 0
    %1448 = vmatpush1.bf16.msra.mxu0 0
    %1449 = vmatprep.subr.bf16.mxu0 0
    %1450 = vmatpush1.bf16.msra.mxu0 0
    %1451 = vmatprep.subr.bf16.mxu0 0
    %1452 = vmatpush1.bf16.msra.mxu0 0
    %1453 = vmatprep.subr.bf16.mxu0 0
    %1454 = vmatpush1.bf16.msra.mxu0 0
    %1455 = vmatprep.subr.bf16.mxu0 0
    %1456 = vmatpush1.bf16.msra.mxu0 0
    %1457 = vmatprep.subr.bf16.mxu0 0
    %1458 = vmatpush1.bf16.msra.mxu0 0
    %1459 = vmatprep.mubr.bf16.mxu0 0
    %1460 = vmatmul.mubr.bf16.gmra.mrb[0].mxu0 %v1314
    %v1461 = vpop.f32.mrb[0].mxu0
    %v1462 = vadd.f32 %v1336, %v1461
    %v1463 = vpop.f32.mrb[0].mxu0
    %v1464 = vpop.f32.mrb[0].mxu0
    %v1465 = vpop.f32.mrb[0].mxu0
    %1466 = vdwg.mxu0
    %v1467 = vmax.f32 %v1462, 0.0
    %v1468 = vpack.c.bf16 %v1467, %v1467
    %s1469 = scalar_lea.vmem [#allocation2], 576
    %v1470 = vld [vmem:[%s1469] sm:$0xf]
    %v1471 = vld [vmem:[%s1469 + $0x4] sm:$0xf]
    %v1472 = vld [vmem:[%s1469 + $0x8] sm:$0xf]
    %v1473 = vld [vmem:[%s1469 + $0xc] sm:$0xf]
    %v1474 = vld [vmem:[%s1469 + $0x10] sm:$0xf]
    %v1475 = vld [vmem:[%s1469 + $0x14] sm:$0xf]
    %v1476 = vld [vmem:[%s1469 + $0x18] sm:$0xf]
    %v1477 = vld [vmem:[%s1469 + $0x1c] sm:$0xf]
    %v1478 = vld [vmem:[%s1469 + $0x20] sm:$0xf]
    %v1479 = vld [vmem:[%s1469 + $0x24] sm:$0xf]
    %v1480 = vld [vmem:[%s1469 + $0x28] sm:$0xf]
    %v1481 = vld [vmem:[%s1469 + $0x2c] sm:$0xf]
    %v1482 = vld [vmem:[%s1469 + $0x30] sm:$0xf]
    %v1483 = vld [vmem:[%s1469 + $0x34] sm:$0xf]
    %v1484 = vld [vmem:[%s1469 + $0x38] sm:$0xf]
    %v1485 = vld [vmem:[%s1469 + $0x3c] sm:$0xf]
    %v1486 = vld [vmem:[%s3 + $0xa] sm:$0x1]
    %v1487 = vlaneseq
    %v1488 = vshrl.u32 %v1487, 7
    %v1489 = vsub.s32 0, %v1488
    %v1490 = vrot.slane %v1486, %v1489
    %v1507 = vunpack.c.l.b16 %v1470
    %v1508 = vunpack.c.l.b16 %v1471
    %v1509 = vunpack.c.l.b16 %v1472
    %v1510 = vunpack.c.l.b16 %v1473
    %v1511 = vunpack.c.l.b16 %v1474
    %v1512 = vunpack.c.l.b16 %v1475
    %v1513 = vunpack.c.l.b16 %v1476
    %v1514 = vunpack.c.l.b16 %v1477
    %v1515 = vunpack.c.l.b16 %v1478
    %v1516 = vunpack.c.l.b16 %v1479
    %v1517 = vunpack.c.l.b16 %v1480
    %v1518 = vunpack.c.l.b16 %v1481
    %v1519 = vunpack.c.l.b16 %v1482
    %v1520 = vunpack.c.l.b16 %v1483
    %v1521 = vunpack.c.l.b16 %v1484
    %v1522 = vunpack.c.l.b16 %v1485
    %v1523 = vpack.c.b16 %v1508, %v1507
    %v1524 = vpack.c.b16 %v1510, %v1509
    %v1525 = vpack.c.b16 %v1512, %v1511
    %v1526 = vpack.c.b16 %v1514, %v1513
    %v1527 = vpack.c.b16 %v1516, %v1515
    %v1528 = vpack.c.b16 %v1518, %v1517
    %v1529 = vpack.c.b16 %v1520, %v1519
    %v1530 = vpack.c.b16 %v1522, %v1521
    %1539 = vmatprep.subr.bf16.mxu0 0
    %1540 = vmatpush1.bf16.msra.mxu0 %v1523
    %1541 = vmatprep.subr.bf16.mxu0 0
    %1542 = vmatpush1.bf16.msra.mxu0 %v1524
    %1543 = vmatprep.subr.bf16.mxu0 0
    %1544 = vmatpush1.bf16.msra.mxu0 %v1525
    %1545 = vmatprep.subr.bf16.mxu0 0
    %1546 = vmatpush1.bf16.msra.mxu0 %v1526
    %1547 = vmatprep.subr.bf16.mxu0 0
    %1548 = vmatpush1.bf16.msra.mxu0 %v1527
    %1549 = vmatprep.subr.bf16.mxu0 0
    %1550 = vmatpush1.bf16.msra.mxu0 %v1528
    %1551 = vmatprep.subr.bf16.mxu0 0
    %1552 = vmatpush1.bf16.msra.mxu0 %v1529
    %1553 = vmatprep.subr.bf16.mxu0 0
    %1554 = vmatpush1.bf16.msra.mxu0 %v1530
    %1555 = vmatprep.subr.bf16.mxu0 0
    %1556 = vmatpush1.bf16.msra.mxu0 0
    %1557 = vmatprep.subr.bf16.mxu0 0
    %1558 = vmatpush1.bf16.msra.mxu0 0
    %1559 = vmatprep.subr.bf16.mxu0 0
    %1560 = vmatpush1.bf16.msra.mxu0 0
    %1561 = vmatprep.subr.bf16.mxu0 0
    %1562 = vmatpush1.bf16.msra.mxu0 0
    %1563 = vmatprep.subr.bf16.mxu0 0
    %1564 = vmatpush1.bf16.msra.mxu0 0
    %1565 = vmatprep.subr.bf16.mxu0 0
    %1566 = vmatpush1.bf16.msra.mxu0 0
    %1567 = vmatprep.subr.bf16.mxu0 0
    %1568 = vmatpush1.bf16.msra.mxu0 0
    %1569 = vmatprep.subr.bf16.mxu0 0
    %1570 = vmatpush1.bf16.msra.mxu0 0
    %1571 = vmatprep.mubr.bf16.mxu0 0
    %1572 = vmatmul.mubr.bf16.gmra.mrb[0].mxu0 %v1426
    %v1573 = vpop.f32.mrb[0].mxu0
    %v1574 = vadd.f32 %v1490, %v1573
    %v1575 = vpop.f32.mrb[0].mxu0
    %v1576 = vpop.f32.mrb[0].mxu0
    %v1577 = vpop.f32.mrb[0].mxu0
    %1578 = vdwg.mxu0
    %v1579 = vmax.f32 %v1574, 0.0
    %v1580 = vpack.c.bf16 %v1579, %v1579
    %1581 = vmatprep.subr.bf16.mxu0 0
    %1582 = vmatpush1.bf16.msra.mxu0 %v1523
    %1583 = vmatprep.subr.bf16.mxu0 0
    %1584 = vmatpush1.bf16.msra.mxu0 %v1524
    %1585 = vmatprep.subr.bf16.mxu0 0
    %1586 = vmatpush1.bf16.msra.mxu0 %v1525
    %1587 = vmatprep.subr.bf16.mxu0 0
    %1588 = vmatpush1.bf16.msra.mxu0 %v1526
    %1589 = vmatprep.subr.bf16.mxu0 0
    %1590 = vmatpush1.bf16.msra.mxu0 %v1527
    %1591 = vmatprep.subr.bf16.mxu0 0
    %1592 = vmatpush1.bf16.msra.mxu0 %v1528
    %1593 = vmatprep.subr.bf16.mxu0 0
    %1594 = vmatpush1.bf16.msra.mxu0 %v1529
    %1595 = vmatprep.subr.bf16.mxu0 0
    %1596 = vmatpush1.bf16.msra.mxu0 %v1530
    %1597 = vmatprep.subr.bf16.mxu0 0
    %1598 = vmatpush1.bf16.msra.mxu0 0
    %1599 = vmatprep.subr.bf16.mxu0 0
    %1600 = vmatpush1.bf16.msra.mxu0 0
    %1601 = vmatprep.subr.bf16.mxu0 0
    %1602 = vmatpush1.bf16.msra.mxu0 0
    %1603 = vmatprep.subr.bf16.mxu0 0
    %1604 = vmatpush1.bf16.msra.mxu0 0
    %1605 = vmatprep.subr.bf16.mxu0 0
    %1606 = vmatpush1.bf16.msra.mxu0 0
    %1607 = vmatprep.subr.bf16.mxu0 0
    %1608 = vmatpush1.bf16.msra.mxu0 0
    %1609 = vmatprep.subr.bf16.mxu0 0
    %1610 = vmatpush1.bf16.msra.mxu0 0
    %1611 = vmatprep.subr.bf16.mxu0 0
    %1612 = vmatpush1.bf16.msra.mxu0 0
    %1613 = vmatprep.mubr.bf16.mxu0 0
    %1614 = vmatmul.mubr.bf16.gmra.mrb[0].mxu0 %v1468
    %v1615 = vpop.f32.mrb[0].mxu0
    %v1616 = vadd.f32 %v1490, %v1615
    %v1617 = vpop.f32.mrb[0].mxu0
    %v1618 = vpop.f32.mrb[0].mxu0
    %v1619 = vpop.f32.mrb[0].mxu0
    %1620 = vdwg.mxu0
    %v1621 = vmax.f32 %v1616, 0.0
    %v1622 = vpack.c.bf16 %v1621, %v1621
    %s1623 = scalar_lea.vmem [#allocation2], 640
    %v1624 = vld [vmem:[%s1623] sm:$0xf]
    %v1625 = vld [vmem:[%s1623 + $0x4] sm:$0xf]
    %v1626 = vld [vmem:[%s1623 + $0x8] sm:$0xf]
    %v1627 = vld [vmem:[%s1623 + $0xc] sm:$0xf]
    %v1628 = vld [vmem:[%s1623 + $0x10] sm:$0xf]
    %v1629 = vld [vmem:[%s1623 + $0x14] sm:$0xf]
    %v1630 = vld [vmem:[%s1623 + $0x18] sm:$0xf]
    %v1631 = vld [vmem:[%s1623 + $0x1c] sm:$0xf]
    %v1632 = vld [vmem:[%s1623 + $0x20] sm:$0xf]
    %v1633 = vld [vmem:[%s1623 + $0x24] sm:$0xf]
    %v1634 = vld [vmem:[%s1623 + $0x28] sm:$0xf]
    %v1635 = vld [vmem:[%s1623 + $0x2c] sm:$0xf]
    %v1636 = vld [vmem:[%s1623 + $0x30] sm:$0xf]
    %v1637 = vld [vmem:[%s1623 + $0x34] sm:$0xf]
    %v1638 = vld [vmem:[%s1623 + $0x38] sm:$0xf]
    %v1639 = vld [vmem:[%s1623 + $0x3c] sm:$0xf]
    %v1640 = vld [vmem:[%s3 + $0xb] sm:$0x1]
    %v1641 = vlaneseq
    %v1642 = vshrl.u32 %v1641, 7
    %v1643 = vsub.s32 0, %v1642
    %v1644 = vrot.slane %v1640, %v1643
    %v1661 = vunpack.c.l.b16 %v1624
    %v1662 = vunpack.c.l.b16 %v1625
    %v1663 = vunpack.c.l.b16 %v1626
    %v1664 = vunpack.c.l.b16 %v1627
    %v1665 = vunpack.c.l.b16 %v1628
    %v1666 = vunpack.c.l.b16 %v1629
    %v1667 = vunpack.c.l.b16 %v1630
    %v1668 = vunpack.c.l.b16 %v1631
    %v1669 = vunpack.c.l.b16 %v1632
    %v1670 = vunpack.c.l.b16 %v1633
    %v1671 = vunpack.c.l.b16 %v1634
    %v1672 = vunpack.c.l.b16 %v1635
    %v1673 = vunpack.c.l.b16 %v1636
    %v1674 = vunpack.c.l.b16 %v1637
    %v1675 = vunpack.c.l.b16 %v1638
    %v1676 = vunpack.c.l.b16 %v1639
    %v1677 = vpack.c.b16 %v1662, %v1661
    %v1678 = vpack.c.b16 %v1664, %v1663
    %v1679 = vpack.c.b16 %v1666, %v1665
    %v1680 = vpack.c.b16 %v1668, %v1667
    %v1681 = vpack.c.b16 %v1670, %v1669
    %v1682 = vpack.c.b16 %v1672, %v1671
    %v1683 = vpack.c.b16 %v1674, %v1673
    %v1684 = vpack.c.b16 %v1676, %v1675
    %1693 = vmatprep.subr.bf16.mxu0 0
    %1694 = vmatpush1.bf16.msra.mxu0 %v1677
    %1695 = vmatprep.subr.bf16.mxu0 0
    %1696 = vmatpush1.bf16.msra.mxu0 %v1678
    %1697 = vmatprep.subr.bf16.mxu0 0
    %1698 = vmatpush1.bf16.msra.mxu0 %v1679
    %1699 = vmatprep.subr.bf16.mxu0 0
    %1700 = vmatpush1.bf16.msra.mxu0 %v1680
    %1701 = vmatprep.subr.bf16.mxu0 0
    %1702 = vmatpush1.bf16.msra.mxu0 %v1681
    %1703 = vmatprep.subr.bf16.mxu0 0
    %1704 = vmatpush1.bf16.msra.mxu0 %v1682
    %1705 = vmatprep.subr.bf16.mxu0 0
    %1706 = vmatpush1.bf16.msra.mxu0 %v1683
    %1707 = vmatprep.subr.bf16.mxu0 0
    %1708 = vmatpush1.bf16.msra.mxu0 %v1684
    %1709 = vmatprep.subr.bf16.mxu0 0
    %1710 = vmatpush1.bf16.msra.mxu0 0
    %1711 = vmatprep.subr.bf16.mxu0 0
    %1712 = vmatpush1.bf16.msra.mxu0 0
    %1713 = vmatprep.subr.bf16.mxu0 0
    %1714 = vmatpush1.bf16.msra.mxu0 0
    %1715 = vmatprep.subr.bf16.mxu0 0
    %1716 = vmatpush1.bf16.msra.mxu0 0
    %1717 = vmatprep.subr.bf16.mxu0 0
    %1718 = vmatpush1.bf16.msra.mxu0 0
    %1719 = vmatprep.subr.bf16.mxu0 0
    %1720 = vmatpush1.bf16.msra.mxu0 0
    %1721 = vmatprep.subr.bf16.mxu0 0
    %1722 = vmatpush1.bf16.msra.mxu0 0
    %1723 = vmatprep.subr.bf16.mxu0 0
    %1724 = vmatpush1.bf16.msra.mxu0 0
    %1725 = vmatprep.mubr.bf16.mxu0 0
    %1726 = vmatmul.mubr.bf16.gmra.mrb[0].mxu0 %v1580
    %v1727 = vpop.f32.mrb[0].mxu0
    %v1728 = vadd.f32 %v1644, %v1727
    %v1729 = vpop.f32.mrb[0].mxu0
    %v1730 = vpop.f32.mrb[0].mxu0
    %v1731 = vpop.f32.mrb[0].mxu0
    %1732 = vdwg.mxu0
    %v1733 = vmax.f32 %v1728, 0.0
    %v1734 = vpack.c.bf16 %v1733, %v1733
    %1735 = vmatprep.subr.bf16.mxu0 0
    %1736 = vmatpush1.bf16.msra.mxu0 %v1677
    %1737 = vmatprep.subr.bf16.mxu0 0
    %1738 = vmatpush1.bf16.msra.mxu0 %v1678
    %1739 = vmatprep.subr.bf16.mxu0 0
    %1740 = vmatpush1.bf16.msra.mxu0 %v1679
    %1741 = vmatprep.subr.bf16.mxu0 0
    %1742 = vmatpush1.bf16.msra.mxu0 %v1680
    %1743 = vmatprep.subr.bf16.mxu0 0
    %1744 = vmatpush1.bf16.msra.mxu0 %v1681
    %1745 = vmatprep.subr.bf16.mxu0 0
    %1746 = vmatpush1.bf16.msra.mxu0 %v1682
    %1747 = vmatprep.subr.bf16.mxu0 0
    %1748 = vmatpush1.bf16.msra.mxu0 %v1683
    %1749 = vmatprep.subr.bf16.mxu0 0
    %1750 = vmatpush1.bf16.msra.mxu0 %v1684
    %1751 = vmatprep.subr.bf16.mxu0 0
    %1752 = vmatpush1.bf16.msra.mxu0 0
    %1753 = vmatprep.subr.bf16.mxu0 0
    %1754 = vmatpush1.bf16.msra.mxu0 0
    %1755 = vmatprep.subr.bf16.mxu0 0
    %1756 = vmatpush1.bf16.msra.mxu0 0
    %1757 = vmatprep.subr.bf16.mxu0 0
    %1758 = vmatpush1.bf16.msra.mxu0 0
    %1759 = vmatprep.subr.bf16.mxu0 0
    %1760 = vmatpush1.bf16.msra.mxu0 0
    %1761 = vmatprep.subr.bf16.mxu0 0
    %1762 = vmatpush1.bf16.msra.mxu0 0
    %1763 = vmatprep.subr.bf16.mxu0 0
    %1764 = vmatpush1.bf16.msra.mxu0 0
    %1765 = vmatprep.subr.bf16.mxu0 0
    %1766 = vmatpush1.bf16.msra.mxu0 0
    %1767 = vmatprep.mubr.bf16.mxu0 0
    %1768 = vmatmul.mubr.bf16.gmra.mrb[0].mxu0 %v1622
    %v1769 = vpop.f32.mrb[0].mxu0
    %v1770 = vadd.f32 %v1644, %v1769
    %v1771 = vpop.f32.mrb[0].mxu0
    %v1772 = vpop.f32.mrb[0].mxu0
    %v1773 = vpop.f32.mrb[0].mxu0
    %1774 = vdwg.mxu0
    %v1775 = vmax.f32 %v1770, 0.0
    %v1776 = vpack.c.bf16 %v1775, %v1775
    %s1777 = scalar_lea.vmem [#allocation2], 704
    %v1778 = vld [vmem:[%s1777] sm:$0xf]
    %v1779 = vld [vmem:[%s1777 + $0x4] sm:$0xf]
    %v1780 = vld [vmem:[%s1777 + $0x8] sm:$0xf]
    %v1781 = vld [vmem:[%s1777 + $0xc] sm:$0xf]
    %v1782 = vld [vmem:[%s1777 + $0x10] sm:$0xf]
    %v1783 = vld [vmem:[%s1777 + $0x14] sm:$0xf]
    %v1784 = vld [vmem:[%s1777 + $0x18] sm:$0xf]
    %v1785 = vld [vmem:[%s1777 + $0x1c] sm:$0xf]
    %v1786 = vld [vmem:[%s1777 + $0x20] sm:$0xf]
    %v1787 = vld [vmem:[%s1777 + $0x24] sm:$0xf]
    %v1788 = vld [vmem:[%s1777 + $0x28] sm:$0xf]
    %v1789 = vld [vmem:[%s1777 + $0x2c] sm:$0xf]
    %v1790 = vld [vmem:[%s1777 + $0x30] sm:$0xf]
    %v1791 = vld [vmem:[%s1777 + $0x34] sm:$0xf]
    %v1792 = vld [vmem:[%s1777 + $0x38] sm:$0xf]
    %v1793 = vld [vmem:[%s1777 + $0x3c] sm:$0xf]
    %v1794 = vld [vmem:[%s3 + $0xc] sm:$0x1]
    %v1795 = vlaneseq
    %v1796 = vshrl.u32 %v1795, 7
    %v1797 = vsub.s32 0, %v1796
    %v1798 = vrot.slane %v1794, %v1797
    %v1815 = vunpack.c.l.b16 %v1778
    %v1816 = vunpack.c.l.b16 %v1779
    %v1817 = vunpack.c.l.b16 %v1780
    %v1818 = vunpack.c.l.b16 %v1781
    %v1819 = vunpack.c.l.b16 %v1782
    %v1820 = vunpack.c.l.b16 %v1783
    %v1821 = vunpack.c.l.b16 %v1784
    %v1822 = vunpack.c.l.b16 %v1785
    %v1823 = vunpack.c.l.b16 %v1786
    %v1824 = vunpack.c.l.b16 %v1787
    %v1825 = vunpack.c.l.b16 %v1788
    %v1826 = vunpack.c.l.b16 %v1789
    %v1827 = vunpack.c.l.b16 %v1790
    %v1828 = vunpack.c.l.b16 %v1791
    %v1829 = vunpack.c.l.b16 %v1792
    %v1830 = vunpack.c.l.b16 %v1793
    %v1831 = vpack.c.b16 %v1816, %v1815
    %v1832 = vpack.c.b16 %v1818, %v1817
    %v1833 = vpack.c.b16 %v1820, %v1819
    %v1834 = vpack.c.b16 %v1822, %v1821
    %v1835 = vpack.c.b16 %v1824, %v1823
    %v1836 = vpack.c.b16 %v1826, %v1825
    %v1837 = vpack.c.b16 %v1828, %v1827
    %v1838 = vpack.c.b16 %v1830, %v1829
    %1847 = vmatprep.subr.bf16.mxu0 0
    %1848 = vmatpush1.bf16.msra.mxu0 %v1831
    %1849 = vmatprep.subr.bf16.mxu0 0
    %1850 = vmatpush1.bf16.msra.mxu0 %v1832
    %1851 = vmatprep.subr.bf16.mxu0 0
    %1852 = vmatpush1.bf16.msra.mxu0 %v1833
    %1853 = vmatprep.subr.bf16.mxu0 0
    %1854 = vmatpush1.bf16.msra.mxu0 %v1834
    %1855 = vmatprep.subr.bf16.mxu0 0
    %1856 = vmatpush1.bf16.msra.mxu0 %v1835
    %1857 = vmatprep.subr.bf16.mxu0 0
    %1858 = vmatpush1.bf16.msra.mxu0 %v1836
    %1859 = vmatprep.subr.bf16.mxu0 0
    %1860 = vmatpush1.bf16.msra.mxu0 %v1837
    %1861 = vmatprep.subr.bf16.mxu0 0
    %1862 = vmatpush1.bf16.msra.mxu0 %v1838
    %1863 = vmatprep.subr.bf16.mxu0 0
    %1864 = vmatpush1.bf16.msra.mxu0 0
    %1865 = vmatprep.subr.bf16.mxu0 0
    %1866 = vmatpush1.bf16.msra.mxu0 0
    %1867 = vmatprep.subr.bf16.mxu0 0
    %1868 = vmatpush1.bf16.msra.mxu0 0
    %1869 = vmatprep.subr.bf16.mxu0 0
    %1870 = vmatpush1.bf16.msra.mxu0 0
    %1871 = vmatprep.subr.bf16.mxu0 0
    %1872 = vmatpush1.bf16.msra.mxu0 0
    %1873 = vmatprep.subr.bf16.mxu0 0
    %1874 = vmatpush1.bf16.msra.mxu0 0
    %1875 = vmatprep.subr.bf16.mxu0 0
    %1876 = vmatpush1.bf16.msra.mxu0 0
    %1877 = vmatprep.subr.bf16.mxu0 0
    %1878 = vmatpush1.bf16.msra.mxu0 0
    %1879 = vmatprep.mubr.bf16.mxu0 0
    %1880 = vmatmul.mubr.bf16.gmra.mrb[0].mxu0 %v1734
    %v1881 = vpop.f32.mrb[0].mxu0
    %v1882 = vadd.f32 %v1798, %v1881
    %v1883 = vpop.f32.mrb[0].mxu0
    %v1884 = vpop.f32.mrb[0].mxu0
    %v1885 = vpop.f32.mrb[0].mxu0
    %1886 = vdwg.mxu0
    %v1887 = vmax.f32 %v1882, 0.0
    %v1888 = vpack.c.bf16 %v1887, %v1887
    %1889 = vmatprep.subr.bf16.mxu0 0
    %1890 = vmatpush1.bf16.msra.mxu0 %v1831
    %1891 = vmatprep.subr.bf16.mxu0 0
    %1892 = vmatpush1.bf16.msra.mxu0 %v1832
    %1893 = vmatprep.subr.bf16.mxu0 0
    %1894 = vmatpush1.bf16.msra.mxu0 %v1833
    %1895 = vmatprep.subr.bf16.mxu0 0
    %1896 = vmatpush1.bf16.msra.mxu0 %v1834
    %1897 = vmatprep.subr.bf16.mxu0 0
    %1898 = vmatpush1.bf16.msra.mxu0 %v1835
    %1899 = vmatprep.subr.bf16.mxu0 0
    %1900 = vmatpush1.bf16.msra.mxu0 %v1836
    %1901 = vmatprep.subr.bf16.mxu0 0
    %1902 = vmatpush1.bf16.msra.mxu0 %v1837
    %1903 = vmatprep.subr.bf16.mxu0 0
    %1904 = vmatpush1.bf16.msra.mxu0 %v1838
    %1905 = vmatprep.subr.bf16.mxu0 0
    %1906 = vmatpush1.bf16.msra.mxu0 0
    %1907 = vmatprep.subr.bf16.mxu0 0
    %1908 = vmatpush1.bf16.msra.mxu0 0
    %1909 = vmatprep.subr.bf16.mxu0 0
    %1910 = vmatpush1.bf16.msra.mxu0 0
    %1911 = vmatprep.subr.bf16.mxu0 0
    %1912 = vmatpush1.bf16.msra.mxu0 0
    %1913 = vmatprep.subr.bf16.mxu0 0
    %1914 = vmatpush1.bf16.msra.mxu0 0
    %1915 = vmatprep.subr.bf16.mxu0 0
    %1916 = vmatpush1.bf16.msra.mxu0 0
    %1917 = vmatprep.subr.bf16.mxu0 0
    %1918 = vmatpush1.bf16.msra.mxu0 0
    %1919 = vmatprep.subr.bf16.mxu0 0
    %1920 = vmatpush1.bf16.msra.mxu0 0
    %1921 = vmatprep.mubr.bf16.mxu0 0
    %1922 = vmatmul.mubr.bf16.gmra.mrb[0].mxu0 %v1776
    %v1923 = vpop.f32.mrb[0].mxu0
    %v1924 = vadd.f32 %v1798, %v1923
    %v1925 = vpop.f32.mrb[0].mxu0
    %v1926 = vpop.f32.mrb[0].mxu0
    %v1927 = vpop.f32.mrb[0].mxu0
    %1928 = vdwg.mxu0
    %v1929 = vmax.f32 %v1924, 0.0
    %v1930 = vpack.c.bf16 %v1929, %v1929
    %s1931 = scalar_lea.vmem [#allocation2], 768
    %v1932 = vld [vmem:[%s1931] sm:$0xf]
    %v1933 = vld [vmem:[%s1931 + $0x4] sm:$0xf]
    %v1934 = vld [vmem:[%s1931 + $0x8] sm:$0xf]
    %v1935 = vld [vmem:[%s1931 + $0xc] sm:$0xf]
    %v1936 = vld [vmem:[%s1931 + $0x10] sm:$0xf]
    %v1937 = vld [vmem:[%s1931 + $0x14] sm:$0xf]
    %v1938 = vld [vmem:[%s1931 + $0x18] sm:$0xf]
    %v1939 = vld [vmem:[%s1931 + $0x1c] sm:$0xf]
    %v1940 = vld [vmem:[%s1931 + $0x20] sm:$0xf]
    %v1941 = vld [vmem:[%s1931 + $0x24] sm:$0xf]
    %v1942 = vld [vmem:[%s1931 + $0x28] sm:$0xf]
    %v1943 = vld [vmem:[%s1931 + $0x2c] sm:$0xf]
    %v1944 = vld [vmem:[%s1931 + $0x30] sm:$0xf]
    %v1945 = vld [vmem:[%s1931 + $0x34] sm:$0xf]
    %v1946 = vld [vmem:[%s1931 + $0x38] sm:$0xf]
    %v1947 = vld [vmem:[%s1931 + $0x3c] sm:$0xf]
    %v1948 = vld [vmem:[%s3 + $0xd] sm:$0x1]
    %v1949 = vlaneseq
    %v1950 = vshrl.u32 %v1949, 7
    %v1951 = vsub.s32 0, %v1950
    %v1952 = vrot.slane %v1948, %v1951
    %v1969 = vunpack.c.l.b16 %v1932
    %v1970 = vunpack.c.l.b16 %v1933
    %v1971 = vunpack.c.l.b16 %v1934
    %v1972 = vunpack.c.l.b16 %v1935
    %v1973 = vunpack.c.l.b16 %v1936
    %v1974 = vunpack.c.l.b16 %v1937
    %v1975 = vunpack.c.l.b16 %v1938
    %v1976 = vunpack.c.l.b16 %v1939
    %v1977 = vunpack.c.l.b16 %v1940
    %v1978 = vunpack.c.l.b16 %v1941
    %v1979 = vunpack.c.l.b16 %v1942
    %v1980 = vunpack.c.l.b16 %v1943
    %v1981 = vunpack.c.l.b16 %v1944
    %v1982 = vunpack.c.l.b16 %v1945
    %v1983 = vunpack.c.l.b16 %v1946
    %v1984 = vunpack.c.l.b16 %v1947
    %v1985 = vpack.c.b16 %v1970, %v1969
    %v1986 = vpack.c.b16 %v1972, %v1971
    %v1987 = vpack.c.b16 %v1974, %v1973
    %v1988 = vpack.c.b16 %v1976, %v1975
    %v1989 = vpack.c.b16 %v1978, %v1977
    %v1990 = vpack.c.b16 %v1980, %v1979
    %v1991 = vpack.c.b16 %v1982, %v1981
    %v1992 = vpack.c.b16 %v1984, %v1983
    %2001 = vmatprep.subr.bf16.mxu0 0
    %2002 = vmatpush1.bf16.msra.mxu0 %v1985
    %2003 = vmatprep.subr.bf16.mxu0 0
    %2004 = vmatpush1.bf16.msra.mxu0 %v1986
    %2005 = vmatprep.subr.bf16.mxu0 0
    %2006 = vmatpush1.bf16.msra.mxu0 %v1987
    %2007 = vmatprep.subr.bf16.mxu0 0
    %2008 = vmatpush1.bf16.msra.mxu0 %v1988
    %2009 = vmatprep.subr.bf16.mxu0 0
    %2010 = vmatpush1.bf16.msra.mxu0 %v1989
    %2011 = vmatprep.subr.bf16.mxu0 0
    %2012 = vmatpush1.bf16.msra.mxu0 %v1990
    %2013 = vmatprep.subr.bf16.mxu0 0
    %2014 = vmatpush1.bf16.msra.mxu0 %v1991
    %2015 = vmatprep.subr.bf16.mxu0 0
    %2016 = vmatpush1.bf16.msra.mxu0 %v1992
    %2017 = vmatprep.subr.bf16.mxu0 0
    %2018 = vmatpush1.bf16.msra.mxu0 0
    %2019 = vmatprep.subr.bf16.mxu0 0
    %2020 = vmatpush1.bf16.msra.mxu0 0
    %2021 = vmatprep.subr.bf16.mxu0 0
    %2022 = vmatpush1.bf16.msra.mxu0 0
    %2023 = vmatprep.subr.bf16.mxu0 0
    %2024 = vmatpush1.bf16.msra.mxu0 0
    %2025 = vmatprep.subr.bf16.mxu0 0
    %2026 = vmatpush1.bf16.msra.mxu0 0
    %2027 = vmatprep.subr.bf16.mxu0 0
    %2028 = vmatpush1.bf16.msra.mxu0 0
    %2029 = vmatprep.subr.bf16.mxu0 0
    %2030 = vmatpush1.bf16.msra.mxu0 0
    %2031 = vmatprep.subr.bf16.mxu0 0
    %2032 = vmatpush1.bf16.msra.mxu0 0
    %2033 = vmatprep.mubr.bf16.mxu0 0
    %2034 = vmatmul.mubr.bf16.gmra.mrb[0].mxu0 %v1888
    %v2035 = vpop.f32.mrb[0].mxu0
    %v2036 = vadd.f32 %v1952, %v2035
    %v2037 = vpop.f32.mrb[0].mxu0
    %v2038 = vpop.f32.mrb[0].mxu0
    %v2039 = vpop.f32.mrb[0].mxu0
    %2040 = vdwg.mxu0
    %v2041 = vmax.f32 %v2036, 0.0
    %v2042 = vpack.c.bf16 %v2041, %v2041
    %2043 = vmatprep.subr.bf16.mxu0 0
    %2044 = vmatpush1.bf16.msra.mxu0 %v1985
    %2045 = vmatprep.subr.bf16.mxu0 0
    %2046 = vmatpush1.bf16.msra.mxu0 %v1986
    %2047 = vmatprep.subr.bf16.mxu0 0
    %2048 = vmatpush1.bf16.msra.mxu0 %v1987
    %2049 = vmatprep.subr.bf16.mxu0 0
    %2050 = vmatpush1.bf16.msra.mxu0 %v1988
    %2051 = vmatprep.subr.bf16.mxu0 0
    %2052 = vmatpush1.bf16.msra.mxu0 %v1989
    %2053 = vmatprep.subr.bf16.mxu0 0
    %2054 = vmatpush1.bf16.msra.mxu0 %v1990
    %2055 = vmatprep.subr.bf16.mxu0 0
    %2056 = vmatpush1.bf16.msra.mxu0 %v1991
    %2057 = vmatprep.subr.bf16.mxu0 0
    %2058 = vmatpush1.bf16.msra.mxu0 %v1992
    %2059 = vmatprep.subr.bf16.mxu0 0
    %2060 = vmatpush1.bf16.msra.mxu0 0
    %2061 = vmatprep.subr.bf16.mxu0 0
    %2062 = vmatpush1.bf16.msra.mxu0 0
    %2063 = vmatprep.subr.bf16.mxu0 0
    %2064 = vmatpush1.bf16.msra.mxu0 0
    %2065 = vmatprep.subr.bf16.mxu0 0
    %2066 = vmatpush1.bf16.msra.mxu0 0
    %2067 = vmatprep.subr.bf16.mxu0 0
    %2068 = vmatpush1.bf16.msra.mxu0 0
    %2069 = vmatprep.subr.bf16.mxu0 0
    %2070 = vmatpush1.bf16.msra.mxu0 0
    %2071 = vmatprep.subr.bf16.mxu0 0
    %2072 = vmatpush1.bf16.msra.mxu0 0
    %2073 = vmatprep.subr.bf16.mxu0 0
    %2074 = vmatpush1.bf16.msra.mxu0 0
    %2075 = vmatprep.mubr.bf16.mxu0 0
    %2076 = vmatmul.mubr.bf16.gmra.mrb[0].mxu0 %v1930
    %v2077 = vpop.f32.mrb[0].mxu0
    %v2078 = vadd.f32 %v1952, %v2077
    %v2079 = vpop.f32.mrb[0].mxu0
    %v2080 = vpop.f32.mrb[0].mxu0
    %v2081 = vpop.f32.mrb[0].mxu0
    %2082 = vdwg.mxu0
    %v2083 = vmax.f32 %v2078, 0.0
    %v2084 = vpack.c.bf16 %v2083, %v2083
    %s2085 = scalar_lea.vmem [#allocation2], 832
    %v2086 = vld [vmem:[%s2085] sm:$0xf]
    %v2087 = vld [vmem:[%s2085 + $0x4] sm:$0xf]
    %v2088 = vld [vmem:[%s2085 + $0x8] sm:$0xf]
    %v2089 = vld [vmem:[%s2085 + $0xc] sm:$0xf]
    %v2090 = vld [vmem:[%s2085 + $0x10] sm:$0xf]
    %v2091 = vld [vmem:[%s2085 + $0x14] sm:$0xf]
    %v2092 = vld [vmem:[%s2085 + $0x18] sm:$0xf]
    %v2093 = vld [vmem:[%s2085 + $0x1c] sm:$0xf]
    %v2094 = vld [vmem:[%s2085 + $0x20] sm:$0xf]
    %v2095 = vld [vmem:[%s2085 + $0x24] sm:$0xf]
    %v2096 = vld [vmem:[%s2085 + $0x28] sm:$0xf]
    %v2097 = vld [vmem:[%s2085 + $0x2c] sm:$0xf]
    %v2098 = vld [vmem:[%s2085 + $0x30] sm:$0xf]
    %v2099 = vld [vmem:[%s2085 + $0x34] sm:$0xf]
    %v2100 = vld [vmem:[%s2085 + $0x38] sm:$0xf]
    %v2101 = vld [vmem:[%s2085 + $0x3c] sm:$0xf]
    %v2102 = vld [vmem:[%s3 + $0xe] sm:$0x1]
    %v2103 = vlaneseq
    %v2104 = vshrl.u32 %v2103, 7
    %v2105 = vsub.s32 0, %v2104
    %v2106 = vrot.slane %v2102, %v2105
    %v2123 = vunpack.c.l.b16 %v2086
    %v2124 = vunpack.c.l.b16 %v2087
    %v2125 = vunpack.c.l.b16 %v2088
    %v2126 = vunpack.c.l.b16 %v2089
    %v2127 = vunpack.c.l.b16 %v2090
    %v2128 = vunpack.c.l.b16 %v2091
    %v2129 = vunpack.c.l.b16 %v2092
    %v2130 = vunpack.c.l.b16 %v2093
    %v2131 = vunpack.c.l.b16 %v2094
    %v2132 = vunpack.c.l.b16 %v2095
    %v2133 = vunpack.c.l.b16 %v2096
    %v2134 = vunpack.c.l.b16 %v2097
    %v2135 = vunpack.c.l.b16 %v2098
    %v2136 = vunpack.c.l.b16 %v2099
    %v2137 = vunpack.c.l.b16 %v2100
    %v2138 = vunpack.c.l.b16 %v2101
    %v2139 = vpack.c.b16 %v2124, %v2123
    %v2140 = vpack.c.b16 %v2126, %v2125
    %v2141 = vpack.c.b16 %v2128, %v2127
    %v2142 = vpack.c.b16 %v2130, %v2129
    %v2143 = vpack.c.b16 %v2132, %v2131
    %v2144 = vpack.c.b16 %v2134, %v2133
    %v2145 = vpack.c.b16 %v2136, %v2135
    %v2146 = vpack.c.b16 %v2138, %v2137
    %2155 = vmatprep.subr.bf16.mxu0 0
    %2156 = vmatpush1.bf16.msra.mxu0 %v2139
    %2157 = vmatprep.subr.bf16.mxu0 0
    %2158 = vmatpush1.bf16.msra.mxu0 %v2140
    %2159 = vmatprep.subr.bf16.mxu0 0
    %2160 = vmatpush1.bf16.msra.mxu0 %v2141
    %2161 = vmatprep.subr.bf16.mxu0 0
    %2162 = vmatpush1.bf16.msra.mxu0 %v2142
    %2163 = vmatprep.subr.bf16.mxu0 0
    %2164 = vmatpush1.bf16.msra.mxu0 %v2143
    %2165 = vmatprep.subr.bf16.mxu0 0
    %2166 = vmatpush1.bf16.msra.mxu0 %v2144
    %2167 = vmatprep.subr.bf16.mxu0 0
    %2168 = vmatpush1.bf16.msra.mxu0 %v2145
    %2169 = vmatprep.subr.bf16.mxu0 0
    %2170 = vmatpush1.bf16.msra.mxu0 %v2146
    %2171 = vmatprep.subr.bf16.mxu0 0
    %2172 = vmatpush1.bf16.msra.mxu0 0
    %2173 = vmatprep.subr.bf16.mxu0 0
    %2174 = vmatpush1.bf16.msra.mxu0 0
    %2175 = vmatprep.subr.bf16.mxu0 0
    %2176 = vmatpush1.bf16.msra.mxu0 0
    %2177 = vmatprep.subr.bf16.mxu0 0
    %2178 = vmatpush1.bf16.msra.mxu0 0
    %2179 = vmatprep.subr.bf16.mxu0 0
    %2180 = vmatpush1.bf16.msra.mxu0 0
    %2181 = vmatprep.subr.bf16.mxu0 0
    %2182 = vmatpush1.bf16.msra.mxu0 0
    %2183 = vmatprep.subr.bf16.mxu0 0
    %2184 = vmatpush1.bf16.msra.mxu0 0
    %2185 = vmatprep.subr.bf16.mxu0 0
    %2186 = vmatpush1.bf16.msra.mxu0 0
    %2187 = vmatprep.mubr.bf16.mxu0 0
    %2188 = vmatmul.mubr.bf16.gmra.mrb[0].mxu0 %v2042
    %v2189 = vpop.f32.mrb[0].mxu0
    %v2190 = vadd.f32 %v2106, %v2189
    %v2191 = vpop.f32.mrb[0].mxu0
    %v2192 = vpop.f32.mrb[0].mxu0
    %v2193 = vpop.f32.mrb[0].mxu0
    %2194 = vdwg.mxu0
    %v2195 = vmax.f32 %v2190, 0.0
    %v2196 = vpack.c.bf16 %v2195, %v2195
    %2197 = vmatprep.subr.bf16.mxu0 0
    %2198 = vmatpush1.bf16.msra.mxu0 %v2139
    %2199 = vmatprep.subr.bf16.mxu0 0
    %2200 = vmatpush1.bf16.msra.mxu0 %v2140
    %2201 = vmatprep.subr.bf16.mxu0 0
    %2202 = vmatpush1.bf16.msra.mxu0 %v2141
    %2203 = vmatprep.subr.bf16.mxu0 0
    %2204 = vmatpush1.bf16.msra.mxu0 %v2142
    %2205 = vmatprep.subr.bf16.mxu0 0
    %2206 = vmatpush1.bf16.msra.mxu0 %v2143
    %2207 = vmatprep.subr.bf16.mxu0 0
    %2208 = vmatpush1.bf16.msra.mxu0 %v2144
    %2209 = vmatprep.subr.bf16.mxu0 0
    %2210 = vmatpush1.bf16.msra.mxu0 %v2145
    %2211 = vmatprep.subr.bf16.mxu0 0
    %2212 = vmatpush1.bf16.msra.mxu0 %v2146
    %2213 = vmatprep.subr.bf16.mxu0 0
    %2214 = vmatpush1.bf16.msra.mxu0 0
    %2215 = vmatprep.subr.bf16.mxu0 0
    %2216 = vmatpush1.bf16.msra.mxu0 0
    %2217 = vmatprep.subr.bf16.mxu0 0
    %2218 = vmatpush1.bf16.msra.mxu0 0
    %2219 = vmatprep.subr.bf16.mxu0 0
    %2220 = vmatpush1.bf16.msra.mxu0 0
    %2221 = vmatprep.subr.bf16.mxu0 0
    %2222 = vmatpush1.bf16.msra.mxu0 0
    %2223 = vmatprep.subr.bf16.mxu0 0
    %2224 = vmatpush1.bf16.msra.mxu0 0
    %2225 = vmatprep.subr.bf16.mxu0 0
    %2226 = vmatpush1.bf16.msra.mxu0 0
    %2227 = vmatprep.subr.bf16.mxu0 0
    %2228 = vmatpush1.bf16.msra.mxu0 0
    %2229 = vmatprep.mubr.bf16.mxu0 0
    %2230 = vmatmul.mubr.bf16.gmra.mrb[0].mxu0 %v2084
    %v2231 = vpop.f32.mrb[0].mxu0
    %v2232 = vadd.f32 %v2106, %v2231
    %v2233 = vpop.f32.mrb[0].mxu0
    %v2234 = vpop.f32.mrb[0].mxu0
    %v2235 = vpop.f32.mrb[0].mxu0
    %2236 = vdwg.mxu0
    %v2237 = vmax.f32 %v2232, 0.0
    %v2238 = vpack.c.bf16 %v2237, %v2237
    %s2239 = scalar_lea.vmem [#allocation2], 896
    %v2240 = vld [vmem:[%s2239] sm:$0xf]
    %v2241 = vld [vmem:[%s2239 + $0x4] sm:$0xf]
    %v2242 = vld [vmem:[%s2239 + $0x8] sm:$0xf]
    %v2243 = vld [vmem:[%s2239 + $0xc] sm:$0xf]
    %v2244 = vld [vmem:[%s2239 + $0x10] sm:$0xf]
    %v2245 = vld [vmem:[%s2239 + $0x14] sm:$0xf]
    %v2246 = vld [vmem:[%s2239 + $0x18] sm:$0xf]
    %v2247 = vld [vmem:[%s2239 + $0x1c] sm:$0xf]
    %v2248 = vld [vmem:[%s2239 + $0x20] sm:$0xf]
    %v2249 = vld [vmem:[%s2239 + $0x24] sm:$0xf]
    %v2250 = vld [vmem:[%s2239 + $0x28] sm:$0xf]
    %v2251 = vld [vmem:[%s2239 + $0x2c] sm:$0xf]
    %v2252 = vld [vmem:[%s2239 + $0x30] sm:$0xf]
    %v2253 = vld [vmem:[%s2239 + $0x34] sm:$0xf]
    %v2254 = vld [vmem:[%s2239 + $0x38] sm:$0xf]
    %v2255 = vld [vmem:[%s2239 + $0x3c] sm:$0xf]
    %v2256 = vld [vmem:[%s3 + $0xf] sm:$0x1]
    %v2257 = vlaneseq
    %v2258 = vshrl.u32 %v2257, 7
    %v2259 = vsub.s32 0, %v2258
    %v2260 = vrot.slane %v2256, %v2259
    %v2277 = vunpack.c.l.b16 %v2240
    %v2278 = vunpack.c.l.b16 %v2241
    %v2279 = vunpack.c.l.b16 %v2242
    %v2280 = vunpack.c.l.b16 %v2243
    %v2281 = vunpack.c.l.b16 %v2244
    %v2282 = vunpack.c.l.b16 %v2245
    %v2283 = vunpack.c.l.b16 %v2246
    %v2284 = vunpack.c.l.b16 %v2247
    %v2285 = vunpack.c.l.b16 %v2248
    %v2286 = vunpack.c.l.b16 %v2249
    %v2287 = vunpack.c.l.b16 %v2250
    %v2288 = vunpack.c.l.b16 %v2251
    %v2289 = vunpack.c.l.b16 %v2252
    %v2290 = vunpack.c.l.b16 %v2253
    %v2291 = vunpack.c.l.b16 %v2254
    %v2292 = vunpack.c.l.b16 %v2255
    %v2293 = vpack.c.b16 %v2278, %v2277
    %v2294 = vpack.c.b16 %v2280, %v2279
    %v2295 = vpack.c.b16 %v2282, %v2281
    %v2296 = vpack.c.b16 %v2284, %v2283
    %v2297 = vpack.c.b16 %v2286, %v2285
    %v2298 = vpack.c.b16 %v2288, %v2287
    %v2299 = vpack.c.b16 %v2290, %v2289
    %v2300 = vpack.c.b16 %v2292, %v2291
    %2309 = vmatprep.subr.bf16.mxu0 0
    %2310 = vmatpush1.bf16.msra.mxu0 %v2293
    %2311 = vmatprep.subr.bf16.mxu0 0
    %2312 = vmatpush1.bf16.msra.mxu0 %v2294
    %2313 = vmatprep.subr.bf16.mxu0 0
    %2314 = vmatpush1.bf16.msra.mxu0 %v2295
    %2315 = vmatprep.subr.bf16.mxu0 0
    %2316 = vmatpush1.bf16.msra.mxu0 %v2296
    %2317 = vmatprep.subr.bf16.mxu0 0
    %2318 = vmatpush1.bf16.msra.mxu0 %v2297
    %2319 = vmatprep.subr.bf16.mxu0 0
    %2320 = vmatpush1.bf16.msra.mxu0 %v2298
    %2321 = vmatprep.subr.bf16.mxu0 0
    %2322 = vmatpush1.bf16.msra.mxu0 %v2299
    %2323 = vmatprep.subr.bf16.mxu0 0
    %2324 = vmatpush1.bf16.msra.mxu0 %v2300
    %2325 = vmatprep.subr.bf16.mxu0 0
    %2326 = vmatpush1.bf16.msra.mxu0 0
    %2327 = vmatprep.subr.bf16.mxu0 0
    %2328 = vmatpush1.bf16.msra.mxu0 0
    %2329 = vmatprep.subr.bf16.mxu0 0
    %2330 = vmatpush1.bf16.msra.mxu0 0
    %2331 = vmatprep.subr.bf16.mxu0 0
    %2332 = vmatpush1.bf16.msra.mxu0 0
    %2333 = vmatprep.subr.bf16.mxu0 0
    %2334 = vmatpush1.bf16.msra.mxu0 0
    %2335 = vmatprep.subr.bf16.mxu0 0
    %2336 = vmatpush1.bf16.msra.mxu0 0
    %2337 = vmatprep.subr.bf16.mxu0 0
    %2338 = vmatpush1.bf16.msra.mxu0 0
    %2339 = vmatprep.subr.bf16.mxu0 0
    %2340 = vmatpush1.bf16.msra.mxu0 0
    %2341 = vmatprep.mubr.bf16.mxu0 0
    %2342 = vmatmul.mubr.bf16.gmra.mrb[0].mxu0 %v2196
    %v2343 = vpop.f32.mrb[0].mxu0
    %v2344 = vadd.f32 %v2260, %v2343
    %v2345 = vpop.f32.mrb[0].mxu0
    %v2346 = vpop.f32.mrb[0].mxu0
    %v2347 = vpop.f32.mrb[0].mxu0
    %2348 = vdwg.mxu0
    %v2349 = vmax.f32 %v2344, 0.0
    %v2350 = vpack.c.bf16 %v2349, %v2349
    %2351 = vmatprep.subr.bf16.mxu0 0
    %2352 = vmatpush1.bf16.msra.mxu0 %v2293
    %2353 = vmatprep.subr.bf16.mxu0 0
    %2354 = vmatpush1.bf16.msra.mxu0 %v2294
    %2355 = vmatprep.subr.bf16.mxu0 0
    %2356 = vmatpush1.bf16.msra.mxu0 %v2295
    %2357 = vmatprep.subr.bf16.mxu0 0
    %2358 = vmatpush1.bf16.msra.mxu0 %v2296
    %2359 = vmatprep.subr.bf16.mxu0 0
    %2360 = vmatpush1.bf16.msra.mxu0 %v2297
    %2361 = vmatprep.subr.bf16.mxu0 0
    %2362 = vmatpush1.bf16.msra.mxu0 %v2298
    %2363 = vmatprep.subr.bf16.mxu0 0
    %2364 = vmatpush1.bf16.msra.mxu0 %v2299
    %2365 = vmatprep.subr.bf16.mxu0 0
    %2366 = vmatpush1.bf16.msra.mxu0 %v2300
    %2367 = vmatprep.subr.bf16.mxu0 0
    %2368 = vmatpush1.bf16.msra.mxu0 0
    %2369 = vmatprep.subr.bf16.mxu0 0
    %2370 = vmatpush1.bf16.msra.mxu0 0
    %2371 = vmatprep.subr.bf16.mxu0 0
    %2372 = vmatpush1.bf16.msra.mxu0 0
    %2373 = vmatprep.subr.bf16.mxu0 0
    %2374 = vmatpush1.bf16.msra.mxu0 0
    %2375 = vmatprep.subr.bf16.mxu0 0
    %2376 = vmatpush1.bf16.msra.mxu0 0
    %2377 = vmatprep.subr.bf16.mxu0 0
    %2378 = vmatpush1.bf16.msra.mxu0 0
    %2379 = vmatprep.subr.bf16.mxu0 0
    %2380 = vmatpush1.bf16.msra.mxu0 0
    %2381 = vmatprep.subr.bf16.mxu0 0
    %2382 = vmatpush1.bf16.msra.mxu0 0
    %2383 = vmatprep.mubr.bf16.mxu0 0
    %2384 = vmatmul.mubr.bf16.gmra.mrb[0].mxu0 %v2238
    %v2385 = vpop.f32.mrb[0].mxu0
    %v2386 = vadd.f32 %v2260, %v2385
    %v2387 = vpop.f32.mrb[0].mxu0
    %v2388 = vpop.f32.mrb[0].mxu0
    %v2389 = vpop.f32.mrb[0].mxu0
    %2390 = vdwg.mxu0
    %v2391 = vmax.f32 %v2386, 0.0
    %v2392 = vpack.c.bf16 %v2391, %v2391
    %s2393 = scalar_lea.vmem [#allocation2], 960
    %v2394 = vld [vmem:[%s2393] sm:$0xf]
    %v2395 = vld [vmem:[%s2393 + $0x4] sm:$0xf]
    %v2396 = vld [vmem:[%s2393 + $0x8] sm:$0xf]
    %v2397 = vld [vmem:[%s2393 + $0xc] sm:$0xf]
    %v2398 = vld [vmem:[%s2393 + $0x10] sm:$0xf]
    %v2399 = vld [vmem:[%s2393 + $0x14] sm:$0xf]
    %v2400 = vld [vmem:[%s2393 + $0x18] sm:$0xf]
    %v2401 = vld [vmem:[%s2393 + $0x1c] sm:$0xf]
    %v2402 = vld [vmem:[%s2393 + $0x20] sm:$0xf]
    %v2403 = vld [vmem:[%s2393 + $0x24] sm:$0xf]
    %v2404 = vld [vmem:[%s2393 + $0x28] sm:$0xf]
    %v2405 = vld [vmem:[%s2393 + $0x2c] sm:$0xf]
    %v2406 = vld [vmem:[%s2393 + $0x30] sm:$0xf]
    %v2407 = vld [vmem:[%s2393 + $0x34] sm:$0xf]
    %v2408 = vld [vmem:[%s2393 + $0x38] sm:$0xf]
    %v2409 = vld [vmem:[%s2393 + $0x3c] sm:$0xf]
    %v2410 = vld [vmem:[%s3 + $0x10] sm:$0x1]
    %v2411 = vlaneseq
    %v2412 = vshrl.u32 %v2411, 7
    %v2413 = vsub.s32 0, %v2412
    %v2414 = vrot.slane %v2410, %v2413
    %v2431 = vunpack.c.l.b16 %v2394
    %v2432 = vunpack.c.l.b16 %v2395
    %v2433 = vunpack.c.l.b16 %v2396
    %v2434 = vunpack.c.l.b16 %v2397
    %v2435 = vunpack.c.l.b16 %v2398
    %v2436 = vunpack.c.l.b16 %v2399
    %v2437 = vunpack.c.l.b16 %v2400
    %v2438 = vunpack.c.l.b16 %v2401
    %v2439 = vunpack.c.l.b16 %v2402
    %v2440 = vunpack.c.l.b16 %v2403
    %v2441 = vunpack.c.l.b16 %v2404
    %v2442 = vunpack.c.l.b16 %v2405
    %v2443 = vunpack.c.l.b16 %v2406
    %v2444 = vunpack.c.l.b16 %v2407
    %v2445 = vunpack.c.l.b16 %v2408
    %v2446 = vunpack.c.l.b16 %v2409
    %v2447 = vpack.c.b16 %v2432, %v2431
    %v2448 = vpack.c.b16 %v2434, %v2433
    %v2449 = vpack.c.b16 %v2436, %v2435
    %v2450 = vpack.c.b16 %v2438, %v2437
    %v2451 = vpack.c.b16 %v2440, %v2439
    %v2452 = vpack.c.b16 %v2442, %v2441
    %v2453 = vpack.c.b16 %v2444, %v2443
    %v2454 = vpack.c.b16 %v2446, %v2445
    %2463 = vmatprep.subr.bf16.mxu0 0
    %2464 = vmatpush1.bf16.msra.mxu0 %v2447
    %2465 = vmatprep.subr.bf16.mxu0 0
    %2466 = vmatpush1.bf16.msra.mxu0 %v2448
    %2467 = vmatprep.subr.bf16.mxu0 0
    %2468 = vmatpush1.bf16.msra.mxu0 %v2449
    %2469 = vmatprep.subr.bf16.mxu0 0
    %2470 = vmatpush1.bf16.msra.mxu0 %v2450
    %2471 = vmatprep.subr.bf16.mxu0 0
    %2472 = vmatpush1.bf16.msra.mxu0 %v2451
    %2473 = vmatprep.subr.bf16.mxu0 0
    %2474 = vmatpush1.bf16.msra.mxu0 %v2452
    %2475 = vmatprep.subr.bf16.mxu0 0
    %2476 = vmatpush1.bf16.msra.mxu0 %v2453
    %2477 = vmatprep.subr.bf16.mxu0 0
    %2478 = vmatpush1.bf16.msra.mxu0 %v2454
    %2479 = vmatprep.subr.bf16.mxu0 0
    %2480 = vmatpush1.bf16.msra.mxu0 0
    %2481 = vmatprep.subr.bf16.mxu0 0
    %2482 = vmatpush1.bf16.msra.mxu0 0
    %2483 = vmatprep.subr.bf16.mxu0 0
    %2484 = vmatpush1.bf16.msra.mxu0 0
    %2485 = vmatprep.subr.bf16.mxu0 0
    %2486 = vmatpush1.bf16.msra.mxu0 0
    %2487 = vmatprep.subr.bf16.mxu0 0
    %2488 = vmatpush1.bf16.msra.mxu0 0
    %2489 = vmatprep.subr.bf16.mxu0 0
    %2490 = vmatpush1.bf16.msra.mxu0 0
    %2491 = vmatprep.subr.bf16.mxu0 0
    %2492 = vmatpush1.bf16.msra.mxu0 0
    %2493 = vmatprep.subr.bf16.mxu0 0
    %2494 = vmatpush1.bf16.msra.mxu0 0
    %2495 = vmatprep.mubr.bf16.mxu0 0
    %2496 = vmatmul.mubr.bf16.gmra.mrb[0].mxu0 %v2350
    %v2497 = vpop.f32.mrb[0].mxu0
    %v2498 = vadd.f32 %v2414, %v2497
    %v2499 = vpop.f32.mrb[0].mxu0
    %v2500 = vpop.f32.mrb[0].mxu0
    %v2501 = vpop.f32.mrb[0].mxu0
    %2502 = vdwg.mxu0
    %v2503 = vmax.f32 %v2498, 0.0
    %v2504 = vpack.c.bf16 %v2503, %v2503
    %2505 = vmatprep.subr.bf16.mxu0 0
    %2506 = vmatpush1.bf16.msra.mxu0 %v2447
    %2507 = vmatprep.subr.bf16.mxu0 0
    %2508 = vmatpush1.bf16.msra.mxu0 %v2448
    %2509 = vmatprep.subr.bf16.mxu0 0
    %2510 = vmatpush1.bf16.msra.mxu0 %v2449
    %2511 = vmatprep.subr.bf16.mxu0 0
    %2512 = vmatpush1.bf16.msra.mxu0 %v2450
    %2513 = vmatprep.subr.bf16.mxu0 0
    %2514 = vmatpush1.bf16.msra.mxu0 %v2451
    %2515 = vmatprep.subr.bf16.mxu0 0
    %2516 = vmatpush1.bf16.msra.mxu0 %v2452
    %2517 = vmatprep.subr.bf16.mxu0 0
    %2518 = vmatpush1.bf16.msra.mxu0 %v2453
    %2519 = vmatprep.subr.bf16.mxu0 0
    %2520 = vmatpush1.bf16.msra.mxu0 %v2454
    %2521 = vmatprep.subr.bf16.mxu0 0
    %2522 = vmatpush1.bf16.msra.mxu0 0
    %2523 = vmatprep.subr.bf16.mxu0 0
    %2524 = vmatpush1.bf16.msra.mxu0 0
    %2525 = vmatprep.subr.bf16.mxu0 0
    %2526 = vmatpush1.bf16.msra.mxu0 0
    %2527 = vmatprep.subr.bf16.mxu0 0
    %2528 = vmatpush1.bf16.msra.mxu0 0
    %2529 = vmatprep.subr.bf16.mxu0 0
    %2530 = vmatpush1.bf16.msra.mxu0 0
    %2531 = vmatprep.subr.bf16.mxu0 0
    %2532 = vmatpush1.bf16.msra.mxu0 0
    %2533 = vmatprep.subr.bf16.mxu0 0
    %2534 = vmatpush1.bf16.msra.mxu0 0
    %2535 = vmatprep.subr.bf16.mxu0 0
    %2536 = vmatpush1.bf16.msra.mxu0 0
    %2537 = vmatprep.mubr.bf16.mxu0 0
    %2538 = vmatmul.mubr.bf16.gmra.mrb[0].mxu0 %v2392
    %v2539 = vpop.f32.mrb[0].mxu0
    %v2540 = vadd.f32 %v2414, %v2539
    %v2541 = vpop.f32.mrb[0].mxu0
    %v2542 = vpop.f32.mrb[0].mxu0
    %v2543 = vpop.f32.mrb[0].mxu0
    %2544 = vdwg.mxu0
    %v2545 = vmax.f32 %v2540, 0.0
    %v2546 = vpack.c.bf16 %v2545, %v2545
    %s2547 = scalar_lea.vmem [#allocation2], 1024
    %v2548 = vld [vmem:[%s2547] sm:$0xf]
    %v2549 = vld [vmem:[%s2547 + $0x4] sm:$0xf]
    %v2550 = vld [vmem:[%s2547 + $0x8] sm:$0xf]
    %v2551 = vld [vmem:[%s2547 + $0xc] sm:$0xf]
    %v2552 = vld [vmem:[%s2547 + $0x10] sm:$0xf]
    %v2553 = vld [vmem:[%s2547 + $0x14] sm:$0xf]
    %v2554 = vld [vmem:[%s2547 + $0x18] sm:$0xf]
    %v2555 = vld [vmem:[%s2547 + $0x1c] sm:$0xf]
    %v2556 = vld [vmem:[%s2547 + $0x20] sm:$0xf]
    %v2557 = vld [vmem:[%s2547 + $0x24] sm:$0xf]
    %v2558 = vld [vmem:[%s2547 + $0x28] sm:$0xf]
    %v2559 = vld [vmem:[%s2547 + $0x2c] sm:$0xf]
    %v2560 = vld [vmem:[%s2547 + $0x30] sm:$0xf]
    %v2561 = vld [vmem:[%s2547 + $0x34] sm:$0xf]
    %v2562 = vld [vmem:[%s2547 + $0x38] sm:$0xf]
    %v2563 = vld [vmem:[%s2547 + $0x3c] sm:$0xf]
    %v2564 = vld [vmem:[%s3 + $0x11] sm:$0x1]
    %v2565 = vlaneseq
    %v2566 = vshrl.u32 %v2565, 7
    %v2567 = vsub.s32 0, %v2566
    %v2568 = vrot.slane %v2564, %v2567
    %v2585 = vunpack.c.l.b16 %v2548
    %v2586 = vunpack.c.l.b16 %v2549
    %v2587 = vunpack.c.l.b16 %v2550
    %v2588 = vunpack.c.l.b16 %v2551
    %v2589 = vunpack.c.l.b16 %v2552
    %v2590 = vunpack.c.l.b16 %v2553
    %v2591 = vunpack.c.l.b16 %v2554
    %v2592 = vunpack.c.l.b16 %v2555
    %v2593 = vunpack.c.l.b16 %v2556
    %v2594 = vunpack.c.l.b16 %v2557
    %v2595 = vunpack.c.l.b16 %v2558
    %v2596 = vunpack.c.l.b16 %v2559
    %v2597 = vunpack.c.l.b16 %v2560
    %v2598 = vunpack.c.l.b16 %v2561
    %v2599 = vunpack.c.l.b16 %v2562
    %v2600 = vunpack.c.l.b16 %v2563
    %v2601 = vpack.c.b16 %v2586, %v2585
    %v2602 = vpack.c.b16 %v2588, %v2587
    %v2603 = vpack.c.b16 %v2590, %v2589
    %v2604 = vpack.c.b16 %v2592, %v2591
    %v2605 = vpack.c.b16 %v2594, %v2593
    %v2606 = vpack.c.b16 %v2596, %v2595
    %v2607 = vpack.c.b16 %v2598, %v2597
    %v2608 = vpack.c.b16 %v2600, %v2599
    %2617 = vmatprep.subr.bf16.mxu0 0
    %2618 = vmatpush1.bf16.msra.mxu0 %v2601
    %2619 = vmatprep.subr.bf16.mxu0 0
    %2620 = vmatpush1.bf16.msra.mxu0 %v2602
    %2621 = vmatprep.subr.bf16.mxu0 0
    %2622 = vmatpush1.bf16.msra.mxu0 %v2603
    %2623 = vmatprep.subr.bf16.mxu0 0
    %2624 = vmatpush1.bf16.msra.mxu0 %v2604
    %2625 = vmatprep.subr.bf16.mxu0 0
    %2626 = vmatpush1.bf16.msra.mxu0 %v2605
    %2627 = vmatprep.subr.bf16.mxu0 0
    %2628 = vmatpush1.bf16.msra.mxu0 %v2606
    %2629 = vmatprep.subr.bf16.mxu0 0
    %2630 = vmatpush1.bf16.msra.mxu0 %v2607
    %2631 = vmatprep.subr.bf16.mxu0 0
    %2632 = vmatpush1.bf16.msra.mxu0 %v2608
    %2633 = vmatprep.subr.bf16.mxu0 0
    %2634 = vmatpush1.bf16.msra.mxu0 0
    %2635 = vmatprep.subr.bf16.mxu0 0
    %2636 = vmatpush1.bf16.msra.mxu0 0
    %2637 = vmatprep.subr.bf16.mxu0 0
    %2638 = vmatpush1.bf16.msra.mxu0 0
    %2639 = vmatprep.subr.bf16.mxu0 0
    %2640 = vmatpush1.bf16.msra.mxu0 0
    %2641 = vmatprep.subr.bf16.mxu0 0
    %2642 = vmatpush1.bf16.msra.mxu0 0
    %2643 = vmatprep.subr.bf16.mxu0 0
    %2644 = vmatpush1.bf16.msra.mxu0 0
    %2645 = vmatprep.subr.bf16.mxu0 0
    %2646 = vmatpush1.bf16.msra.mxu0 0
    %2647 = vmatprep.subr.bf16.mxu0 0
    %2648 = vmatpush1.bf16.msra.mxu0 0
    %2649 = vmatprep.mubr.bf16.mxu0 0
    %2650 = vmatmul.mubr.bf16.gmra.mrb[0].mxu0 %v2504
    %v2651 = vpop.f32.mrb[0].mxu0
    %v2652 = vadd.f32 %v2568, %v2651
    %v2653 = vpop.f32.mrb[0].mxu0
    %v2654 = vpop.f32.mrb[0].mxu0
    %v2655 = vpop.f32.mrb[0].mxu0
    %2656 = vdwg.mxu0
    %v2657 = vmax.f32 %v2652, 0.0
    %v2658 = vpack.c.bf16 %v2657, %v2657
    %2659 = vmatprep.subr.bf16.mxu0 0
    %2660 = vmatpush1.bf16.msra.mxu0 %v2601
    %2661 = vmatprep.subr.bf16.mxu0 0
    %2662 = vmatpush1.bf16.msra.mxu0 %v2602
    %2663 = vmatprep.subr.bf16.mxu0 0
    %2664 = vmatpush1.bf16.msra.mxu0 %v2603
    %2665 = vmatprep.subr.bf16.mxu0 0
    %2666 = vmatpush1.bf16.msra.mxu0 %v2604
    %2667 = vmatprep.subr.bf16.mxu0 0
    %2668 = vmatpush1.bf16.msra.mxu0 %v2605
    %2669 = vmatprep.subr.bf16.mxu0 0
    %2670 = vmatpush1.bf16.msra.mxu0 %v2606
    %2671 = vmatprep.subr.bf16.mxu0 0
    %2672 = vmatpush1.bf16.msra.mxu0 %v2607
    %2673 = vmatprep.subr.bf16.mxu0 0
    %2674 = vmatpush1.bf16.msra.mxu0 %v2608
    %2675 = vmatprep.subr.bf16.mxu0 0
    %2676 = vmatpush1.bf16.msra.mxu0 0
    %2677 = vmatprep.subr.bf16.mxu0 0
    %2678 = vmatpush1.bf16.msra.mxu0 0
    %2679 = vmatprep.subr.bf16.mxu0 0
    %2680 = vmatpush1.bf16.msra.mxu0 0
    %2681 = vmatprep.subr.bf16.mxu0 0
    %2682 = vmatpush1.bf16.msra.mxu0 0
    %2683 = vmatprep.subr.bf16.mxu0 0
    %2684 = vmatpush1.bf16.msra.mxu0 0
    %2685 = vmatprep.subr.bf16.mxu0 0
    %2686 = vmatpush1.bf16.msra.mxu0 0
    %2687 = vmatprep.subr.bf16.mxu0 0
    %2688 = vmatpush1.bf16.msra.mxu0 0
    %2689 = vmatprep.subr.bf16.mxu0 0
    %2690 = vmatpush1.bf16.msra.mxu0 0
    %2691 = vmatprep.mubr.bf16.mxu0 0
    %2692 = vmatmul.mubr.bf16.gmra.mrb[0].mxu0 %v2546
    %v2693 = vpop.f32.mrb[0].mxu0
    %v2694 = vadd.f32 %v2568, %v2693
    %v2695 = vpop.f32.mrb[0].mxu0
    %v2696 = vpop.f32.mrb[0].mxu0
    %v2697 = vpop.f32.mrb[0].mxu0
    %2698 = vdwg.mxu0
    %v2699 = vmax.f32 %v2694, 0.0
    %v2700 = vpack.c.bf16 %v2699, %v2699
    %v2701 = vld [vmem:[%s4] sm:$0xf]
    %v2702 = vld [vmem:[%s4 + $0x4] sm:$0xf]
    %v2703 = vld [vmem:[%s4 + $0x8] sm:$0xf]
    %v2704 = vld [vmem:[%s4 + $0xc] sm:$0xf]
    %v2705 = vld [vmem:[%s4 + $0x10] sm:$0xf]
    %v2706 = vld [vmem:[%s4 + $0x14] sm:$0xf]
    %v2707 = vld [vmem:[%s4 + $0x18] sm:$0xf]
    %v2708 = vld [vmem:[%s4 + $0x1c] sm:$0xf]
    %v2709 = vld [vmem:[%s4 + $0x20] sm:$0xf]
    %v2710 = vld [vmem:[%s4 + $0x24] sm:$0xf]
    %v2711 = vld [vmem:[%s4 + $0x28] sm:$0xf]
    %v2712 = vld [vmem:[%s4 + $0x2c] sm:$0xf]
    %v2713 = vld [vmem:[%s4 + $0x30] sm:$0xf]
    %v2714 = vld [vmem:[%s4 + $0x34] sm:$0xf]
    %v2715 = vld [vmem:[%s4 + $0x38] sm:$0xf]
    %v2716 = vld [vmem:[%s4 + $0x3c] sm:$0xf]
    %v2717 = vld [vmem:[%s5] sm:$0x1]
    %v2719 = vlaneseq
    %v2720 = vshrl.u32 %v2719, 7
    %v2721 = vsub.s32 0, %v2720
    %v2722 = vrot.slane %v2717, %v2721
    %v2740 = vunpack.c.l.b16 %v2701
    %v2741 = vunpack.c.l.b16 %v2702
    %v2742 = vunpack.c.l.b16 %v2703
    %v2743 = vunpack.c.l.b16 %v2704
    %v2744 = vunpack.c.l.b16 %v2705
    %v2745 = vunpack.c.l.b16 %v2706
    %v2746 = vunpack.c.l.b16 %v2707
    %v2747 = vunpack.c.l.b16 %v2708
    %v2748 = vunpack.c.l.b16 %v2709
    %v2749 = vunpack.c.l.b16 %v2710
    %v2750 = vunpack.c.l.b16 %v2711
    %v2751 = vunpack.c.l.b16 %v2712
    %v2752 = vunpack.c.l.b16 %v2713
    %v2753 = vunpack.c.l.b16 %v2714
    %v2754 = vunpack.c.l.b16 %v2715
    %v2755 = vunpack.c.l.b16 %v2716
    %v2756 = vpack.c.b16 %v2741, %v2740
    %v2757 = vpack.c.b16 %v2743, %v2742
    %v2758 = vpack.c.b16 %v2745, %v2744
    %v2759 = vpack.c.b16 %v2747, %v2746
    %v2760 = vpack.c.b16 %v2749, %v2748
    %v2761 = vpack.c.b16 %v2751, %v2750
    %v2762 = vpack.c.b16 %v2753, %v2752
    %v2763 = vpack.c.b16 %v2755, %v2754
    %2772 = vmatprep.subr.bf16.mxu0 0
    %2773 = vmatpush1.bf16.msra.mxu0 %v2756
    %2774 = vmatprep.subr.bf16.mxu0 0
    %2775 = vmatpush1.bf16.msra.mxu0 %v2757
    %2776 = vmatprep.subr.bf16.mxu0 0
    %2777 = vmatpush1.bf16.msra.mxu0 %v2758
    %2778 = vmatprep.subr.bf16.mxu0 0
    %2779 = vmatpush1.bf16.msra.mxu0 %v2759
    %2780 = vmatprep.subr.bf16.mxu0 0
    %2781 = vmatpush1.bf16.msra.mxu0 %v2760
    %2782 = vmatprep.subr.bf16.mxu0 0
    %2783 = vmatpush1.bf16.msra.mxu0 %v2761
    %2784 = vmatprep.subr.bf16.mxu0 0
    %2785 = vmatpush1.bf16.msra.mxu0 %v2762
    %2786 = vmatprep.subr.bf16.mxu0 0
    %2787 = vmatpush1.bf16.msra.mxu0 %v2763
    %2788 = vmatprep.subr.bf16.mxu0 0
    %2789 = vmatpush1.bf16.msra.mxu0 0
    %2790 = vmatprep.subr.bf16.mxu0 0
    %2791 = vmatpush1.bf16.msra.mxu0 0
    %2792 = vmatprep.subr.bf16.mxu0 0
    %2793 = vmatpush1.bf16.msra.mxu0 0
    %2794 = vmatprep.subr.bf16.mxu0 0
    %2795 = vmatpush1.bf16.msra.mxu0 0
    %2796 = vmatprep.subr.bf16.mxu0 0
    %2797 = vmatpush1.bf16.msra.mxu0 0
    %2798 = vmatprep.subr.bf16.mxu0 0
    %2799 = vmatpush1.bf16.msra.mxu0 0
    %2800 = vmatprep.subr.bf16.mxu0 0
    %2801 = vmatpush1.bf16.msra.mxu0 0
    %2802 = vmatprep.subr.bf16.mxu0 0
    %2803 = vmatpush1.bf16.msra.mxu0 0
    %2804 = vmatprep.mubr.bf16.mxu0 0
    %2805 = vmatmul.mubr.bf16.gmra.mrb[0].mxu0 %v2658
    %v2806 = vpop.f32.mrb[0].mxu0
    %v2807 = vadd.f32 %v2722, %v2806
    %v2808 = vpop.f32.mrb[0].mxu0
    %v2809 = vpop.f32.mrb[0].mxu0
    %v2810 = vpop.f32.mrb[0].mxu0
    %2811 = vdwg.mxu0
    %vm2812 = vcmask 64512
    %2813 = vst.msk [vmem:[%s6] sm:$0xff] %vm2812, %v2807
    %2814 = vmatprep.subr.bf16.mxu0 0
    %2815 = vmatpush1.bf16.msra.mxu0 %v2756
    %2816 = vmatprep.subr.bf16.mxu0 0
    %2817 = vmatpush1.bf16.msra.mxu0 %v2757
    %2818 = vmatprep.subr.bf16.mxu0 0
    %2819 = vmatpush1.bf16.msra.mxu0 %v2758
    %2820 = vmatprep.subr.bf16.mxu0 0
    %2821 = vmatpush1.bf16.msra.mxu0 %v2759
    %2822 = vmatprep.subr.bf16.mxu0 0
    %2823 = vmatpush1.bf16.msra.mxu0 %v2760
    %2824 = vmatprep.subr.bf16.mxu0 0
    %2825 = vmatpush1.bf16.msra.mxu0 %v2761
    %2826 = vmatprep.subr.bf16.mxu0 0
    %2827 = vmatpush1.bf16.msra.mxu0 %v2762
    %2828 = vmatprep.subr.bf16.mxu0 0
    %2829 = vmatpush1.bf16.msra.mxu0 %v2763
    %2830 = vmatprep.subr.bf16.mxu0 0
    %2831 = vmatpush1.bf16.msra.mxu0 0
    %2832 = vmatprep.subr.bf16.mxu0 0
    %2833 = vmatpush1.bf16.msra.mxu0 0
    %2834 = vmatprep.subr.bf16.mxu0 0
    %2835 = vmatpush1.bf16.msra.mxu0 0
    %2836 = vmatprep.subr.bf16.mxu0 0
    %2837 = vmatpush1.bf16.msra.mxu0 0
    %2838 = vmatprep.subr.bf16.mxu0 0
    %2839 = vmatpush1.bf16.msra.mxu0 0
    %2840 = vmatprep.subr.bf16.mxu0 0
    %2841 = vmatpush1.bf16.msra.mxu0 0
    %2842 = vmatprep.subr.bf16.mxu0 0
    %2843 = vmatpush1.bf16.msra.mxu0 0
    %2844 = vmatprep.subr.bf16.mxu0 0
    %2845 = vmatpush1.bf16.msra.mxu0 0
    %2846 = vmatprep.mubr.bf16.mxu0 0
    %2847 = vmatmul.mubr.bf16.gmra.mrb[0].mxu0 %v2700
    %v2848 = vpop.f32.mrb[0].mxu0
    %v2849 = vadd.f32 %v2722, %v2848
    %v2850 = vpop.f32.mrb[0].mxu0
    %v2851 = vpop.f32.mrb[0].mxu0
    %v2852 = vpop.f32.mrb[0].mxu0
    %2853 = vdwg.mxu0
    %2854 = vst.msk [vmem:[%s6 + $0x8] sm:$0xff] %vm2812, %v2849
    // Predicated region
    $region30: #{tpu_custom_call.1} parent=1 // pred_check
      _
    $region31: #{tpu_custom_call.1} parent=1 // pred_check_branch
      %2856 = sbr.rel (0) target = $region33
    $region32: #{tpu_custom_call.1} parent=1 // pred_region
      _
    $region33: #{tpu_custom_call.1} parent=1 // pred_fallthru
      _
    // Predicated region
    $region34: #{tpu_custom_call.1} parent=1 // pred_check
      _
    $region35: #{tpu_custom_call.1} parent=1 // pred_check_branch
      %2858 = sbr.rel (0) target = $region37
    $region36: #{tpu_custom_call.1} parent=1 // pred_region
      _
    $region37: #{tpu_custom_call.1} parent=1 // pred_fallthru
      _
    %2859 = vsyncpa [#allocation3], 1

</llo_original>
